<compile_context>
chip_gen: v7x
topology: tpu7x:2x2x1
jax: 0.10.0
libtpu: 0.0.40
codegen_flags: <defaults>
</compile_context>

<pallas_src>
import functools

import jax
import jax.numpy as jnp
from jax.experimental import pallas as pl
from jax.experimental.pallas import tpu as pltpu


def _basic_block_kernel(x_ref, w1_ref, w2_ref, b1_ref, b2_ref, out_ref, *, H, C):
    """One (N_blk*H, W*C) slab of fused-lane activations per grid step.

    x_ref   : (M, W*C)       fused-lane activations (also the identity branch)
    w1_ref  : (9*W*C, W*C)   conv1 block-diag weights, BN1 scale folded in
    w2_ref  : (9*W*C, W*C)   conv2 block-diag weights, BN2 scale folded in
    b1_ref  : (1, W*C)       BN1 bias, tiled over W
    b2_ref  : (1, W*C)       BN2 bias, tiled over W
    out_ref : (M, W*C)
    """
    M, WC = x_ref.shape
    xf = x_ref[...].astype(jnp.float32)

    # Row-position masks: the kh=0 (upper) tap must be zero on the first row
    # of every image inside the slab, the kh=2 (lower) tap on the last row.
    # These masks also cancel the circular wrap of the sublane rolls and any
    # cross-image leakage between images packed into the same slab.
    row = jax.lax.broadcasted_iota(jnp.int32, (M, WC), 0)
    not_top = (row % H) != 0
    not_bot = (row % H) != (H - 1)

    def patches(a):
        # (M, 9*W*C) im2col patch matrix, entirely in registers:
        #   kh -> +-1 sublane roll (XLU) + 1-row boundary mask (VPU slack)
        #   kw -> +-C lane roll (XLU); its w-boundary wrap is cancelled by the
        #         zeroed diagonal blocks baked into the pre-transformed weights.
        up = jnp.where(not_top, pltpu.roll(a, shift=1, axis=0), 0.0)       # kh=0
        dn = jnp.where(not_bot, pltpu.roll(a, shift=M - 1, axis=0), 0.0)   # kh=2
        pieces = []
        for rows in (up, a, dn):                                   # kh = 0, 1, 2
            pieces.append(pltpu.roll(rows, shift=C, axis=1))       # kw = 0
            pieces.append(rows)                                    # kw = 1
            pieces.append(pltpu.roll(rows, shift=WC - C, axis=1))  # kw = 2
        return jnp.concatenate(pieces, axis=1)

    # ---- conv1 (BN1 scale folded into weights) + bias + relu: one MXU matmul.
    h1 = jnp.dot(patches(xf).astype(w1_ref.dtype), w1_ref[...],
                 preferred_element_type=jnp.float32)
    h1 = jnp.maximum(h1 + b1_ref[...], 0.0)

    # ---- conv2 (BN2 scale folded) + bias + residual + relu.
    h2 = jnp.dot(patches(h1).astype(w2_ref.dtype), w2_ref[...],
                 preferred_element_type=jnp.float32)
    h2 = jnp.maximum(h2 + b2_ref[...] + xf, 0.0)

    out_ref[...] = h2.astype(out_ref.dtype)


def _fold_scale_block_diag(w_hwio, scale, W):
    """(3,3,Cin,Cout) HWIO weights + per-channel BN scale ->
    (9*W*Cin, W*Cout) block-diagonal weights for the fused (W*C) lane layout.

    TODO(synk): the kron(I_W) layout runs the MXU with K = 9*W*Cin dense while
    only 9*Cin rows per output w-block are nonzero; fine at C=8 (K=1152), but
    for planes >= 32 switch to a channel-major (N*H*W, 9*C) x (9*C, C) im2col.
    """
    Cin, Cout = w_hwio.shape[2], w_hwio.shape[3]
    w = w_hwio * scale[None, None, None, :]               # fold BN scale (one-time)
    eye = jnp.eye(W, dtype=w.dtype)
    # bw[kh, kw] = kron(I_W, w[kh, kw])  -> (W*Cin, W*Cout)
    bw = jnp.einsum('ab,klij->klaibj', eye, w).reshape(3, 3, W * Cin, W * Cout)
    # The kernel uses circular lane rolls for the +-1 w-shifts; zeroing the
    # boundary diagonal blocks removes the wrapped-around contribution.
    bw = bw.at[:, 0, :Cin, :Cout].set(0.0)                        # kw=0, w=0
    bw = bw.at[:, 2, (W - 1) * Cin:, (W - 1) * Cout:].set(0.0)    # kw=2, w=W-1
    return bw.reshape(9 * W * Cin, W * Cout)


def prepare_basic_block_params(w1_hwio, w2_hwio, s1, b1, s2, b2, *, W,
                               param_dtype=jnp.float32):
    """One-time (model-load) parameter transform.  NOT per forward call:
    it kron-expands the 3x3 weights to 2x (9*W*C, W*C) matrices (~16x the raw
    weight bytes at C=8) and that work/HBM traffic would not be hidden behind
    the us-scale kernel.  param_dtype=jnp.bfloat16 opts into bf16 MXU operands
    (needs a looser ~1e-2 tolerance)."""
    C = w1_hwio.shape[2]
    WC = W * C
    w1_big = _fold_scale_block_diag(w1_hwio, s1, W).astype(param_dtype)
    w2_big = _fold_scale_block_diag(w2_hwio, s2, W).astype(param_dtype)
    b1f = jnp.tile(b1, W).reshape(1, WC).astype(jnp.float32)
    b2f = jnp.tile(b2, W).reshape(1, WC).astype(jnp.float32)
    return w1_big, w2_big, b1f, b2f


def _pick_n_blk(N, H, max_rows=256):
    """Images per grid step: push M = N_blk*H toward 128..256 MXU rows while
    keeping >= 2 grid steps whenever N allows (v7x has 2 TensorCores)."""
    divisors = [d for d in range(1, N + 1) if N % d == 0]
    good = [d for d in divisors if d * H <= max_rows and N // d >= 2]
    if good:
        return max(good)
    ok = [d for d in divisors if d * H <= max_rows]
    return max(ok) if ok else 1


@jax.jit
def basic_block_pallas(x_nhwc, w1_big, w2_big, b1f, b2f):
    """x_nhwc: (N,H,W,C); params from prepare_basic_block_params."""
    N, H, W, C = x_nhwc.shape
    WC = W * C
    assert WC == 128, "fused lane width W*C must be 128 for this layout"
    assert H % 8 == 0, "H must be sublane-aligned for the (N_blk*H, WC) blocks"

    n_blk = _pick_n_blk(N, H)
    m_blk = n_blk * H
    x_flat = x_nhwc.reshape(N * H, WC)          # contiguous reshape, free

    out_flat = pl.pallas_call(
        functools.partial(_basic_block_kernel, H=H, C=C),
        out_shape=jax.ShapeDtypeStruct((N * H, WC), x_nhwc.dtype),
        grid_spec=pltpu.PrefetchScalarGridSpec(
            num_scalar_prefetch=0,
            grid=(N // n_blk,),
            in_specs=[
                pl.BlockSpec((m_blk, WC), lambda i: (i, 0)),        # activations
                pl.BlockSpec((9 * WC, WC), lambda i: (0, 0)),       # conv1+bn1 W
                pl.BlockSpec((9 * WC, WC), lambda i: (0, 0)),       # conv2+bn2 W
                pl.BlockSpec((1, WC), lambda i: (0, 0)),            # bn1 bias
                pl.BlockSpec((1, WC), lambda i: (0, 0)),            # bn2 bias
            ],
            out_specs=pl.BlockSpec((m_blk, WC), lambda i: (i, 0)),
        ),
        compiler_params=pltpu.CompilerParams(
            dimension_semantics=("parallel",),
            vmem_limit_bytes=32 * 1024 * 1024,
        ),
    )(x_flat, w1_big, w2_big, b1f, b2f)

    return out_flat.reshape(N, H, W, C)


def _reference(x_nhwc, w1_hwio, w2_hwio, s1, b1, s2, b2):
    dn = ("NHWC", "HWIO", "NHWC")
    p = jax.lax.Precision.HIGHEST
    out = jax.lax.conv_general_dilated(x_nhwc, w1_hwio, (1, 1), "SAME",
                                       dimension_numbers=dn, precision=p)
    out = jnp.maximum(out * s1 + b1, 0.0)
    out = jax.lax.conv_general_dilated(out, w2_hwio, (1, 1), "SAME",
                                       dimension_numbers=dn, precision=p)
    out = jnp.maximum(out * s2 + b2 + x_nhwc, 0.0)
    return out


if __name__ == "__main__":
    key = jax.random.PRNGKey(0)
    ks = jax.random.split(key, 11)

    # BasicBlock(inplanes=8, planes=8, stride=1, downsample=None).
    # C=8, W=16 -> fused lane width W*C = 128; N=16 -> N_blk=8, i.e. two
    # "parallel" grid steps of M = 128 MXU rows each.
    N, C, H, W = 16, 8, 16, 16
    eps = 1e-5

    # PyTorch-convention input (NCHW) and weights (OIHW), built synthetically.
    x_nchw = jax.random.normal(ks[0], (N, C, H, W), jnp.float32)
    w1_oihw = jax.random.normal(ks[1], (C, C, 3, 3), jnp.float32) * 0.1
    w2_oihw = jax.random.normal(ks[2], (C, C, 3, 3), jnp.float32) * 0.1

    # BatchNorm parameters (inference mode, folded to scale/bias).
    gamma1 = 1.0 + 0.1 * jax.random.normal(ks[3], (C,), jnp.float32)
    beta1 = 0.1 * jax.random.normal(ks[4], (C,), jnp.float32)
    mean1 = 0.1 * jax.random.normal(ks[5], (C,), jnp.float32)
    var1 = jnp.abs(jax.random.normal(ks[6], (C,), jnp.float32)) + 0.5
    gamma2 = 1.0 + 0.1 * jax.random.normal(ks[7], (C,), jnp.float32)
    beta2 = 0.1 * jax.random.normal(ks[8], (C,), jnp.float32)
    mean2 = 0.1 * jax.random.normal(ks[9], (C,), jnp.float32)
    var2 = jnp.abs(jax.random.normal(ks[10], (C,), jnp.float32)) + 0.5

    s1 = gamma1 / jnp.sqrt(var1 + eps)
    b1 = beta1 - mean1 * s1
    s2 = gamma2 / jnp.sqrt(var2 + eps)
    b2 = beta2 - mean2 * s2

    # Convert to the kernel's layout: NHWC activations, HWIO weights.
    x_nhwc = jnp.transpose(x_nchw, (0, 2, 3, 1))
    w1_hwio = jnp.transpose(w1_oihw, (2, 3, 1, 0))
    w2_hwio = jnp.transpose(w2_oihw, (2, 3, 1, 0))

    # One-time (model-load) weight/bias transform, hoisted out of the call.
    params = prepare_basic_block_params(w1_hwio, w2_hwio, s1, b1, s2, b2, W=W)
    params = jax.tree_util.tree_map(jax.block_until_ready, params)

    out = basic_block_pallas(x_nhwc, *params)
    out = jax.block_until_ready(out)

    ref = _reference(x_nhwc, w1_hwio, w2_hwio,
                     s1.reshape(1, 1, 1, C), b1.reshape(1, 1, 1, C),
                     s2.reshape(1, 1, 1, C), b2.reshape(1, 1, 1, C))
    assert out.shape == (N, H, W, C)
    err = float(jnp.max(jnp.abs(out - ref)))
    assert err < 1e-4, err

    print("KERNEL_OK")
</pallas_src>

<mosaic_0001>
module attributes {stable_mosaic.version = 11 : i64} {
  func.func @_basic_block_kernel(%arg0: i32, %arg1: memref<128x128xf32, #tpu.memory_space<vmem>>, %arg2: memref<1152x128xf32, #tpu.memory_space<vmem>>, %arg3: memref<1152x128xf32, #tpu.memory_space<vmem>>, %arg4: memref<1x128xf32, #tpu.memory_space<vmem>>, %arg5: memref<1x128xf32, #tpu.memory_space<vmem>>, %arg6: memref<128x128xf32, #tpu.memory_space<vmem>>) attributes {dimension_semantics = [#tpu.dimension_semantics<parallel>], iteration_bounds = array<i64: 2>, scalar_prefetch = 0 : i64, scratch_operands = 0 : i64, tpu.core_type = #tpu.core_type<tc>, window_params = [{transform_indices = @transform_0, window_bounds = array<i64: 128, 128>}, {pipeline_mode = #tpu.pipeline_mode<synchronous>, transform_indices = @transform_1, window_bounds = array<i64: 1152, 128>}, {pipeline_mode = #tpu.pipeline_mode<synchronous>, transform_indices = @transform_2, window_bounds = array<i64: 1152, 128>}, {pipeline_mode = #tpu.pipeline_mode<synchronous>, transform_indices = @transform_3, window_bounds = array<i64: 1, 128>}, {pipeline_mode = #tpu.pipeline_mode<synchronous>, transform_indices = @transform_4, window_bounds = array<i64: 1, 128>}, {transform_indices = @transform_5, window_bounds = array<i64: 128, 128>}]} {
    %c0 = arith.constant 0 : index
    %c0_0 = arith.constant 0 : index
    %0 = vector.load %arg1[%c0, %c0_0] : memref<128x128xf32, #tpu.memory_space<vmem>>, vector<128x128xf32>
    %1 = tpu.iota {dimensions = array<i32: 0>} : vector<128x128xi32>
    %c16_i32 = arith.constant 16 : i32
    %c0_i32 = arith.constant 0 : i32
    %2 = arith.cmpi eq, %c16_i32, %c0_i32 : i32
    %c1_i32 = arith.constant 1 : i32
    %3 = arith.select %2, %c1_i32, %c16_i32 : i32
    %4 = vector.broadcast %3 : i32 to vector<128x128xi32>
    %5 = arith.remsi %1, %4 : vector<128x128xi32>
    %c0_i32_1 = arith.constant 0 : i32
    %6 = vector.broadcast %c0_i32_1 : i32 to vector<128x128xi32>
    %7 = arith.cmpi ne, %5, %6 : vector<128x128xi32>
    %c0_i32_2 = arith.constant 0 : i32
    %8 = vector.broadcast %c0_i32_2 : i32 to vector<128x128xi32>
    %9 = arith.cmpi slt, %5, %8 : vector<128x128xi32>
    %c0_i32_3 = arith.constant 0 : i32
    %10 = arith.cmpi slt, %3, %c0_i32_3 : i32
    %11 = vector.broadcast %10 : i1 to vector<128x128xi1>
    %12 = vector.broadcast %11 : vector<128x128xi1> to vector<128x128xi1>
    %13 = arith.xori %9, %12 : vector<128x128xi1>
    %14 = arith.andi %13, %7 : vector<128x128xi1>
    %15 = vector.broadcast %3 : i32 to vector<128x128xi32>
    %16 = arith.addi %5, %15 : vector<128x128xi32>
    %17 = arith.select %14, %16, %5 : vector<128x128xi1>, vector<128x128xi32>
    %c0_i32_4 = arith.constant 0 : i32
    %18 = vector.broadcast %c0_i32_4 : i32 to vector<128x128xi32>
    %19 = arith.cmpi ne, %17, %18 : vector<128x128xi32>
    %c16_i32_5 = arith.constant 16 : i32
    %c0_i32_6 = arith.constant 0 : i32
    %20 = arith.cmpi eq, %c16_i32_5, %c0_i32_6 : i32
    %c1_i32_7 = arith.constant 1 : i32
    %21 = arith.select %20, %c1_i32_7, %c16_i32_5 : i32
    %22 = vector.broadcast %21 : i32 to vector<128x128xi32>
    %23 = arith.remsi %1, %22 : vector<128x128xi32>
    %c0_i32_8 = arith.constant 0 : i32
    %24 = vector.broadcast %c0_i32_8 : i32 to vector<128x128xi32>
    %25 = arith.cmpi ne, %23, %24 : vector<128x128xi32>
    %c0_i32_9 = arith.constant 0 : i32
    %26 = vector.broadcast %c0_i32_9 : i32 to vector<128x128xi32>
    %27 = arith.cmpi slt, %23, %26 : vector<128x128xi32>
    %c0_i32_10 = arith.constant 0 : i32
    %28 = arith.cmpi slt, %21, %c0_i32_10 : i32
    %29 = vector.broadcast %28 : i1 to vector<128x128xi1>
    %30 = vector.broadcast %29 : vector<128x128xi1> to vector<128x128xi1>
    %31 = arith.xori %27, %30 : vector<128x128xi1>
    %32 = arith.andi %31, %25 : vector<128x128xi1>
    %33 = vector.broadcast %21 : i32 to vector<128x128xi32>
    %34 = arith.addi %23, %33 : vector<128x128xi32>
    %35 = arith.select %32, %34, %23 : vector<128x128xi1>, vector<128x128xi32>
    %c15_i32 = arith.constant 15 : i32
    %36 = vector.broadcast %c15_i32 : i32 to vector<128x128xi32>
    %37 = arith.cmpi ne, %35, %36 : vector<128x128xi32>
    %c1_i32_11 = arith.constant 1 : i32
    %38 = tpu.dynamic_rotate %0 by %c1_i32_11 dim 0 : vector<128x128xf32>, i32 -> vector<128x128xf32>
    %cst = arith.constant 0.000000e+00 : f32
    %39 = vector.broadcast %cst : f32 to vector<128x128xf32>
    %40 = arith.select %19, %38, %39 : vector<128x128xi1>, vector<128x128xf32>
    %c127_i32 = arith.constant 127 : i32
    %41 = tpu.dynamic_rotate %0 by %c127_i32 dim 0 : vector<128x128xf32>, i32 -> vector<128x128xf32>
    %cst_12 = arith.constant 0.000000e+00 : f32
    %42 = vector.broadcast %cst_12 : f32 to vector<128x128xf32>
    %43 = arith.select %37, %41, %42 : vector<128x128xi1>, vector<128x128xf32>
    %c8_i32 = arith.constant 8 : i32
    %44 = tpu.dynamic_rotate %40 by %c8_i32 dim 1 : vector<128x128xf32>, i32 -> vector<128x128xf32>
    %c120_i32 = arith.constant 120 : i32
    %45 = tpu.dynamic_rotate %40 by %c120_i32 dim 1 : vector<128x128xf32>, i32 -> vector<128x128xf32>
    %c8_i32_13 = arith.constant 8 : i32
    %46 = tpu.dynamic_rotate %0 by %c8_i32_13 dim 1 : vector<128x128xf32>, i32 -> vector<128x128xf32>
    %c120_i32_14 = arith.constant 120 : i32
    %47 = tpu.dynamic_rotate %0 by %c120_i32_14 dim 1 : vector<128x128xf32>, i32 -> vector<128x128xf32>
    %c8_i32_15 = arith.constant 8 : i32
    %48 = tpu.dynamic_rotate %43 by %c8_i32_15 dim 1 : vector<128x128xf32>, i32 -> vector<128x128xf32>
    %c120_i32_16 = arith.constant 120 : i32
    %49 = tpu.dynamic_rotate %43 by %c120_i32_16 dim 1 : vector<128x128xf32>, i32 -> vector<128x128xf32>
    %50 = tpu.concatenate %44, %40, %45, %46, %0, %47, %48, %43, %49 in 1 : vector<128x128xf32>, vector<128x128xf32>, vector<128x128xf32>, vector<128x128xf32>, vector<128x128xf32>, vector<128x128xf32>, vector<128x128xf32>, vector<128x128xf32>, vector<128x128xf32> -> vector<128x1152xf32>
    %c0_17 = arith.constant 0 : index
    %c0_18 = arith.constant 0 : index
    %51 = vector.load %arg2[%c0_17, %c0_18] : memref<1152x128xf32, #tpu.memory_space<vmem>>, vector<1152x128xf32>
    %cst_19 = arith.constant dense<0.000000e+00> : vector<128x128xf32>
    %52 = tpu.matmul %50, %51, %cst_19 {dimension_numbers = #tpu.dot_dimension_numbers<[1], [0], [0], [1], [0, 0, 1, 1], [], []>} : vector<128x1152xf32>, vector<1152x128xf32>, vector<128x128xf32> -> vector<128x128xf32>
    %c0_20 = arith.constant 0 : index
    %c0_21 = arith.constant 0 : index
    %53 = vector.load %arg4[%c0_20, %c0_21] : memref<1x128xf32, #tpu.memory_space<vmem>>, vector<1x128xf32>
    %54 = vector.broadcast %53 : vector<1x128xf32> to vector<128x128xf32>
    %55 = arith.addf %52, %54 : vector<128x128xf32>
    %cst_22 = arith.constant 0.000000e+00 : f32
    %56 = vector.broadcast %cst_22 : f32 to vector<128x128xf32>
    %57 = arith.maximumf %55, %56 : vector<128x128xf32>
    %c1_i32_23 = arith.constant 1 : i32
    %58 = tpu.dynamic_rotate %57 by %c1_i32_23 dim 0 : vector<128x128xf32>, i32 -> vector<128x128xf32>
    %cst_24 = arith.constant 0.000000e+00 : f32
    %59 = vector.broadcast %cst_24 : f32 to vector<128x128xf32>
    %60 = arith.select %19, %58, %59 : vector<128x128xi1>, vector<128x128xf32>
    %c127_i32_25 = arith.constant 127 : i32
    %61 = tpu.dynamic_rotate %57 by %c127_i32_25 dim 0 : vector<128x128xf32>, i32 -> vector<128x128xf32>
    %cst_26 = arith.constant 0.000000e+00 : f32
    %62 = vector.broadcast %cst_26 : f32 to vector<128x128xf32>
    %63 = arith.select %37, %61, %62 : vector<128x128xi1>, vector<128x128xf32>
    %c8_i32_27 = arith.constant 8 : i32
    %64 = tpu.dynamic_rotate %60 by %c8_i32_27 dim 1 : vector<128x128xf32>, i32 -> vector<128x128xf32>
    %c120_i32_28 = arith.constant 120 : i32
    %65 = tpu.dynamic_rotate %60 by %c120_i32_28 dim 1 : vector<128x128xf32>, i32 -> vector<128x128xf32>
    %c8_i32_29 = arith.constant 8 : i32
    %66 = tpu.dynamic_rotate %57 by %c8_i32_29 dim 1 : vector<128x128xf32>, i32 -> vector<128x128xf32>
    %c120_i32_30 = arith.constant 120 : i32
    %67 = tpu.dynamic_rotate %57 by %c120_i32_30 dim 1 : vector<128x128xf32>, i32 -> vector<128x128xf32>
    %c8_i32_31 = arith.constant 8 : i32
    %68 = tpu.dynamic_rotate %63 by %c8_i32_31 dim 1 : vector<128x128xf32>, i32 -> vector<128x128xf32>
    %c120_i32_32 = arith.constant 120 : i32
    %69 = tpu.dynamic_rotate %63 by %c120_i32_32 dim 1 : vector<128x128xf32>, i32 -> vector<128x128xf32>
    %70 = tpu.concatenate %64, %60, %65, %66, %57, %67, %68, %63, %69 in 1 : vector<128x128xf32>, vector<128x128xf32>, vector<128x128xf32>, vector<128x128xf32>, vector<128x128xf32>, vector<128x128xf32>, vector<128x128xf32>, vector<128x128xf32>, vector<128x128xf32> -> vector<128x1152xf32>
    %c0_33 = arith.constant 0 : index
    %c0_34 = arith.constant 0 : index
    %71 = vector.load %arg3[%c0_33, %c0_34] : memref<1152x128xf32, #tpu.memory_space<vmem>>, vector<1152x128xf32>
    %cst_35 = arith.constant dense<0.000000e+00> : vector<128x128xf32>
    %72 = tpu.matmul %70, %71, %cst_35 {dimension_numbers = #tpu.dot_dimension_numbers<[1], [0], [0], [1], [0, 0, 1, 1], [], []>} : vector<128x1152xf32>, vector<1152x128xf32>, vector<128x128xf32> -> vector<128x128xf32>
    %c0_36 = arith.constant 0 : index
    %c0_37 = arith.constant 0 : index
    %73 = vector.load %arg5[%c0_36, %c0_37] : memref<1x128xf32, #tpu.memory_space<vmem>>, vector<1x128xf32>
    %74 = vector.broadcast %73 : vector<1x128xf32> to vector<128x128xf32>
    %75 = arith.addf %72, %74 : vector<128x128xf32>
    %76 = arith.addf %75, %0 : vector<128x128xf32>
    %cst_38 = arith.constant 0.000000e+00 : f32
    %77 = vector.broadcast %cst_38 : f32 to vector<128x128xf32>
    %78 = arith.maximumf %76, %77 : vector<128x128xf32>
    %c0_39 = arith.constant 0 : index
    %c0_40 = arith.constant 0 : index
    %79 = vector.load %arg6[%c0_39, %c0_40] : memref<128x128xf32, #tpu.memory_space<vmem>>, vector<128x128xf32>
    tpu.vector_store %arg6[%c0_39, %c0_40], %78 {strides = array<i32>} : memref<128x128xf32, #tpu.memory_space<vmem>>, vector<128x128xf32>,
    return
  }
  func.func @transform_0(%arg0: i32) -> (i32, i32) {
    %c0_i32 = arith.constant 0 : i32
    %c0_i32_0 = arith.constant 0 : i32
    return %arg0, %c0_i32 : i32, i32
  }
  func.func @transform_1(%arg0: i32) -> (i32, i32) {
    %c0_i32 = arith.constant 0 : i32
    %c0_i32_0 = arith.constant 0 : i32
    %c0_i32_1 = arith.constant 0 : i32
    return %c0_i32, %c0_i32_0 : i32, i32
  }
  func.func @transform_2(%arg0: i32) -> (i32, i32) {
    %c0_i32 = arith.constant 0 : i32
    %c0_i32_0 = arith.constant 0 : i32
    %c0_i32_1 = arith.constant 0 : i32
    return %c0_i32, %c0_i32_0 : i32, i32
  }
  func.func @transform_3(%arg0: i32) -> (i32, i32) {
    %c0_i32 = arith.constant 0 : i32
    %c0_i32_0 = arith.constant 0 : i32
    %c0_i32_1 = arith.constant 0 : i32
    return %c0_i32, %c0_i32_0 : i32, i32
  }
  func.func @transform_4(%arg0: i32) -> (i32, i32) {
    %c0_i32 = arith.constant 0 : i32
    %c0_i32_0 = arith.constant 0 : i32
    %c0_i32_1 = arith.constant 0 : i32
    return %c0_i32, %c0_i32_0 : i32, i32
  }
  func.func @transform_5(%arg0: i32) -> (i32, i32) {
    %c0_i32 = arith.constant 0 : i32
    %c0_i32_0 = arith.constant 0 : i32
    return %arg0, %c0_i32 : i32, i32
  }
}

</mosaic_0001>

<llo_original>
// kernel: basic_block_pallas.1
$region0: #{basic_block_pallas.1}
  #allocation0 [shape = 'u32[]', space=smem, size = 0x4, offset = 0x4, fixed_abs, tag = 'smem constant byte address 0x4 - core index']
  #allocation1 [shape = 'u32[144,128]{1,0:T(1,128)}', space=vmem, size = 0x12000, scoped, tag = 'internal scratch']
  %s0 = inlined_call_operand.vmem [shape: f32[256,128], index: 0, kind: input, shape index: {}]
  %s1 = inlined_call_operand.vmem [shape: f32[1152,128], index: 1, kind: input, shape index: {}]
  %s2 = inlined_call_operand.vmem [shape: f32[1152,128], index: 2, kind: input, shape index: {}]
  %s3 = inlined_call_operand.vmem [shape: f32[1,128], index: 3, kind: input, shape index: {}]
  %s4 = inlined_call_operand.vmem [shape: f32[1,128], index: 4, kind: input, shape index: {}]
  %s5 = inlined_call_operand.vmem [shape: f32[256,128], index: 5, kind: output, shape index: {}]
  %s6 = sld [smem:[#allocation0]]
  $region53: #{basic_block_pallas.1} parent=0
    _
  %s8 = ssub.s32 1, %s6
  %s9 = scalar_select 0, %s8, %s6
  loop: start=0, step=1, limit=4
  $region2: #{basic_block_pallas.1} parent=0 // loop_pre_header
    _
  $region3: #{basic_block_pallas.1} parent=0 // loop_header
    %s11 = sphi 0, %s15
    %p12 = scmp.ge.s32.totalorder %s11, 4
    %s21 = sphi 0, %s23
    %s24 = sphi 0, %s21
    %s25 = sphi 0, %s24
    %s41 = sphi 0, %s25
    %s45 = sphi 0, %s45
    %s47 = sphi 0, %s45
    %s48 = sphi 0, %s47
    %s62 = sphi 0, %s48
    %s66 = sphi 0, %s66
    %s68 = sphi 0, %s66
    %s69 = sphi 0, %s68
    %s83 = sphi 0, %s69
    %s87 = sphi 0, %s87
    %s89 = sphi 0, %s87
    %s90 = sphi 0, %s89
    %s104 = sphi 0, %s90
    %s108 = sphi 0, %s108
    %s110 = sphi 0, %s108
    %s111 = sphi 0, %s110
    %s125 = sphi 0, %s111
    %s131 = sphi 0, %s133
    %s134 = sphi 0, %s131
    %s135 = sphi 0, %s134
    %s151 = sphi 0, %s135
  $region4: #{basic_block_pallas.1} parent=0 // loop_header_branch
    %14 = sbr.rel (%p12) target = $region8
  $region5: #{basic_block_pallas.1} parent=0 // loop_body
    %s16 = ssub.s32 %s11, 1
    %s17 = ssub.s32 %s11, 2
    %s18 = sadd.s32 %s11, 1
    %s19 = ssub.s32 %s11, %s18
    %p20 = scmp.eq.s32.totalorder %s19, 0
    %s22 = sadd.s32 %s21, 1
    %s23 = scalar_select %p20, %s21, %s22
    %p26 = pneg %p20
    %p27 = scmp.eq.s32.totalorder %s11, 1
    %p28 = por %p26, %p27
    %p29 = scmp.ne.s32.totalorder %s21, %s24
    %p30 = scmp.eq.s32.totalorder %s11, 0
    %p31 = por %p29, %p30
    %p32 = scmp.ne.s32.totalorder %s21, %s24
    %p33 = scmp.eq.s32.totalorder %s16, 1
    %p34 = por %p32, %p33
    %p35 = scmp.ne.s32.totalorder %s24, %s25
    %p36 = scmp.eq.s32.totalorder %s16, 0
    %p37 = por %p35, %p36
    %p38 = scmp.ne.s32.totalorder %s24, %s25
    %p39 = scmp.eq.s32.totalorder %s17, 1
    %p40 = por %p38, %p39
    %p42 = scmp.ne.s32.totalorder %s25, %s41
    %p43 = scmp.eq.s32.totalorder %s17, 0
    %p44 = por %p42, %p43
    %s46 = sadd.s32 %s45, 1
    %p49 = scmp.eq.s32.totalorder %s11, 1
    %p50 = scmp.ne.s32.totalorder %s45, %s47
    %p51 = scmp.eq.s32.totalorder %s11, 0
    %p52 = por %p50, %p51
    %p53 = scmp.ne.s32.totalorder %s45, %s47
    %p54 = scmp.eq.s32.totalorder %s16, 1
    %p55 = por %p53, %p54
    %p56 = scmp.ne.s32.totalorder %s47, %s48
    %p57 = scmp.eq.s32.totalorder %s16, 0
    %p58 = por %p56, %p57
    %p59 = scmp.ne.s32.totalorder %s47, %s48
    %p60 = scmp.eq.s32.totalorder %s17, 1
    %p61 = por %p59, %p60
    %p63 = scmp.ne.s32.totalorder %s48, %s62
    %p64 = scmp.eq.s32.totalorder %s17, 0
    %p65 = por %p63, %p64
    %s67 = sadd.s32 %s66, 1
    %p70 = scmp.eq.s32.totalorder %s11, 1
    %p71 = scmp.ne.s32.totalorder %s66, %s68
    %p72 = scmp.eq.s32.totalorder %s11, 0
    %p73 = por %p71, %p72
    %p74 = scmp.ne.s32.totalorder %s66, %s68
    %p75 = scmp.eq.s32.totalorder %s16, 1
    %p76 = por %p74, %p75
    %p77 = scmp.ne.s32.totalorder %s68, %s69
    %p78 = scmp.eq.s32.totalorder %s16, 0
    %p79 = por %p77, %p78
    %p80 = scmp.ne.s32.totalorder %s68, %s69
    %p81 = scmp.eq.s32.totalorder %s17, 1
    %p82 = por %p80, %p81
    %p84 = scmp.ne.s32.totalorder %s69, %s83
    %p85 = scmp.eq.s32.totalorder %s17, 0
    %p86 = por %p84, %p85
    %s88 = sadd.s32 %s87, 1
    %p91 = scmp.eq.s32.totalorder %s11, 1
    %p92 = scmp.ne.s32.totalorder %s87, %s89
    %p93 = scmp.eq.s32.totalorder %s11, 0
    %p94 = por %p92, %p93
    %p95 = scmp.ne.s32.totalorder %s87, %s89
    %p96 = scmp.eq.s32.totalorder %s16, 1
    %p97 = por %p95, %p96
    %p98 = scmp.ne.s32.totalorder %s89, %s90
    %p99 = scmp.eq.s32.totalorder %s16, 0
    %p100 = por %p98, %p99
    %p101 = scmp.ne.s32.totalorder %s89, %s90
    %p102 = scmp.eq.s32.totalorder %s17, 1
    %p103 = por %p101, %p102
    %p105 = scmp.ne.s32.totalorder %s90, %s104
    %p106 = scmp.eq.s32.totalorder %s17, 0
    %p107 = por %p105, %p106
    %s109 = sadd.s32 %s108, 1
    %p112 = scmp.eq.s32.totalorder %s11, 1
    %p113 = scmp.ne.s32.totalorder %s108, %s110
    %p114 = scmp.eq.s32.totalorder %s11, 0
    %p115 = por %p113, %p114
    %p116 = scmp.ne.s32.totalorder %s108, %s110
    %p117 = scmp.eq.s32.totalorder %s16, 1
    %p118 = por %p116, %p117
    %p119 = scmp.ne.s32.totalorder %s110, %s111
    %p120 = scmp.eq.s32.totalorder %s16, 0
    %p121 = por %p119, %p120
    %p122 = scmp.ne.s32.totalorder %s110, %s111
    %p123 = scmp.eq.s32.totalorder %s17, 1
    %p124 = por %p122, %p123
    %p126 = scmp.ne.s32.totalorder %s111, %s125
    %p127 = scmp.eq.s32.totalorder %s17, 0
    %p128 = por %p126, %p127
    %s129 = ssub.s32 %s11, %s18
    %p130 = scmp.eq.s32.totalorder %s129, 0
    %s132 = sadd.s32 %s131, 1
    %s133 = scalar_select %p130, %s131, %s132
    %p136 = pneg %p130
    %p137 = scmp.eq.s32.totalorder %s11, 1
    %p138 = por %p136, %p137
    %p139 = scmp.ne.s32.totalorder %s131, %s134
    %p140 = scmp.eq.s32.totalorder %s11, 0
    %p141 = por %p139, %p140
    %p142 = scmp.ne.s32.totalorder %s131, %s134
    %p143 = scmp.eq.s32.totalorder %s16, 1
    %p144 = por %p142, %p143
    %p145 = scmp.ne.s32.totalorder %s134, %s135
    %p146 = scmp.eq.s32.totalorder %s16, 0
    %p147 = por %p145, %p146
    %p148 = scmp.ne.s32.totalorder %s134, %s135
    %p149 = scmp.eq.s32.totalorder %s17, 1
    %p150 = por %p148, %p149
    %p152 = scmp.ne.s32.totalorder %s135, %s151
    %p153 = scmp.eq.s32.totalorder %s17, 0
    %p154 = por %p152, %p153
    %p155 = scmp.le.s32.totalorder 1, %s11
    %p156 = scmp.lt.s32.totalorder %s11, 3
    %p157 = pnand %p155, %p156
    %p158 = pneg %p157
    // Predicated region
    $region9: #{basic_block_pallas.1} parent=5 // pred_check
      _
    $region10: #{basic_block_pallas.1} parent=5 // pred_check_branch
      %160 = sbr.rel (%p157) target = $region12
    $region11: #{basic_block_pallas.1} parent=5 // pred_region
      %s161 = ssub.s32 %s11, 1
      // Predicated region
      $region13: #{basic_block_pallas.1} parent=11 // pred_check
        %p162 = pneg %p58
      $region14: #{basic_block_pallas.1} parent=11 // pred_check_branch
        %164 = sbr.rel (%p162) target = $region16
      $region15: #{basic_block_pallas.1} parent=11 // pred_region
        _
      $region16: #{basic_block_pallas.1} parent=11 // pred_fallthru
        _
      // Predicated region
      $region17: #{basic_block_pallas.1} parent=11 // pred_check
        %p165 = pneg %p79
      $region18: #{basic_block_pallas.1} parent=11 // pred_check_branch
        %167 = sbr.rel (%p165) target = $region20
      $region19: #{basic_block_pallas.1} parent=11 // pred_region
        _
      $region20: #{basic_block_pallas.1} parent=11 // pred_fallthru
        _
      // Predicated region
      $region21: #{basic_block_pallas.1} parent=11 // pred_check
        %p168 = pneg %p100
      $region22: #{basic_block_pallas.1} parent=11 // pred_check_branch
        %170 = sbr.rel (%p168) target = $region24
      $region23: #{basic_block_pallas.1} parent=11 // pred_region
        _
      $region24: #{basic_block_pallas.1} parent=11 // pred_fallthru
        _
      // Predicated region
      $region25: #{basic_block_pallas.1} parent=11 // pred_check
        %p171 = pneg %p121
      $region26: #{basic_block_pallas.1} parent=11 // pred_check_branch
        %173 = sbr.rel (%p171) target = $region28
      $region27: #{basic_block_pallas.1} parent=11 // pred_region
        _
      $region28: #{basic_block_pallas.1} parent=11 // pred_fallthru
        _
    $region12: #{basic_block_pallas.1} parent=5 // pred_fallthru
      _
    %p174 = scmp.lt.s32.totalorder %s11, 2
    // Predicated region
    $region29: #{basic_block_pallas.1} parent=5 // pred_check
      %p175 = pneg %p174
    $region30: #{basic_block_pallas.1} parent=5 // pred_check_branch
      %177 = sbr.rel (%p175) target = $region32
    $region31: #{basic_block_pallas.1} parent=5 // pred_region
      // Predicated region
      $region33: #{basic_block_pallas.1} parent=31 // pred_check
        %p178 = pneg %p31
      $region34: #{basic_block_pallas.1} parent=31 // pred_check_branch
        %180 = sbr.rel (%p178) target = $region36
      $region35: #{basic_block_pallas.1} parent=31 // pred_region
        %s181 = smul.u32 16, %s11
        %p182 = scmp.lt.s32.totalorder %s181, 31
        %s183 = scalar_select %p182, %s181, 31
        %s184 = smul.addr %s183, 8
        %s185 = scalar_lea.vmem %s0, %s184
        %s186 = smul.u32 16, %s11
      $region36: #{basic_block_pallas.1} parent=31 // pred_fallthru
        _
    $region32: #{basic_block_pallas.1} parent=5 // pred_fallthru
      _
    %p187 = scmp.le.s32.totalorder 1, %s11
    %p188 = scmp.lt.s32.totalorder %s11, 3
    %p189 = pnand %p187, %p188
    %p190 = pneg %p189
    // Predicated region
    $region37: #{basic_block_pallas.1} parent=5 // pred_check
      _
    $region38: #{basic_block_pallas.1} parent=5 // pred_check_branch
      %192 = sbr.rel (%p189) target = $region40
    $region39: #{basic_block_pallas.1} parent=5 // pred_region
      %s193 = ssub.s32 %s11, 1
      %s194 = smul.u32 16, %s16
      %p195 = scmp.lt.s32.totalorder %s194, 31
      %s196 = scalar_select %p195, %s194, 31
      %s197 = smul.addr %s196, 8
      %s198 = scalar_lea.vmem %s0, %s197
      %p199 = pneg %p37
      %p200 = pneg %p34
      %p201 = pneg %p58
      %p202 = pneg %p55
      %p203 = pneg %p79
      %p204 = pneg %p76
      %p205 = pneg %p100
      %p206 = pneg %p97
      %p207 = pneg %p121
      %p208 = pneg %p118
      %p209 = pneg %p147
      %p210 = pneg %p144
      %s211 = smul.u32 16, %s16
      %p212 = scmp.lt.s32.totalorder %s211, 31
      %s213 = scalar_select %p212, %s211, 31
      %s214 = smul.addr %s213, 8
      %s215 = scalar_lea.vmem %s5, %s214
      %s216 = smul.u32 16, %s16
      %p217 = scmp.lt.s32.totalorder %s216, 31
      %s218 = scalar_select %p217, %s216, 31
      %s219 = smul.addr %s218, 8
      %s220 = scalar_lea.vmem %s0, %s219
      %s221 = smul.u32 16, %s16
      %s222 = smul.u32 16, %s16
      %p223 = scmp.lt.s32.totalorder %s222, 31
      %s224 = scalar_select %p223, %s222, 31
      %s225 = smul.addr %s224, 8
      %s226 = scalar_lea.vmem %s5, %s225
      %s227 = smul.u32 16, %s16
      %v228 = vld [vmem:[%s220] sm:$0xff]
      %v229 = vld [vmem:[%s220 + $0x8] sm:$0xff]
      %v230 = vld [vmem:[%s220 + $0x10] sm:$0xff]
      %v231 = vld [vmem:[%s220 + $0x18] sm:$0xff]
      %v232 = vld [vmem:[%s220 + $0x20] sm:$0xff]
      %v233 = vld [vmem:[%s220 + $0x28] sm:$0xff]
      %v234 = vld [vmem:[%s220 + $0x30] sm:$0xff]
      %v235 = vld [vmem:[%s220 + $0x38] sm:$0xff]
      %v236 = vld [vmem:[%s220 + $0x40] sm:$0xff]
      %v237 = vld [vmem:[%s220 + $0x48] sm:$0xff]
      %v238 = vld [vmem:[%s220 + $0x50] sm:$0xff]
      %v239 = vld [vmem:[%s220 + $0x58] sm:$0xff]
      %v240 = vld [vmem:[%s220 + $0x60] sm:$0xff]
      %v241 = vld [vmem:[%s220 + $0x68] sm:$0xff]
      %v242 = vld [vmem:[%s220 + $0x70] sm:$0xff]
      %v243 = vld [vmem:[%s220 + $0x78] sm:$0xff]
      %v244 = vlaneseq
      %v245 = vshrl.u32 %v244, 7
      %v246 = vadd.s32 %v245, 8
      %v247 = vadd.s32 %v245, 16
      %v248 = vadd.s32 %v245, 24
      %v249 = vadd.s32 %v245, 32
      %v250 = vadd.s32 %v245, 40
      %v251 = vadd.s32 %v245, 48
      %v252 = vadd.s32 %v245, 56
      %v253 = vadd.s32 %v245, 64
      %v254 = vadd.s32 %v245, 72
      %v255 = vadd.s32 %v245, 80
      %v256 = vadd.s32 %v245, 88
      %v257 = vadd.s32 %v245, 96
      %v258 = vadd.s32 %v245, 104
      %v259 = vadd.s32 %v245, 112
      %v260 = vadd.s32 %v245, 120
      %vm261 = vcmp.lt.s32.totalorder %v245, 0
      %v262 = vsub.s32 0, %v245
      %v263 = vsel %vm261, %v262, %v245
      %v264 = vshrl.u32 %v263, 4
      %v265 = vand.u32 %v263, 15
      %v266 = vsub.s32 0, %v265
      %v267 = vsel %vm261, %v266, %v265
      %vm268 = vcmp.lt.s32.totalorder %v246, 0
      %v269 = vsub.s32 0, %v246
      %v270 = vsel %vm268, %v269, %v246
      %v271 = vshrl.u32 %v270, 4
      %v272 = vand.u32 %v270, 15
      %v273 = vsub.s32 0, %v272
      %v274 = vsel %vm268, %v273, %v272
      %vm275 = vcmp.lt.s32.totalorder %v247, 0
      %v276 = vsub.s32 0, %v247
      %v277 = vsel %vm275, %v276, %v247
      %v278 = vshrl.u32 %v277, 4
      %v279 = vand.u32 %v277, 15
      %v280 = vsub.s32 0, %v279
      %v281 = vsel %vm275, %v280, %v279
      %vm282 = vcmp.lt.s32.totalorder %v248, 0
      %v283 = vsub.s32 0, %v248
      %v284 = vsel %vm282, %v283, %v248
      %v285 = vshrl.u32 %v284, 4
      %v286 = vand.u32 %v284, 15
      %v287 = vsub.s32 0, %v286
      %v288 = vsel %vm282, %v287, %v286
      %vm289 = vcmp.lt.s32.totalorder %v249, 0
      %v290 = vsub.s32 0, %v249
      %v291 = vsel %vm289, %v290, %v249
      %v292 = vshrl.u32 %v291, 4
      %v293 = vand.u32 %v291, 15
      %v294 = vsub.s32 0, %v293
      %v295 = vsel %vm289, %v294, %v293
      %vm296 = vcmp.lt.s32.totalorder %v250, 0
      %v297 = vsub.s32 0, %v250
      %v298 = vsel %vm296, %v297, %v250
      %v299 = vshrl.u32 %v298, 4
      %v300 = vand.u32 %v298, 15
      %v301 = vsub.s32 0, %v300
      %v302 = vsel %vm296, %v301, %v300
      %vm303 = vcmp.lt.s32.totalorder %v251, 0
      %v304 = vsub.s32 0, %v251
      %v305 = vsel %vm303, %v304, %v251
      %v306 = vshrl.u32 %v305, 4
      %v307 = vand.u32 %v305, 15
      %v308 = vsub.s32 0, %v307
      %v309 = vsel %vm303, %v308, %v307
      %vm310 = vcmp.lt.s32.totalorder %v252, 0
      %v311 = vsub.s32 0, %v252
      %v312 = vsel %vm310, %v311, %v252
      %v313 = vshrl.u32 %v312, 4
      %v314 = vand.u32 %v312, 15
      %v315 = vsub.s32 0, %v314
      %v316 = vsel %vm310, %v315, %v314
      %vm317 = vcmp.lt.s32.totalorder %v253, 0
      %v318 = vsub.s32 0, %v253
      %v319 = vsel %vm317, %v318, %v253
      %v320 = vshrl.u32 %v319, 4
      %v321 = vand.u32 %v319, 15
      %v322 = vsub.s32 0, %v321
      %v323 = vsel %vm317, %v322, %v321
      %vm324 = vcmp.lt.s32.totalorder %v254, 0
      %v325 = vsub.s32 0, %v254
      %v326 = vsel %vm324, %v325, %v254
      %v327 = vshrl.u32 %v326, 4
      %v328 = vand.u32 %v326, 15
      %v329 = vsub.s32 0, %v328
      %v330 = vsel %vm324, %v329, %v328
      %vm331 = vcmp.lt.s32.totalorder %v255, 0
      %v332 = vsub.s32 0, %v255
      %v333 = vsel %vm331, %v332, %v255
      %v334 = vshrl.u32 %v333, 4
      %v335 = vand.u32 %v333, 15
      %v336 = vsub.s32 0, %v335
      %v337 = vsel %vm331, %v336, %v335
      %vm338 = vcmp.lt.s32.totalorder %v256, 0
      %v339 = vsub.s32 0, %v256
      %v340 = vsel %vm338, %v339, %v256
      %v341 = vshrl.u32 %v340, 4
      %v342 = vand.u32 %v340, 15
      %v343 = vsub.s32 0, %v342
      %v344 = vsel %vm338, %v343, %v342
      %vm345 = vcmp.lt.s32.totalorder %v257, 0
      %v346 = vsub.s32 0, %v257
      %v347 = vsel %vm345, %v346, %v257
      %v348 = vshrl.u32 %v347, 4
      %v349 = vand.u32 %v347, 15
      %v350 = vsub.s32 0, %v349
      %v351 = vsel %vm345, %v350, %v349
      %vm352 = vcmp.lt.s32.totalorder %v258, 0
      %v353 = vsub.s32 0, %v258
      %v354 = vsel %vm352, %v353, %v258
      %v355 = vshrl.u32 %v354, 4
      %v356 = vand.u32 %v354, 15
      %v357 = vsub.s32 0, %v356
      %v358 = vsel %vm352, %v357, %v356
      %vm359 = vcmp.lt.s32.totalorder %v259, 0
      %v360 = vsub.s32 0, %v259
      %v361 = vsel %vm359, %v360, %v259
      %v362 = vshrl.u32 %v361, 4
      %v363 = vand.u32 %v361, 15
      %v364 = vsub.s32 0, %v363
      %v365 = vsel %vm359, %v364, %v363
      %vm366 = vcmp.lt.s32.totalorder %v260, 0
      %v367 = vsub.s32 0, %v260
      %v368 = vsel %vm366, %v367, %v260
      %v369 = vshrl.u32 %v368, 4
      %v370 = vand.u32 %v368, 15
      %v371 = vsub.s32 0, %v370
      %v372 = vsel %vm366, %v371, %v370
      %vm373 = vcmp.ne.s32.totalorder %v267, 0
      %vm374 = vcmp.ne.s32.totalorder %v274, 0
      %vm375 = vcmp.ne.s32.totalorder %v281, 0
      %vm376 = vcmp.ne.s32.totalorder %v288, 0
      %vm377 = vcmp.ne.s32.totalorder %v295, 0
      %vm378 = vcmp.ne.s32.totalorder %v302, 0
      %vm379 = vcmp.ne.s32.totalorder %v309, 0
      %vm380 = vcmp.ne.s32.totalorder %v316, 0
      %vm381 = vcmp.ne.s32.totalorder %v323, 0
      %vm382 = vcmp.ne.s32.totalorder %v330, 0
      %vm383 = vcmp.ne.s32.totalorder %v337, 0
      %vm384 = vcmp.ne.s32.totalorder %v344, 0
      %vm385 = vcmp.ne.s32.totalorder %v351, 0
      %vm386 = vcmp.ne.s32.totalorder %v358, 0
      %vm387 = vcmp.ne.s32.totalorder %v365, 0
      %vm388 = vcmp.ne.s32.totalorder %v372, 0
      %vm389 = vcmp.lt.s32.totalorder %v267, 0
      %vm390 = vcmp.lt.s32.totalorder %v274, 0
      %vm391 = vcmp.lt.s32.totalorder %v281, 0
      %vm392 = vcmp.lt.s32.totalorder %v288, 0
      %vm393 = vcmp.lt.s32.totalorder %v295, 0
      %vm394 = vcmp.lt.s32.totalorder %v302, 0
      %vm395 = vcmp.lt.s32.totalorder %v309, 0
      %vm396 = vcmp.lt.s32.totalorder %v316, 0
      %vm397 = vcmp.lt.s32.totalorder %v323, 0
      %vm398 = vcmp.lt.s32.totalorder %v330, 0
      %vm399 = vcmp.lt.s32.totalorder %v337, 0
      %vm400 = vcmp.lt.s32.totalorder %v344, 0
      %vm401 = vcmp.lt.s32.totalorder %v351, 0
      %vm402 = vcmp.lt.s32.totalorder %v358, 0
      %vm403 = vcmp.lt.s32.totalorder %v365, 0
      %vm404 = vcmp.lt.s32.totalorder %v372, 0
      %vm405 = vmand %vm389, %vm373
      %vm406 = vmand %vm390, %vm374
      %vm407 = vmand %vm391, %vm375
      %vm408 = vmand %vm392, %vm376
      %vm409 = vmand %vm393, %vm377
      %vm410 = vmand %vm394, %vm378
      %vm411 = vmand %vm395, %vm379
      %vm412 = vmand %vm396, %vm380
      %vm413 = vmand %vm397, %vm381
      %vm414 = vmand %vm398, %vm382
      %vm415 = vmand %vm399, %vm383
      %vm416 = vmand %vm400, %vm384
      %vm417 = vmand %vm401, %vm385
      %vm418 = vmand %vm402, %vm386
      %vm419 = vmand %vm403, %vm387
      %vm420 = vmand %vm404, %vm388
      %v421 = vadd.s32 %v267, 16
      %v422 = vadd.s32 %v274, 16
      %v423 = vadd.s32 %v281, 16
      %v424 = vadd.s32 %v288, 16
      %v425 = vadd.s32 %v295, 16
      %v426 = vadd.s32 %v302, 16
      %v427 = vadd.s32 %v309, 16
      %v428 = vadd.s32 %v316, 16
      %v429 = vadd.s32 %v323, 16
      %v430 = vadd.s32 %v330, 16
      %v431 = vadd.s32 %v337, 16
      %v432 = vadd.s32 %v344, 16
      %v433 = vadd.s32 %v351, 16
      %v434 = vadd.s32 %v358, 16
      %v435 = vadd.s32 %v365, 16
      %v436 = vadd.s32 %v372, 16
      %v437 = vsel %vm405, %v421, %v267
      %v438 = vsel %vm406, %v422, %v274
      %v439 = vsel %vm407, %v423, %v281
      %v440 = vsel %vm408, %v424, %v288
      %v441 = vsel %vm409, %v425, %v295
      %v442 = vsel %vm410, %v426, %v302
      %v443 = vsel %vm411, %v427, %v309
      %v444 = vsel %vm412, %v428, %v316
      %v445 = vsel %vm413, %v429, %v323
      %v446 = vsel %vm414, %v430, %v330
      %v447 = vsel %vm415, %v431, %v337
      %v448 = vsel %vm416, %v432, %v344
      %v449 = vsel %vm417, %v433, %v351
      %v450 = vsel %vm418, %v434, %v358
      %v451 = vsel %vm419, %v435, %v365
      %v452 = vsel %vm420, %v436, %v372
      %vm453 = vcmp.ne.s32.totalorder %v437, 0
      %vm454 = vcmp.ne.s32.totalorder %v438, 0
      %vm455 = vcmp.ne.s32.totalorder %v439, 0
      %vm456 = vcmp.ne.s32.totalorder %v440, 0
      %vm457 = vcmp.ne.s32.totalorder %v441, 0
      %vm458 = vcmp.ne.s32.totalorder %v442, 0
      %vm459 = vcmp.ne.s32.totalorder %v443, 0
      %vm460 = vcmp.ne.s32.totalorder %v444, 0
      %vm461 = vcmp.ne.s32.totalorder %v445, 0
      %vm462 = vcmp.ne.s32.totalorder %v446, 0
      %vm463 = vcmp.ne.s32.totalorder %v447, 0
      %vm464 = vcmp.ne.s32.totalorder %v448, 0
      %vm465 = vcmp.ne.s32.totalorder %v449, 0
      %vm466 = vcmp.ne.s32.totalorder %v450, 0
      %vm467 = vcmp.ne.s32.totalorder %v451, 0
      %vm468 = vcmp.ne.s32.totalorder %v452, 0
      %vm469 = vcmp.ne.s32.totalorder %v437, 15
      %vm470 = vcmp.ne.s32.totalorder %v438, 15
      %vm471 = vcmp.ne.s32.totalorder %v439, 15
      %vm472 = vcmp.ne.s32.totalorder %v440, 15
      %vm473 = vcmp.ne.s32.totalorder %v441, 15
      %vm474 = vcmp.ne.s32.totalorder %v442, 15
      %vm475 = vcmp.ne.s32.totalorder %v443, 15
      %vm476 = vcmp.ne.s32.totalorder %v444, 15
      %vm477 = vcmp.ne.s32.totalorder %v445, 15
      %vm478 = vcmp.ne.s32.totalorder %v446, 15
      %vm479 = vcmp.ne.s32.totalorder %v447, 15
      %vm480 = vcmp.ne.s32.totalorder %v448, 15
      %vm481 = vcmp.ne.s32.totalorder %v449, 15
      %vm482 = vcmp.ne.s32.totalorder %v450, 15
      %vm483 = vcmp.ne.s32.totalorder %v451, 15
      %vm484 = vcmp.ne.s32.totalorder %v452, 15
      %v485 = vrot.slane %v228, 7
      %v486 = vrot.slane %v229, 7
      %v487 = vrot.slane %v230, 7
      %v488 = vrot.slane %v231, 7
      %v489 = vrot.slane %v232, 7
      %v490 = vrot.slane %v233, 7
      %v491 = vrot.slane %v234, 7
      %v492 = vrot.slane %v235, 7
      %v493 = vrot.slane %v236, 7
      %v494 = vrot.slane %v237, 7
      %v495 = vrot.slane %v238, 7
      %v496 = vrot.slane %v239, 7
      %v497 = vrot.slane %v240, 7
      %v498 = vrot.slane %v241, 7
      %v499 = vrot.slane %v242, 7
      %v500 = vrot.slane %v243, 7
      %vm501 = vcmp.lt.s32.totalorder %v245, 1
      %v502 = vsel %vm501, %v499, %v500
      %v503 = vsel %vm501, %v498, %v499
      %v504 = vsel %vm501, %v497, %v498
      %v505 = vsel %vm501, %v496, %v497
      %v506 = vsel %vm501, %v495, %v496
      %v507 = vsel %vm501, %v494, %v495
      %v508 = vsel %vm501, %v493, %v494
      %v509 = vsel %vm501, %v492, %v493
      %v510 = vsel %vm501, %v491, %v492
      %v511 = vsel %vm501, %v490, %v491
      %v512 = vsel %vm501, %v489, %v490
      %v513 = vsel %vm501, %v488, %v489
      %v514 = vsel %vm501, %v487, %v488
      %v515 = vsel %vm501, %v486, %v487
      %v516 = vsel %vm501, %v485, %v486
      %v517 = vsel %vm501, %v500, %v485
      %v518 = vsel %vm453, %v517, 0.0
      %v519 = vsel %vm454, %v516, 0.0
      %v520 = vsel %vm455, %v515, 0.0
      %v521 = vsel %vm456, %v514, 0.0
      %v522 = vsel %vm457, %v513, 0.0
      %v523 = vsel %vm458, %v512, 0.0
      %v524 = vsel %vm459, %v511, 0.0
      %v525 = vsel %vm460, %v510, 0.0
      %v526 = vsel %vm461, %v509, 0.0
      %v527 = vsel %vm462, %v508, 0.0
      %v528 = vsel %vm463, %v507, 0.0
      %v529 = vsel %vm464, %v506, 0.0
      %v530 = vsel %vm465, %v505, 0.0
      %v531 = vsel %vm466, %v504, 0.0
      %v532 = vsel %vm467, %v503, 0.0
      %v533 = vsel %vm468, %v502, 0.0
      %v534 = vrot.slane %v228, 1
      %v535 = vrot.slane %v229, 1
      %v536 = vrot.slane %v230, 1
      %v537 = vrot.slane %v231, 1
      %v538 = vrot.slane %v232, 1
      %v539 = vrot.slane %v233, 1
      %v540 = vrot.slane %v234, 1
      %v541 = vrot.slane %v235, 1
      %v542 = vrot.slane %v236, 1
      %v543 = vrot.slane %v237, 1
      %v544 = vrot.slane %v238, 1
      %v545 = vrot.slane %v239, 1
      %v546 = vrot.slane %v240, 1
      %v547 = vrot.slane %v241, 1
      %v548 = vrot.slane %v242, 1
      %v549 = vrot.slane %v243, 1
      %vm550 = vcmp.lt.s32.totalorder %v245, 7
      %v551 = vsel %vm550, %v548, %v549
      %v552 = vsel %vm550, %v547, %v548
      %v553 = vsel %vm550, %v546, %v547
      %v554 = vsel %vm550, %v545, %v546
      %v555 = vsel %vm550, %v544, %v545
      %v556 = vsel %vm550, %v543, %v544
      %v557 = vsel %vm550, %v542, %v543
      %v558 = vsel %vm550, %v541, %v542
      %v559 = vsel %vm550, %v540, %v541
      %v560 = vsel %vm550, %v539, %v540
      %v561 = vsel %vm550, %v538, %v539
      %v562 = vsel %vm550, %v537, %v538
      %v563 = vsel %vm550, %v536, %v537
      %v564 = vsel %vm550, %v535, %v536
      %v565 = vsel %vm550, %v534, %v535
      %v566 = vsel %vm550, %v549, %v534
      %v567 = vsel %vm469, %v565, 0.0
      %v568 = vsel %vm470, %v564, 0.0
      %v569 = vsel %vm471, %v563, 0.0
      %v570 = vsel %vm472, %v562, 0.0
      %v571 = vsel %vm473, %v561, 0.0
      %v572 = vsel %vm474, %v560, 0.0
      %v573 = vsel %vm475, %v559, 0.0
      %v574 = vsel %vm476, %v558, 0.0
      %v575 = vsel %vm477, %v557, 0.0
      %v576 = vsel %vm478, %v556, 0.0
      %v577 = vsel %vm479, %v555, 0.0
      %v578 = vsel %vm480, %v554, 0.0
      %v579 = vsel %vm481, %v553, 0.0
      %v580 = vsel %vm482, %v552, 0.0
      %v581 = vsel %vm483, %v551, 0.0
      %v582 = vsel %vm484, %v566, 0.0
      %583 = vrot.lane.b32.xlu0 %v518, 8
      %v584 = vpop.permute.xlu0 %583
      %585 = vrot.lane.b32.xlu0 %v519, 8
      %v586 = vpop.permute.xlu0 %585
      %587 = vrot.lane.b32.xlu0 %v520, 8
      %v588 = vpop.permute.xlu0 %587
      %589 = vrot.lane.b32.xlu0 %v521, 8
      %v590 = vpop.permute.xlu0 %589
      %591 = vrot.lane.b32.xlu0 %v522, 8
      %v592 = vpop.permute.xlu0 %591
      %593 = vrot.lane.b32.xlu0 %v523, 8
      %v594 = vpop.permute.xlu0 %593
      %595 = vrot.lane.b32.xlu0 %v524, 8
      %v596 = vpop.permute.xlu0 %595
      %597 = vrot.lane.b32.xlu0 %v525, 8
      %v598 = vpop.permute.xlu0 %597
      %599 = vrot.lane.b32.xlu0 %v526, 8
      %v600 = vpop.permute.xlu0 %599
      %601 = vrot.lane.b32.xlu0 %v527, 8
      %v602 = vpop.permute.xlu0 %601
      %603 = vrot.lane.b32.xlu0 %v528, 8
      %v604 = vpop.permute.xlu0 %603
      %605 = vrot.lane.b32.xlu0 %v529, 8
      %v606 = vpop.permute.xlu0 %605
      %607 = vrot.lane.b32.xlu0 %v530, 8
      %v608 = vpop.permute.xlu0 %607
      %609 = vrot.lane.b32.xlu0 %v531, 8
      %v610 = vpop.permute.xlu0 %609
      %611 = vrot.lane.b32.xlu0 %v532, 8
      %v612 = vpop.permute.xlu0 %611
      %613 = vrot.lane.b32.xlu0 %v533, 8
      %v614 = vpop.permute.xlu0 %613
      %615 = vrot.lane.b32.xlu0 %v518, 120
      %v616 = vpop.permute.xlu0 %615
      %617 = vrot.lane.b32.xlu0 %v519, 120
      %v618 = vpop.permute.xlu0 %617
      %619 = vrot.lane.b32.xlu0 %v520, 120
      %v620 = vpop.permute.xlu0 %619
      %621 = vrot.lane.b32.xlu0 %v521, 120
      %v622 = vpop.permute.xlu0 %621
      %623 = vrot.lane.b32.xlu0 %v522, 120
      %v624 = vpop.permute.xlu0 %623
      %625 = vrot.lane.b32.xlu0 %v523, 120
      %v626 = vpop.permute.xlu0 %625
      %627 = vrot.lane.b32.xlu0 %v524, 120
      %v628 = vpop.permute.xlu0 %627
      %629 = vrot.lane.b32.xlu0 %v525, 120
      %v630 = vpop.permute.xlu0 %629
      %631 = vrot.lane.b32.xlu0 %v526, 120
      %v632 = vpop.permute.xlu0 %631
      %633 = vrot.lane.b32.xlu0 %v527, 120
      %v634 = vpop.permute.xlu0 %633
      %635 = vrot.lane.b32.xlu0 %v528, 120
      %v636 = vpop.permute.xlu0 %635
      %637 = vrot.lane.b32.xlu0 %v529, 120
      %v638 = vpop.permute.xlu0 %637
      %639 = vrot.lane.b32.xlu0 %v530, 120
      %v640 = vpop.permute.xlu0 %639
      %641 = vrot.lane.b32.xlu0 %v531, 120
      %v642 = vpop.permute.xlu0 %641
      %643 = vrot.lane.b32.xlu0 %v532, 120
      %v644 = vpop.permute.xlu0 %643
      %645 = vrot.lane.b32.xlu0 %v533, 120
      %v646 = vpop.permute.xlu0 %645
      %647 = vrot.lane.b32.xlu0 %v228, 8
      %v648 = vpop.permute.xlu0 %647
      %649 = vrot.lane.b32.xlu0 %v229, 8
      %v650 = vpop.permute.xlu0 %649
      %651 = vrot.lane.b32.xlu0 %v230, 8
      %v652 = vpop.permute.xlu0 %651
      %653 = vrot.lane.b32.xlu0 %v231, 8
      %v654 = vpop.permute.xlu0 %653
      %655 = vrot.lane.b32.xlu0 %v232, 8
      %v656 = vpop.permute.xlu0 %655
      %657 = vrot.lane.b32.xlu0 %v233, 8
      %v658 = vpop.permute.xlu0 %657
      %659 = vrot.lane.b32.xlu0 %v234, 8
      %v660 = vpop.permute.xlu0 %659
      %661 = vrot.lane.b32.xlu0 %v235, 8
      %v662 = vpop.permute.xlu0 %661
      %663 = vrot.lane.b32.xlu0 %v236, 8
      %v664 = vpop.permute.xlu0 %663
      %665 = vrot.lane.b32.xlu0 %v237, 8
      %v666 = vpop.permute.xlu0 %665
      %667 = vrot.lane.b32.xlu0 %v238, 8
      %v668 = vpop.permute.xlu0 %667
      %669 = vrot.lane.b32.xlu0 %v239, 8
      %v670 = vpop.permute.xlu0 %669
      %671 = vrot.lane.b32.xlu0 %v240, 8
      %v672 = vpop.permute.xlu0 %671
      %673 = vrot.lane.b32.xlu0 %v241, 8
      %v674 = vpop.permute.xlu0 %673
      %675 = vrot.lane.b32.xlu0 %v242, 8
      %v676 = vpop.permute.xlu0 %675
      %677 = vrot.lane.b32.xlu0 %v243, 8
      %v678 = vpop.permute.xlu0 %677
      %679 = vrot.lane.b32.xlu0 %v228, 120
      %v680 = vpop.permute.xlu0 %679
      %681 = vrot.lane.b32.xlu0 %v229, 120
      %v682 = vpop.permute.xlu0 %681
      %683 = vrot.lane.b32.xlu0 %v230, 120
      %v684 = vpop.permute.xlu0 %683
      %685 = vrot.lane.b32.xlu0 %v231, 120
      %v686 = vpop.permute.xlu0 %685
      %687 = vrot.lane.b32.xlu0 %v232, 120
      %v688 = vpop.permute.xlu0 %687
      %689 = vrot.lane.b32.xlu0 %v233, 120
      %v690 = vpop.permute.xlu0 %689
      %691 = vrot.lane.b32.xlu0 %v234, 120
      %v692 = vpop.permute.xlu0 %691
      %693 = vrot.lane.b32.xlu0 %v235, 120
      %v694 = vpop.permute.xlu0 %693
      %695 = vrot.lane.b32.xlu0 %v236, 120
      %v696 = vpop.permute.xlu0 %695
      %697 = vrot.lane.b32.xlu0 %v237, 120
      %v698 = vpop.permute.xlu0 %697
      %699 = vrot.lane.b32.xlu0 %v238, 120
      %v700 = vpop.permute.xlu0 %699
      %701 = vrot.lane.b32.xlu0 %v239, 120
      %v702 = vpop.permute.xlu0 %701
      %703 = vrot.lane.b32.xlu0 %v240, 120
      %v704 = vpop.permute.xlu0 %703
      %705 = vrot.lane.b32.xlu0 %v241, 120
      %v706 = vpop.permute.xlu0 %705
      %707 = vrot.lane.b32.xlu0 %v242, 120
      %v708 = vpop.permute.xlu0 %707
      %709 = vrot.lane.b32.xlu0 %v243, 120
      %v710 = vpop.permute.xlu0 %709
      %711 = vrot.lane.b32.xlu0 %v567, 8
      %v712 = vpop.permute.xlu0 %711
      %713 = vrot.lane.b32.xlu0 %v568, 8
      %v714 = vpop.permute.xlu0 %713
      %715 = vrot.lane.b32.xlu0 %v569, 8
      %v716 = vpop.permute.xlu0 %715
      %717 = vrot.lane.b32.xlu0 %v570, 8
      %v718 = vpop.permute.xlu0 %717
      %719 = vrot.lane.b32.xlu0 %v571, 8
      %v720 = vpop.permute.xlu0 %719
      %721 = vrot.lane.b32.xlu0 %v572, 8
      %v722 = vpop.permute.xlu0 %721
      %723 = vrot.lane.b32.xlu0 %v573, 8
      %v724 = vpop.permute.xlu0 %723
      %725 = vrot.lane.b32.xlu0 %v574, 8
      %v726 = vpop.permute.xlu0 %725
      %727 = vrot.lane.b32.xlu0 %v575, 8
      %v728 = vpop.permute.xlu0 %727
      %729 = vrot.lane.b32.xlu0 %v576, 8
      %v730 = vpop.permute.xlu0 %729
      %731 = vrot.lane.b32.xlu0 %v577, 8
      %v732 = vpop.permute.xlu0 %731
      %733 = vrot.lane.b32.xlu0 %v578, 8
      %v734 = vpop.permute.xlu0 %733
      %735 = vrot.lane.b32.xlu0 %v579, 8
      %v736 = vpop.permute.xlu0 %735
      %737 = vrot.lane.b32.xlu0 %v580, 8
      %v738 = vpop.permute.xlu0 %737
      %739 = vrot.lane.b32.xlu0 %v581, 8
      %v740 = vpop.permute.xlu0 %739
      %741 = vrot.lane.b32.xlu0 %v582, 8
      %v742 = vpop.permute.xlu0 %741
      %743 = vrot.lane.b32.xlu0 %v567, 120
      %v744 = vpop.permute.xlu0 %743
      %745 = vrot.lane.b32.xlu0 %v568, 120
      %v746 = vpop.permute.xlu0 %745
      %747 = vrot.lane.b32.xlu0 %v569, 120
      %v748 = vpop.permute.xlu0 %747
      %749 = vrot.lane.b32.xlu0 %v570, 120
      %v750 = vpop.permute.xlu0 %749
      %751 = vrot.lane.b32.xlu0 %v571, 120
      %v752 = vpop.permute.xlu0 %751
      %753 = vrot.lane.b32.xlu0 %v572, 120
      %v754 = vpop.permute.xlu0 %753
      %755 = vrot.lane.b32.xlu0 %v573, 120
      %v756 = vpop.permute.xlu0 %755
      %757 = vrot.lane.b32.xlu0 %v574, 120
      %v758 = vpop.permute.xlu0 %757
      %759 = vrot.lane.b32.xlu0 %v575, 120
      %v760 = vpop.permute.xlu0 %759
      %761 = vrot.lane.b32.xlu0 %v576, 120
      %v762 = vpop.permute.xlu0 %761
      %763 = vrot.lane.b32.xlu0 %v577, 120
      %v764 = vpop.permute.xlu0 %763
      %765 = vrot.lane.b32.xlu0 %v578, 120
      %v766 = vpop.permute.xlu0 %765
      %767 = vrot.lane.b32.xlu0 %v579, 120
      %v768 = vpop.permute.xlu0 %767
      %769 = vrot.lane.b32.xlu0 %v580, 120
      %v770 = vpop.permute.xlu0 %769
      %771 = vrot.lane.b32.xlu0 %v581, 120
      %v772 = vpop.permute.xlu0 %771
      %773 = vrot.lane.b32.xlu0 %v582, 120
      %v774 = vpop.permute.xlu0 %773
      %v775 = vld [vmem:[%s1] sm:$0xff]
      %v776 = vld [vmem:[%s1 + $0x8] sm:$0xff]
      %v777 = vld [vmem:[%s1 + $0x10] sm:$0xff]
      %v778 = vld [vmem:[%s1 + $0x18] sm:$0xff]
      %v779 = vld [vmem:[%s1 + $0x20] sm:$0xff]
      %v780 = vld [vmem:[%s1 + $0x28] sm:$0xff]
      %v781 = vld [vmem:[%s1 + $0x30] sm:$0xff]
      %v782 = vld [vmem:[%s1 + $0x38] sm:$0xff]
      %v783 = vld [vmem:[%s1 + $0x40] sm:$0xff]
      %v784 = vld [vmem:[%s1 + $0x48] sm:$0xff]
      %v785 = vld [vmem:[%s1 + $0x50] sm:$0xff]
      %v786 = vld [vmem:[%s1 + $0x58] sm:$0xff]
      %v787 = vld [vmem:[%s1 + $0x60] sm:$0xff]
      %v788 = vld [vmem:[%s1 + $0x68] sm:$0xff]
      %v789 = vld [vmem:[%s1 + $0x70] sm:$0xff]
      %v790 = vld [vmem:[%s1 + $0x78] sm:$0xff]
      %v791 = vld [vmem:[%s1 + $0x80] sm:$0xff]
      %v792 = vld [vmem:[%s1 + $0x88] sm:$0xff]
      %v793 = vld [vmem:[%s1 + $0x90] sm:$0xff]
      %v794 = vld [vmem:[%s1 + $0x98] sm:$0xff]
      %v795 = vld [vmem:[%s1 + $0xa0] sm:$0xff]
      %v796 = vld [vmem:[%s1 + $0xa8] sm:$0xff]
      %v797 = vld [vmem:[%s1 + $0xb0] sm:$0xff]
      %v798 = vld [vmem:[%s1 + $0xb8] sm:$0xff]
      %v799 = vld [vmem:[%s1 + $0xc0] sm:$0xff]
      %v800 = vld [vmem:[%s1 + $0xc8] sm:$0xff]
      %v801 = vld [vmem:[%s1 + $0xd0] sm:$0xff]
      %v802 = vld [vmem:[%s1 + $0xd8] sm:$0xff]
      %v803 = vld [vmem:[%s1 + $0xe0] sm:$0xff]
      %v804 = vld [vmem:[%s1 + $0xe8] sm:$0xff]
      %v805 = vld [vmem:[%s1 + $0xf0] sm:$0xff]
      %v806 = vld [vmem:[%s1 + $0xf8] sm:$0xff]
      %v807 = vld [vmem:[%s1 + $0x100] sm:$0xff]
      %v808 = vld [vmem:[%s1 + $0x108] sm:$0xff]
      %v809 = vld [vmem:[%s1 + $0x110] sm:$0xff]
      %v810 = vld [vmem:[%s1 + $0x118] sm:$0xff]
      %v811 = vld [vmem:[%s1 + $0x120] sm:$0xff]
      %v812 = vld [vmem:[%s1 + $0x128] sm:$0xff]
      %v813 = vld [vmem:[%s1 + $0x130] sm:$0xff]
      %v814 = vld [vmem:[%s1 + $0x138] sm:$0xff]
      %v815 = vld [vmem:[%s1 + $0x140] sm:$0xff]
      %v816 = vld [vmem:[%s1 + $0x148] sm:$0xff]
      %v817 = vld [vmem:[%s1 + $0x150] sm:$0xff]
      %v818 = vld [vmem:[%s1 + $0x158] sm:$0xff]
      %v819 = vld [vmem:[%s1 + $0x160] sm:$0xff]
      %v820 = vld [vmem:[%s1 + $0x168] sm:$0xff]
      %v821 = vld [vmem:[%s1 + $0x170] sm:$0xff]
      %v822 = vld [vmem:[%s1 + $0x178] sm:$0xff]
      %v823 = vld [vmem:[%s1 + $0x180] sm:$0xff]
      %v824 = vld [vmem:[%s1 + $0x188] sm:$0xff]
      %v825 = vld [vmem:[%s1 + $0x190] sm:$0xff]
      %v826 = vld [vmem:[%s1 + $0x198] sm:$0xff]
      %v827 = vld [vmem:[%s1 + $0x1a0] sm:$0xff]
      %v828 = vld [vmem:[%s1 + $0x1a8] sm:$0xff]
      %v829 = vld [vmem:[%s1 + $0x1b0] sm:$0xff]
      %v830 = vld [vmem:[%s1 + $0x1b8] sm:$0xff]
      %v831 = vld [vmem:[%s1 + $0x1c0] sm:$0xff]
      %v832 = vld [vmem:[%s1 + $0x1c8] sm:$0xff]
      %v833 = vld [vmem:[%s1 + $0x1d0] sm:$0xff]
      %v834 = vld [vmem:[%s1 + $0x1d8] sm:$0xff]
      %v835 = vld [vmem:[%s1 + $0x1e0] sm:$0xff]
      %v836 = vld [vmem:[%s1 + $0x1e8] sm:$0xff]
      %v837 = vld [vmem:[%s1 + $0x1f0] sm:$0xff]
      %v838 = vld [vmem:[%s1 + $0x1f8] sm:$0xff]
      %v839 = vld [vmem:[%s1 + $0x200] sm:$0xff]
      %v840 = vld [vmem:[%s1 + $0x208] sm:$0xff]
      %v841 = vld [vmem:[%s1 + $0x210] sm:$0xff]
      %v842 = vld [vmem:[%s1 + $0x218] sm:$0xff]
      %v843 = vld [vmem:[%s1 + $0x220] sm:$0xff]
      %v844 = vld [vmem:[%s1 + $0x228] sm:$0xff]
      %v845 = vld [vmem:[%s1 + $0x230] sm:$0xff]
      %v846 = vld [vmem:[%s1 + $0x238] sm:$0xff]
      %v847 = vld [vmem:[%s1 + $0x240] sm:$0xff]
      %v848 = vld [vmem:[%s1 + $0x248] sm:$0xff]
      %v849 = vld [vmem:[%s1 + $0x250] sm:$0xff]
      %v850 = vld [vmem:[%s1 + $0x258] sm:$0xff]
      %v851 = vld [vmem:[%s1 + $0x260] sm:$0xff]
      %v852 = vld [vmem:[%s1 + $0x268] sm:$0xff]
      %v853 = vld [vmem:[%s1 + $0x270] sm:$0xff]
      %v854 = vld [vmem:[%s1 + $0x278] sm:$0xff]
      %v855 = vld [vmem:[%s1 + $0x280] sm:$0xff]
      %v856 = vld [vmem:[%s1 + $0x288] sm:$0xff]
      %v857 = vld [vmem:[%s1 + $0x290] sm:$0xff]
      %v858 = vld [vmem:[%s1 + $0x298] sm:$0xff]
      %v859 = vld [vmem:[%s1 + $0x2a0] sm:$0xff]
      %v860 = vld [vmem:[%s1 + $0x2a8] sm:$0xff]
      %v861 = vld [vmem:[%s1 + $0x2b0] sm:$0xff]
      %v862 = vld [vmem:[%s1 + $0x2b8] sm:$0xff]
      %v863 = vld [vmem:[%s1 + $0x2c0] sm:$0xff]
      %v864 = vld [vmem:[%s1 + $0x2c8] sm:$0xff]
      %v865 = vld [vmem:[%s1 + $0x2d0] sm:$0xff]
      %v866 = vld [vmem:[%s1 + $0x2d8] sm:$0xff]
      %v867 = vld [vmem:[%s1 + $0x2e0] sm:$0xff]
      %v868 = vld [vmem:[%s1 + $0x2e8] sm:$0xff]
      %v869 = vld [vmem:[%s1 + $0x2f0] sm:$0xff]
      %v870 = vld [vmem:[%s1 + $0x2f8] sm:$0xff]
      %v871 = vld [vmem:[%s1 + $0x300] sm:$0xff]
      %v872 = vld [vmem:[%s1 + $0x308] sm:$0xff]
      %v873 = vld [vmem:[%s1 + $0x310] sm:$0xff]
      %v874 = vld [vmem:[%s1 + $0x318] sm:$0xff]
      %v875 = vld [vmem:[%s1 + $0x320] sm:$0xff]
      %v876 = vld [vmem:[%s1 + $0x328] sm:$0xff]
      %v877 = vld [vmem:[%s1 + $0x330] sm:$0xff]
      %v878 = vld [vmem:[%s1 + $0x338] sm:$0xff]
      %v879 = vld [vmem:[%s1 + $0x340] sm:$0xff]
      %v880 = vld [vmem:[%s1 + $0x348] sm:$0xff]
      %v881 = vld [vmem:[%s1 + $0x350] sm:$0xff]
      %v882 = vld [vmem:[%s1 + $0x358] sm:$0xff]
      %v883 = vld [vmem:[%s1 + $0x360] sm:$0xff]
      %v884 = vld [vmem:[%s1 + $0x368] sm:$0xff]
      %v885 = vld [vmem:[%s1 + $0x370] sm:$0xff]
      %v886 = vld [vmem:[%s1 + $0x378] sm:$0xff]
      %v887 = vld [vmem:[%s1 + $0x380] sm:$0xff]
      %v888 = vld [vmem:[%s1 + $0x388] sm:$0xff]
      %v889 = vld [vmem:[%s1 + $0x390] sm:$0xff]
      %v890 = vld [vmem:[%s1 + $0x398] sm:$0xff]
      %v891 = vld [vmem:[%s1 + $0x3a0] sm:$0xff]
      %v892 = vld [vmem:[%s1 + $0x3a8] sm:$0xff]
      %v893 = vld [vmem:[%s1 + $0x3b0] sm:$0xff]
      %v894 = vld [vmem:[%s1 + $0x3b8] sm:$0xff]
      %v895 = vld [vmem:[%s1 + $0x3c0] sm:$0xff]
      %v896 = vld [vmem:[%s1 + $0x3c8] sm:$0xff]
      %v897 = vld [vmem:[%s1 + $0x3d0] sm:$0xff]
      %v898 = vld [vmem:[%s1 + $0x3d8] sm:$0xff]
      %v899 = vld [vmem:[%s1 + $0x3e0] sm:$0xff]
      %v900 = vld [vmem:[%s1 + $0x3e8] sm:$0xff]
      %v901 = vld [vmem:[%s1 + $0x3f0] sm:$0xff]
      %v902 = vld [vmem:[%s1 + $0x3f8] sm:$0xff]
      %v903 = vld [vmem:[%s1 + $0x400] sm:$0xff]
      %v904 = vld [vmem:[%s1 + $0x408] sm:$0xff]
      %v905 = vld [vmem:[%s1 + $0x410] sm:$0xff]
      %v906 = vld [vmem:[%s1 + $0x418] sm:$0xff]
      %v907 = vld [vmem:[%s1 + $0x420] sm:$0xff]
      %v908 = vld [vmem:[%s1 + $0x428] sm:$0xff]
      %v909 = vld [vmem:[%s1 + $0x430] sm:$0xff]
      %v910 = vld [vmem:[%s1 + $0x438] sm:$0xff]
      %v911 = vld [vmem:[%s1 + $0x440] sm:$0xff]
      %v912 = vld [vmem:[%s1 + $0x448] sm:$0xff]
      %v913 = vld [vmem:[%s1 + $0x450] sm:$0xff]
      %v914 = vld [vmem:[%s1 + $0x458] sm:$0xff]
      %v915 = vld [vmem:[%s1 + $0x460] sm:$0xff]
      %v916 = vld [vmem:[%s1 + $0x468] sm:$0xff]
      %v917 = vld [vmem:[%s1 + $0x470] sm:$0xff]
      %v918 = vld [vmem:[%s1 + $0x478] sm:$0xff]
      %v919 = vld [vmem:[%s3] sm:$0x1]
      %v921 = vlaneseq
      %v922 = vshrl.u32 %v921, 7
      %v923 = vsub.s32 0, %v922
      %v924 = vrot.slane %v919, %v923
      %926 = vmatprep.subr.mxu0 0.0
      %927 = vmatpush1.msra.mxu0 %v775
      %928 = vmatprep.subr.mxu0 0.0
      %929 = vmatpush1.msra.mxu0 %v776
      %930 = vmatprep.subr.mxu0 0.0
      %931 = vmatpush1.msra.mxu0 %v777
      %932 = vmatprep.subr.mxu0 0.0
      %933 = vmatpush1.msra.mxu0 %v778
      %934 = vmatprep.subr.mxu0 0.0
      %935 = vmatpush1.msra.mxu0 %v779
      %936 = vmatprep.subr.mxu0 0.0
      %937 = vmatpush1.msra.mxu0 %v780
      %938 = vmatprep.subr.mxu0 0.0
      %939 = vmatpush1.msra.mxu0 %v781
      %940 = vmatprep.subr.mxu0 0.0
      %941 = vmatpush1.msra.mxu0 %v782
      %942 = vmatprep.subr.mxu0 0.0
      %943 = vmatpush1.msra.mxu0 %v783
      %944 = vmatprep.subr.mxu0 0.0
      %945 = vmatpush1.msra.mxu0 %v784
      %946 = vmatprep.subr.mxu0 0.0
      %947 = vmatpush1.msra.mxu0 %v785
      %948 = vmatprep.subr.mxu0 0.0
      %949 = vmatpush1.msra.mxu0 %v786
      %950 = vmatprep.subr.mxu0 0.0
      %951 = vmatpush1.msra.mxu0 %v787
      %952 = vmatprep.subr.mxu0 0.0
      %953 = vmatpush1.msra.mxu0 %v788
      %954 = vmatprep.subr.mxu0 0.0
      %955 = vmatpush1.msra.mxu0 %v789
      %956 = vmatprep.subr.mxu0 0.0
      %957 = vmatpush1.msra.mxu0 %v790
      %958 = vmatprep.subr.mxu0 0.0
      %959 = vmatpush1.msra.mxu0 %v791
      %960 = vmatprep.subr.mxu0 0.0
      %961 = vmatpush1.msra.mxu0 %v792
      %962 = vmatprep.subr.mxu0 0.0
      %963 = vmatpush1.msra.mxu0 %v793
      %964 = vmatprep.subr.mxu0 0.0
      %965 = vmatpush1.msra.mxu0 %v794
      %966 = vmatprep.subr.mxu0 0.0
      %967 = vmatpush1.msra.mxu0 %v795
      %968 = vmatprep.subr.mxu0 0.0
      %969 = vmatpush1.msra.mxu0 %v796
      %970 = vmatprep.subr.mxu0 0.0
      %971 = vmatpush1.msra.mxu0 %v797
      %972 = vmatprep.subr.mxu0 0.0
      %973 = vmatpush1.msra.mxu0 %v798
      %974 = vmatprep.subr.mxu0 0.0
      %975 = vmatpush1.msra.mxu0 %v799
      %976 = vmatprep.subr.mxu0 0.0
      %977 = vmatpush1.msra.mxu0 %v800
      %978 = vmatprep.subr.mxu0 0.0
      %979 = vmatpush1.msra.mxu0 %v801
      %980 = vmatprep.subr.mxu0 0.0
      %981 = vmatpush1.msra.mxu0 %v802
      %982 = vmatprep.subr.mxu0 0.0
      %983 = vmatpush1.msra.mxu0 %v803
      %984 = vmatprep.subr.mxu0 0.0
      %985 = vmatpush1.msra.mxu0 %v804
      %986 = vmatprep.subr.mxu0 0.0
      %987 = vmatpush1.msra.mxu0 %v805
      %988 = vmatprep.subr.mxu0 0.0
      %989 = vmatpush1.msra.mxu0 %v806
      %990 = vmatprep.mubr.f32.mxu0 %v518
      %991 = vmatmul.mubr.f32.gmra.mrb[0].mxu0 %v584
      %v992 = vpop.f32.mrb[0].mxu0
      %v993 = vadd.f32 %v924, %v992
      %v994 = vpop.f32.mrb[0].mxu0
      %995 = vmatprep.mubr.f32.mxu0 %v519
      %996 = vmatmul.mubr.f32.gmra.mrb[0].mxu0 %v586
      %v997 = vpop.f32.mrb[0].mxu0
      %v998 = vadd.f32 %v924, %v997
      %v999 = vpop.f32.mrb[0].mxu0
      %1000 = vmatprep.mubr.f32.mxu0 %v520
      %1001 = vmatmul.mubr.f32.gmra.mrb[0].mxu0 %v588
      %v1002 = vpop.f32.mrb[0].mxu0
      %v1003 = vadd.f32 %v924, %v1002
      %v1004 = vpop.f32.mrb[0].mxu0
      %1005 = vmatprep.mubr.f32.mxu0 %v521
      %1006 = vmatmul.mubr.f32.gmra.mrb[0].mxu0 %v590
      %v1007 = vpop.f32.mrb[0].mxu0
      %v1008 = vadd.f32 %v924, %v1007
      %v1009 = vpop.f32.mrb[0].mxu0
      %1010 = vmatprep.mubr.f32.mxu0 %v522
      %1011 = vmatmul.mubr.f32.gmra.mrb[0].mxu0 %v592
      %v1012 = vpop.f32.mrb[0].mxu0
      %v1013 = vadd.f32 %v924, %v1012
      %v1014 = vpop.f32.mrb[0].mxu0
      %1015 = vmatprep.mubr.f32.mxu0 %v523
      %1016 = vmatmul.mubr.f32.gmra.mrb[0].mxu0 %v594
      %v1017 = vpop.f32.mrb[0].mxu0
      %v1018 = vadd.f32 %v924, %v1017
      %v1019 = vpop.f32.mrb[0].mxu0
      %1020 = vmatprep.mubr.f32.mxu0 %v524
      %1021 = vmatmul.mubr.f32.gmra.mrb[0].mxu0 %v596
      %v1022 = vpop.f32.mrb[0].mxu0
      %v1023 = vadd.f32 %v924, %v1022
      %v1024 = vpop.f32.mrb[0].mxu0
      %1025 = vmatprep.mubr.f32.mxu0 %v525
      %1026 = vmatmul.mubr.f32.gmra.mrb[0].mxu0 %v598
      %v1027 = vpop.f32.mrb[0].mxu0
      %v1028 = vadd.f32 %v924, %v1027
      %v1029 = vpop.f32.mrb[0].mxu0
      %1030 = vmatprep.mubr.f32.mxu0 %v526
      %1031 = vmatmul.mubr.f32.gmra.mrb[0].mxu0 %v600
      %v1032 = vpop.f32.mrb[0].mxu0
      %v1033 = vadd.f32 %v924, %v1032
      %v1034 = vpop.f32.mrb[0].mxu0
      %1035 = vmatprep.mubr.f32.mxu0 %v527
      %1036 = vmatmul.mubr.f32.gmra.mrb[0].mxu0 %v602
      %v1037 = vpop.f32.mrb[0].mxu0
      %v1038 = vadd.f32 %v924, %v1037
      %v1039 = vpop.f32.mrb[0].mxu0
      %1040 = vmatprep.mubr.f32.mxu0 %v528
      %1041 = vmatmul.mubr.f32.gmra.mrb[0].mxu0 %v604
      %v1042 = vpop.f32.mrb[0].mxu0
      %v1043 = vadd.f32 %v924, %v1042
      %v1044 = vpop.f32.mrb[0].mxu0
      %1045 = vmatprep.mubr.f32.mxu0 %v529
      %1046 = vmatmul.mubr.f32.gmra.mrb[0].mxu0 %v606
      %v1047 = vpop.f32.mrb[0].mxu0
      %v1048 = vadd.f32 %v924, %v1047
      %v1049 = vpop.f32.mrb[0].mxu0
      %1050 = vmatprep.mubr.f32.mxu0 %v530
      %1051 = vmatmul.mubr.f32.gmra.mrb[0].mxu0 %v608
      %v1052 = vpop.f32.mrb[0].mxu0
      %v1053 = vadd.f32 %v924, %v1052
      %v1054 = vpop.f32.mrb[0].mxu0
      %1055 = vmatprep.mubr.f32.mxu0 %v531
      %1056 = vmatmul.mubr.f32.gmra.mrb[0].mxu0 %v610
      %v1057 = vpop.f32.mrb[0].mxu0
      %v1058 = vadd.f32 %v924, %v1057
      %v1059 = vpop.f32.mrb[0].mxu0
      %1060 = vmatprep.mubr.f32.mxu0 %v532
      %1061 = vmatmul.mubr.f32.gmra.mrb[0].mxu0 %v612
      %v1062 = vpop.f32.mrb[0].mxu0
      %v1063 = vadd.f32 %v924, %v1062
      %v1064 = vpop.f32.mrb[0].mxu0
      %1065 = vmatprep.mubr.f32.mxu0 %v533
      %1066 = vmatmul.mubr.f32.gmra.mrb[0].mxu0 %v614
      %v1067 = vpop.f32.mrb[0].mxu0
      %v1068 = vadd.f32 %v924, %v1067
      %v1069 = vpop.f32.mrb[0].mxu0
      %1070 = vdwg.mxu0
      %1071 = vmatprep.subr.mxu0 0.0
      %1072 = vmatpush1.msra.mxu0 %v807
      %1073 = vmatprep.subr.mxu0 0.0
      %1074 = vmatpush1.msra.mxu0 %v808
      %1075 = vmatprep.subr.mxu0 0.0
      %1076 = vmatpush1.msra.mxu0 %v809
      %1077 = vmatprep.subr.mxu0 0.0
      %1078 = vmatpush1.msra.mxu0 %v810
      %1079 = vmatprep.subr.mxu0 0.0
      %1080 = vmatpush1.msra.mxu0 %v811
      %1081 = vmatprep.subr.mxu0 0.0
      %1082 = vmatpush1.msra.mxu0 %v812
      %1083 = vmatprep.subr.mxu0 0.0
      %1084 = vmatpush1.msra.mxu0 %v813
      %1085 = vmatprep.subr.mxu0 0.0
      %1086 = vmatpush1.msra.mxu0 %v814
      %1087 = vmatprep.subr.mxu0 0.0
      %1088 = vmatpush1.msra.mxu0 %v815
      %1089 = vmatprep.subr.mxu0 0.0
      %1090 = vmatpush1.msra.mxu0 %v816
      %1091 = vmatprep.subr.mxu0 0.0
      %1092 = vmatpush1.msra.mxu0 %v817
      %1093 = vmatprep.subr.mxu0 0.0
      %1094 = vmatpush1.msra.mxu0 %v818
      %1095 = vmatprep.subr.mxu0 0.0
      %1096 = vmatpush1.msra.mxu0 %v819
      %1097 = vmatprep.subr.mxu0 0.0
      %1098 = vmatpush1.msra.mxu0 %v820
      %1099 = vmatprep.subr.mxu0 0.0
      %1100 = vmatpush1.msra.mxu0 %v821
      %1101 = vmatprep.subr.mxu0 0.0
      %1102 = vmatpush1.msra.mxu0 %v822
      %1103 = vmatprep.subr.mxu0 0.0
      %1104 = vmatpush1.msra.mxu0 %v823
      %1105 = vmatprep.subr.mxu0 0.0
      %1106 = vmatpush1.msra.mxu0 %v824
      %1107 = vmatprep.subr.mxu0 0.0
      %1108 = vmatpush1.msra.mxu0 %v825
      %1109 = vmatprep.subr.mxu0 0.0
      %1110 = vmatpush1.msra.mxu0 %v826
      %1111 = vmatprep.subr.mxu0 0.0
      %1112 = vmatpush1.msra.mxu0 %v827
      %1113 = vmatprep.subr.mxu0 0.0
      %1114 = vmatpush1.msra.mxu0 %v828
      %1115 = vmatprep.subr.mxu0 0.0
      %1116 = vmatpush1.msra.mxu0 %v829
      %1117 = vmatprep.subr.mxu0 0.0
      %1118 = vmatpush1.msra.mxu0 %v830
      %1119 = vmatprep.subr.mxu0 0.0
      %1120 = vmatpush1.msra.mxu0 %v831
      %1121 = vmatprep.subr.mxu0 0.0
      %1122 = vmatpush1.msra.mxu0 %v832
      %1123 = vmatprep.subr.mxu0 0.0
      %1124 = vmatpush1.msra.mxu0 %v833
      %1125 = vmatprep.subr.mxu0 0.0
      %1126 = vmatpush1.msra.mxu0 %v834
      %1127 = vmatprep.subr.mxu0 0.0
      %1128 = vmatpush1.msra.mxu0 %v835
      %1129 = vmatprep.subr.mxu0 0.0
      %1130 = vmatpush1.msra.mxu0 %v836
      %1131 = vmatprep.subr.mxu0 0.0
      %1132 = vmatpush1.msra.mxu0 %v837
      %1133 = vmatprep.subr.mxu0 0.0
      %1134 = vmatpush1.msra.mxu0 %v838
      %1135 = vmatprep.mubr.f32.mxu0 %v648
      %1136 = vmatmul.mubr.f32.gmra.mrb[0].mxu0 %v616
      %v1137 = vpop.f32.mrb[0].mxu0
      %v1138 = vadd.f32 %v993, %v1137
      %v1139 = vpop.f32.mrb[0].mxu0
      %1140 = vmatprep.mubr.f32.mxu0 %v650
      %1141 = vmatmul.mubr.f32.gmra.mrb[0].mxu0 %v618
      %v1142 = vpop.f32.mrb[0].mxu0
      %v1143 = vadd.f32 %v998, %v1142
      %v1144 = vpop.f32.mrb[0].mxu0
      %1145 = vmatprep.mubr.f32.mxu0 %v652
      %1146 = vmatmul.mubr.f32.gmra.mrb[0].mxu0 %v620
      %v1147 = vpop.f32.mrb[0].mxu0
      %v1148 = vadd.f32 %v1003, %v1147
      %v1149 = vpop.f32.mrb[0].mxu0
      %1150 = vmatprep.mubr.f32.mxu0 %v654
      %1151 = vmatmul.mubr.f32.gmra.mrb[0].mxu0 %v622
      %v1152 = vpop.f32.mrb[0].mxu0
      %v1153 = vadd.f32 %v1008, %v1152
      %v1154 = vpop.f32.mrb[0].mxu0
      %1155 = vmatprep.mubr.f32.mxu0 %v656
      %1156 = vmatmul.mubr.f32.gmra.mrb[0].mxu0 %v624
      %v1157 = vpop.f32.mrb[0].mxu0
      %v1158 = vadd.f32 %v1013, %v1157
      %v1159 = vpop.f32.mrb[0].mxu0
      %1160 = vmatprep.mubr.f32.mxu0 %v658
      %1161 = vmatmul.mubr.f32.gmra.mrb[0].mxu0 %v626
      %v1162 = vpop.f32.mrb[0].mxu0
      %v1163 = vadd.f32 %v1018, %v1162
      %v1164 = vpop.f32.mrb[0].mxu0
      %1165 = vmatprep.mubr.f32.mxu0 %v660
      %1166 = vmatmul.mubr.f32.gmra.mrb[0].mxu0 %v628
      %v1167 = vpop.f32.mrb[0].mxu0
      %v1168 = vadd.f32 %v1023, %v1167
      %v1169 = vpop.f32.mrb[0].mxu0
      %1170 = vmatprep.mubr.f32.mxu0 %v662
      %1171 = vmatmul.mubr.f32.gmra.mrb[0].mxu0 %v630
      %v1172 = vpop.f32.mrb[0].mxu0
      %v1173 = vadd.f32 %v1028, %v1172
      %v1174 = vpop.f32.mrb[0].mxu0
      %1175 = vmatprep.mubr.f32.mxu0 %v664
      %1176 = vmatmul.mubr.f32.gmra.mrb[0].mxu0 %v632
      %v1177 = vpop.f32.mrb[0].mxu0
      %v1178 = vadd.f32 %v1033, %v1177
      %v1179 = vpop.f32.mrb[0].mxu0
      %1180 = vmatprep.mubr.f32.mxu0 %v666
      %1181 = vmatmul.mubr.f32.gmra.mrb[0].mxu0 %v634
      %v1182 = vpop.f32.mrb[0].mxu0
      %v1183 = vadd.f32 %v1038, %v1182
      %v1184 = vpop.f32.mrb[0].mxu0
      %1185 = vmatprep.mubr.f32.mxu0 %v668
      %1186 = vmatmul.mubr.f32.gmra.mrb[0].mxu0 %v636
      %v1187 = vpop.f32.mrb[0].mxu0
      %v1188 = vadd.f32 %v1043, %v1187
      %v1189 = vpop.f32.mrb[0].mxu0
      %1190 = vmatprep.mubr.f32.mxu0 %v670
      %1191 = vmatmul.mubr.f32.gmra.mrb[0].mxu0 %v638
      %v1192 = vpop.f32.mrb[0].mxu0
      %v1193 = vadd.f32 %v1048, %v1192
      %v1194 = vpop.f32.mrb[0].mxu0
      %1195 = vmatprep.mubr.f32.mxu0 %v672
      %1196 = vmatmul.mubr.f32.gmra.mrb[0].mxu0 %v640
      %v1197 = vpop.f32.mrb[0].mxu0
      %v1198 = vadd.f32 %v1053, %v1197
      %v1199 = vpop.f32.mrb[0].mxu0
      %1200 = vmatprep.mubr.f32.mxu0 %v674
      %1201 = vmatmul.mubr.f32.gmra.mrb[0].mxu0 %v642
      %v1202 = vpop.f32.mrb[0].mxu0
      %v1203 = vadd.f32 %v1058, %v1202
      %v1204 = vpop.f32.mrb[0].mxu0
      %1205 = vmatprep.mubr.f32.mxu0 %v676
      %1206 = vmatmul.mubr.f32.gmra.mrb[0].mxu0 %v644
      %v1207 = vpop.f32.mrb[0].mxu0
      %v1208 = vadd.f32 %v1063, %v1207
      %v1209 = vpop.f32.mrb[0].mxu0
      %1210 = vmatprep.mubr.f32.mxu0 %v678
      %1211 = vmatmul.mubr.f32.gmra.mrb[0].mxu0 %v646
      %v1212 = vpop.f32.mrb[0].mxu0
      %v1213 = vadd.f32 %v1068, %v1212
      %v1214 = vpop.f32.mrb[0].mxu0
      %1215 = vdwg.mxu0
      %1216 = vmatprep.subr.mxu0 0.0
      %1217 = vmatpush1.msra.mxu0 %v839
      %1218 = vmatprep.subr.mxu0 0.0
      %1219 = vmatpush1.msra.mxu0 %v840
      %1220 = vmatprep.subr.mxu0 0.0
      %1221 = vmatpush1.msra.mxu0 %v841
      %1222 = vmatprep.subr.mxu0 0.0
      %1223 = vmatpush1.msra.mxu0 %v842
      %1224 = vmatprep.subr.mxu0 0.0
      %1225 = vmatpush1.msra.mxu0 %v843
      %1226 = vmatprep.subr.mxu0 0.0
      %1227 = vmatpush1.msra.mxu0 %v844
      %1228 = vmatprep.subr.mxu0 0.0
      %1229 = vmatpush1.msra.mxu0 %v845
      %1230 = vmatprep.subr.mxu0 0.0
      %1231 = vmatpush1.msra.mxu0 %v846
      %1232 = vmatprep.subr.mxu0 0.0
      %1233 = vmatpush1.msra.mxu0 %v847
      %1234 = vmatprep.subr.mxu0 0.0
      %1235 = vmatpush1.msra.mxu0 %v848
      %1236 = vmatprep.subr.mxu0 0.0
      %1237 = vmatpush1.msra.mxu0 %v849
      %1238 = vmatprep.subr.mxu0 0.0
      %1239 = vmatpush1.msra.mxu0 %v850
      %1240 = vmatprep.subr.mxu0 0.0
      %1241 = vmatpush1.msra.mxu0 %v851
      %1242 = vmatprep.subr.mxu0 0.0
      %1243 = vmatpush1.msra.mxu0 %v852
      %1244 = vmatprep.subr.mxu0 0.0
      %1245 = vmatpush1.msra.mxu0 %v853
      %1246 = vmatprep.subr.mxu0 0.0
      %1247 = vmatpush1.msra.mxu0 %v854
      %1248 = vmatprep.subr.mxu0 0.0
      %1249 = vmatpush1.msra.mxu0 %v855
      %1250 = vmatprep.subr.mxu0 0.0
      %1251 = vmatpush1.msra.mxu0 %v856
      %1252 = vmatprep.subr.mxu0 0.0
      %1253 = vmatpush1.msra.mxu0 %v857
      %1254 = vmatprep.subr.mxu0 0.0
      %1255 = vmatpush1.msra.mxu0 %v858
      %1256 = vmatprep.subr.mxu0 0.0
      %1257 = vmatpush1.msra.mxu0 %v859
      %1258 = vmatprep.subr.mxu0 0.0
      %1259 = vmatpush1.msra.mxu0 %v860
      %1260 = vmatprep.subr.mxu0 0.0
      %1261 = vmatpush1.msra.mxu0 %v861
      %1262 = vmatprep.subr.mxu0 0.0
      %1263 = vmatpush1.msra.mxu0 %v862
      %1264 = vmatprep.subr.mxu0 0.0
      %1265 = vmatpush1.msra.mxu0 %v863
      %1266 = vmatprep.subr.mxu0 0.0
      %1267 = vmatpush1.msra.mxu0 %v864
      %1268 = vmatprep.subr.mxu0 0.0
      %1269 = vmatpush1.msra.mxu0 %v865
      %1270 = vmatprep.subr.mxu0 0.0
      %1271 = vmatpush1.msra.mxu0 %v866
      %1272 = vmatprep.subr.mxu0 0.0
      %1273 = vmatpush1.msra.mxu0 %v867
      %1274 = vmatprep.subr.mxu0 0.0
      %1275 = vmatpush1.msra.mxu0 %v868
      %1276 = vmatprep.subr.mxu0 0.0
      %1277 = vmatpush1.msra.mxu0 %v869
      %1278 = vmatprep.subr.mxu0 0.0
      %1279 = vmatpush1.msra.mxu0 %v870
      %1280 = vmatprep.mubr.f32.mxu0 %v680
      %1281 = vmatmul.mubr.f32.gmra.mrb[0].mxu0 %v228
      %v1282 = vpop.f32.mrb[0].mxu0
      %v1283 = vadd.f32 %v1138, %v1282
      %v1284 = vpop.f32.mrb[0].mxu0
      %1285 = vmatprep.mubr.f32.mxu0 %v682
      %1286 = vmatmul.mubr.f32.gmra.mrb[0].mxu0 %v229
      %v1287 = vpop.f32.mrb[0].mxu0
      %v1288 = vadd.f32 %v1143, %v1287
      %v1289 = vpop.f32.mrb[0].mxu0
      %1290 = vmatprep.mubr.f32.mxu0 %v684
      %1291 = vmatmul.mubr.f32.gmra.mrb[0].mxu0 %v230
      %v1292 = vpop.f32.mrb[0].mxu0
      %v1293 = vadd.f32 %v1148, %v1292
      %v1294 = vpop.f32.mrb[0].mxu0
      %1295 = vmatprep.mubr.f32.mxu0 %v686
      %1296 = vmatmul.mubr.f32.gmra.mrb[0].mxu0 %v231
      %v1297 = vpop.f32.mrb[0].mxu0
      %v1298 = vadd.f32 %v1153, %v1297
      %v1299 = vpop.f32.mrb[0].mxu0
      %1300 = vmatprep.mubr.f32.mxu0 %v688
      %1301 = vmatmul.mubr.f32.gmra.mrb[0].mxu0 %v232
      %v1302 = vpop.f32.mrb[0].mxu0
      %v1303 = vadd.f32 %v1158, %v1302
      %v1304 = vpop.f32.mrb[0].mxu0
      %1305 = vmatprep.mubr.f32.mxu0 %v690
      %1306 = vmatmul.mubr.f32.gmra.mrb[0].mxu0 %v233
      %v1307 = vpop.f32.mrb[0].mxu0
      %v1308 = vadd.f32 %v1163, %v1307
      %v1309 = vpop.f32.mrb[0].mxu0
      %1310 = vmatprep.mubr.f32.mxu0 %v692
      %1311 = vmatmul.mubr.f32.gmra.mrb[0].mxu0 %v234
      %v1312 = vpop.f32.mrb[0].mxu0
      %v1313 = vadd.f32 %v1168, %v1312
      %v1314 = vpop.f32.mrb[0].mxu0
      %1315 = vmatprep.mubr.f32.mxu0 %v694
      %1316 = vmatmul.mubr.f32.gmra.mrb[0].mxu0 %v235
      %v1317 = vpop.f32.mrb[0].mxu0
      %v1318 = vadd.f32 %v1173, %v1317
      %v1319 = vpop.f32.mrb[0].mxu0
      %1320 = vmatprep.mubr.f32.mxu0 %v696
      %1321 = vmatmul.mubr.f32.gmra.mrb[0].mxu0 %v236
      %v1322 = vpop.f32.mrb[0].mxu0
      %v1323 = vadd.f32 %v1178, %v1322
      %v1324 = vpop.f32.mrb[0].mxu0
      %1325 = vmatprep.mubr.f32.mxu0 %v698
      %1326 = vmatmul.mubr.f32.gmra.mrb[0].mxu0 %v237
      %v1327 = vpop.f32.mrb[0].mxu0
      %v1328 = vadd.f32 %v1183, %v1327
      %v1329 = vpop.f32.mrb[0].mxu0
      %1330 = vmatprep.mubr.f32.mxu0 %v700
      %1331 = vmatmul.mubr.f32.gmra.mrb[0].mxu0 %v238
      %v1332 = vpop.f32.mrb[0].mxu0
      %v1333 = vadd.f32 %v1188, %v1332
      %v1334 = vpop.f32.mrb[0].mxu0
      %1335 = vmatprep.mubr.f32.mxu0 %v702
      %1336 = vmatmul.mubr.f32.gmra.mrb[0].mxu0 %v239
      %v1337 = vpop.f32.mrb[0].mxu0
      %v1338 = vadd.f32 %v1193, %v1337
      %v1339 = vpop.f32.mrb[0].mxu0
      %1340 = vmatprep.mubr.f32.mxu0 %v704
      %1341 = vmatmul.mubr.f32.gmra.mrb[0].mxu0 %v240
      %v1342 = vpop.f32.mrb[0].mxu0
      %v1343 = vadd.f32 %v1198, %v1342
      %v1344 = vpop.f32.mrb[0].mxu0
      %1345 = vmatprep.mubr.f32.mxu0 %v706
      %1346 = vmatmul.mubr.f32.gmra.mrb[0].mxu0 %v241
      %v1347 = vpop.f32.mrb[0].mxu0
      %v1348 = vadd.f32 %v1203, %v1347
      %v1349 = vpop.f32.mrb[0].mxu0
      %1350 = vmatprep.mubr.f32.mxu0 %v708
      %1351 = vmatmul.mubr.f32.gmra.mrb[0].mxu0 %v242
      %v1352 = vpop.f32.mrb[0].mxu0
      %v1353 = vadd.f32 %v1208, %v1352
      %v1354 = vpop.f32.mrb[0].mxu0
      %1355 = vmatprep.mubr.f32.mxu0 %v710
      %1356 = vmatmul.mubr.f32.gmra.mrb[0].mxu0 %v243
      %v1357 = vpop.f32.mrb[0].mxu0
      %v1358 = vadd.f32 %v1213, %v1357
      %v1359 = vpop.f32.mrb[0].mxu0
      %1360 = vdwg.mxu0
      %1361 = vmatprep.subr.mxu0 0.0
      %1362 = vmatpush1.msra.mxu0 %v871
      %1363 = vmatprep.subr.mxu0 0.0
      %1364 = vmatpush1.msra.mxu0 %v872
      %1365 = vmatprep.subr.mxu0 0.0
      %1366 = vmatpush1.msra.mxu0 %v873
      %1367 = vmatprep.subr.mxu0 0.0
      %1368 = vmatpush1.msra.mxu0 %v874
      %1369 = vmatprep.subr.mxu0 0.0
      %1370 = vmatpush1.msra.mxu0 %v875
      %1371 = vmatprep.subr.mxu0 0.0
      %1372 = vmatpush1.msra.mxu0 %v876
      %1373 = vmatprep.subr.mxu0 0.0
      %1374 = vmatpush1.msra.mxu0 %v877
      %1375 = vmatprep.subr.mxu0 0.0
      %1376 = vmatpush1.msra.mxu0 %v878
      %1377 = vmatprep.subr.mxu0 0.0
      %1378 = vmatpush1.msra.mxu0 %v879
      %1379 = vmatprep.subr.mxu0 0.0
      %1380 = vmatpush1.msra.mxu0 %v880
      %1381 = vmatprep.subr.mxu0 0.0
      %1382 = vmatpush1.msra.mxu0 %v881
      %1383 = vmatprep.subr.mxu0 0.0
      %1384 = vmatpush1.msra.mxu0 %v882
      %1385 = vmatprep.subr.mxu0 0.0
      %1386 = vmatpush1.msra.mxu0 %v883
      %1387 = vmatprep.subr.mxu0 0.0
      %1388 = vmatpush1.msra.mxu0 %v884
      %1389 = vmatprep.subr.mxu0 0.0
      %1390 = vmatpush1.msra.mxu0 %v885
      %1391 = vmatprep.subr.mxu0 0.0
      %1392 = vmatpush1.msra.mxu0 %v886
      %1393 = vmatprep.subr.mxu0 0.0
      %1394 = vmatpush1.msra.mxu0 %v887
      %1395 = vmatprep.subr.mxu0 0.0
      %1396 = vmatpush1.msra.mxu0 %v888
      %1397 = vmatprep.subr.mxu0 0.0
      %1398 = vmatpush1.msra.mxu0 %v889
      %1399 = vmatprep.subr.mxu0 0.0
      %1400 = vmatpush1.msra.mxu0 %v890
      %1401 = vmatprep.subr.mxu0 0.0
      %1402 = vmatpush1.msra.mxu0 %v891
      %1403 = vmatprep.subr.mxu0 0.0
      %1404 = vmatpush1.msra.mxu0 %v892
      %1405 = vmatprep.subr.mxu0 0.0
      %1406 = vmatpush1.msra.mxu0 %v893
      %1407 = vmatprep.subr.mxu0 0.0
      %1408 = vmatpush1.msra.mxu0 %v894
      %1409 = vmatprep.subr.mxu0 0.0
      %1410 = vmatpush1.msra.mxu0 %v895
      %1411 = vmatprep.subr.mxu0 0.0
      %1412 = vmatpush1.msra.mxu0 %v896
      %1413 = vmatprep.subr.mxu0 0.0
      %1414 = vmatpush1.msra.mxu0 %v897
      %1415 = vmatprep.subr.mxu0 0.0
      %1416 = vmatpush1.msra.mxu0 %v898
      %1417 = vmatprep.subr.mxu0 0.0
      %1418 = vmatpush1.msra.mxu0 %v899
      %1419 = vmatprep.subr.mxu0 0.0
      %1420 = vmatpush1.msra.mxu0 %v900
      %1421 = vmatprep.subr.mxu0 0.0
      %1422 = vmatpush1.msra.mxu0 %v901
      %1423 = vmatprep.subr.mxu0 0.0
      %1424 = vmatpush1.msra.mxu0 %v902
      %1425 = vmatprep.mubr.f32.mxu0 %v567
      %1426 = vmatmul.mubr.f32.gmra.mrb[0].mxu0 %v712
      %v1427 = vpop.f32.mrb[0].mxu0
      %v1428 = vadd.f32 %v1283, %v1427
      %v1429 = vpop.f32.mrb[0].mxu0
      %1430 = vmatprep.mubr.f32.mxu0 %v568
      %1431 = vmatmul.mubr.f32.gmra.mrb[0].mxu0 %v714
      %v1432 = vpop.f32.mrb[0].mxu0
      %v1433 = vadd.f32 %v1288, %v1432
      %v1434 = vpop.f32.mrb[0].mxu0
      %1435 = vmatprep.mubr.f32.mxu0 %v569
      %1436 = vmatmul.mubr.f32.gmra.mrb[0].mxu0 %v716
      %v1437 = vpop.f32.mrb[0].mxu0
      %v1438 = vadd.f32 %v1293, %v1437
      %v1439 = vpop.f32.mrb[0].mxu0
      %1440 = vmatprep.mubr.f32.mxu0 %v570
      %1441 = vmatmul.mubr.f32.gmra.mrb[0].mxu0 %v718
      %v1442 = vpop.f32.mrb[0].mxu0
      %v1443 = vadd.f32 %v1298, %v1442
      %v1444 = vpop.f32.mrb[0].mxu0
      %1445 = vmatprep.mubr.f32.mxu0 %v571
      %1446 = vmatmul.mubr.f32.gmra.mrb[0].mxu0 %v720
      %v1447 = vpop.f32.mrb[0].mxu0
      %v1448 = vadd.f32 %v1303, %v1447
      %v1449 = vpop.f32.mrb[0].mxu0
      %1450 = vmatprep.mubr.f32.mxu0 %v572
      %1451 = vmatmul.mubr.f32.gmra.mrb[0].mxu0 %v722
      %v1452 = vpop.f32.mrb[0].mxu0
      %v1453 = vadd.f32 %v1308, %v1452
      %v1454 = vpop.f32.mrb[0].mxu0
      %1455 = vmatprep.mubr.f32.mxu0 %v573
      %1456 = vmatmul.mubr.f32.gmra.mrb[0].mxu0 %v724
      %v1457 = vpop.f32.mrb[0].mxu0
      %v1458 = vadd.f32 %v1313, %v1457
      %v1459 = vpop.f32.mrb[0].mxu0
      %1460 = vmatprep.mubr.f32.mxu0 %v574
      %1461 = vmatmul.mubr.f32.gmra.mrb[0].mxu0 %v726
      %v1462 = vpop.f32.mrb[0].mxu0
      %v1463 = vadd.f32 %v1318, %v1462
      %v1464 = vpop.f32.mrb[0].mxu0
      %1465 = vmatprep.mubr.f32.mxu0 %v575
      %1466 = vmatmul.mubr.f32.gmra.mrb[0].mxu0 %v728
      %v1467 = vpop.f32.mrb[0].mxu0
      %v1468 = vadd.f32 %v1323, %v1467
      %v1469 = vpop.f32.mrb[0].mxu0
      %1470 = vmatprep.mubr.f32.mxu0 %v576
      %1471 = vmatmul.mubr.f32.gmra.mrb[0].mxu0 %v730
      %v1472 = vpop.f32.mrb[0].mxu0
      %v1473 = vadd.f32 %v1328, %v1472
      %v1474 = vpop.f32.mrb[0].mxu0
      %1475 = vmatprep.mubr.f32.mxu0 %v577
      %1476 = vmatmul.mubr.f32.gmra.mrb[0].mxu0 %v732
      %v1477 = vpop.f32.mrb[0].mxu0
      %v1478 = vadd.f32 %v1333, %v1477
      %v1479 = vpop.f32.mrb[0].mxu0
      %1480 = vmatprep.mubr.f32.mxu0 %v578
      %1481 = vmatmul.mubr.f32.gmra.mrb[0].mxu0 %v734
      %v1482 = vpop.f32.mrb[0].mxu0
      %v1483 = vadd.f32 %v1338, %v1482
      %v1484 = vpop.f32.mrb[0].mxu0
      %1485 = vmatprep.mubr.f32.mxu0 %v579
      %1486 = vmatmul.mubr.f32.gmra.mrb[0].mxu0 %v736
      %v1487 = vpop.f32.mrb[0].mxu0
      %v1488 = vadd.f32 %v1343, %v1487
      %v1489 = vpop.f32.mrb[0].mxu0
      %1490 = vmatprep.mubr.f32.mxu0 %v580
      %1491 = vmatmul.mubr.f32.gmra.mrb[0].mxu0 %v738
      %v1492 = vpop.f32.mrb[0].mxu0
      %v1493 = vadd.f32 %v1348, %v1492
      %v1494 = vpop.f32.mrb[0].mxu0
      %1495 = vmatprep.mubr.f32.mxu0 %v581
      %1496 = vmatmul.mubr.f32.gmra.mrb[0].mxu0 %v740
      %v1497 = vpop.f32.mrb[0].mxu0
      %v1498 = vadd.f32 %v1353, %v1497
      %v1499 = vpop.f32.mrb[0].mxu0
      %1500 = vmatprep.mubr.f32.mxu0 %v582
      %1501 = vmatmul.mubr.f32.gmra.mrb[0].mxu0 %v742
      %v1502 = vpop.f32.mrb[0].mxu0
      %v1503 = vadd.f32 %v1358, %v1502
      %v1504 = vpop.f32.mrb[0].mxu0
      %1505 = vdwg.mxu0
      %1506 = vmatprep.subr.mxu0 0.0
      %1507 = vmatpush1.msra.mxu0 %v903
      %1508 = vmatprep.subr.mxu0 0.0
      %1509 = vmatpush1.msra.mxu0 %v904
      %1510 = vmatprep.subr.mxu0 0.0
      %1511 = vmatpush1.msra.mxu0 %v905
      %1512 = vmatprep.subr.mxu0 0.0
      %1513 = vmatpush1.msra.mxu0 %v906
      %1514 = vmatprep.subr.mxu0 0.0
      %1515 = vmatpush1.msra.mxu0 %v907
      %1516 = vmatprep.subr.mxu0 0.0
      %1517 = vmatpush1.msra.mxu0 %v908
      %1518 = vmatprep.subr.mxu0 0.0
      %1519 = vmatpush1.msra.mxu0 %v909
      %1520 = vmatprep.subr.mxu0 0.0
      %1521 = vmatpush1.msra.mxu0 %v910
      %1522 = vmatprep.subr.mxu0 0.0
      %1523 = vmatpush1.msra.mxu0 %v911
      %1524 = vmatprep.subr.mxu0 0.0
      %1525 = vmatpush1.msra.mxu0 %v912
      %1526 = vmatprep.subr.mxu0 0.0
      %1527 = vmatpush1.msra.mxu0 %v913
      %1528 = vmatprep.subr.mxu0 0.0
      %1529 = vmatpush1.msra.mxu0 %v914
      %1530 = vmatprep.subr.mxu0 0.0
      %1531 = vmatpush1.msra.mxu0 %v915
      %1532 = vmatprep.subr.mxu0 0.0
      %1533 = vmatpush1.msra.mxu0 %v916
      %1534 = vmatprep.subr.mxu0 0.0
      %1535 = vmatpush1.msra.mxu0 %v917
      %1536 = vmatprep.subr.mxu0 0.0
      %1537 = vmatpush1.msra.mxu0 %v918
      %1538 = vmatprep.subr.mxu0 0.0
      %1539 = vmatpush1.msra.mxu0 0.0
      %1540 = vmatprep.subr.mxu0 0.0
      %1541 = vmatpush1.msra.mxu0 0.0
      %1542 = vmatprep.subr.mxu0 0.0
      %1543 = vmatpush1.msra.mxu0 0.0
      %1544 = vmatprep.subr.mxu0 0.0
      %1545 = vmatpush1.msra.mxu0 0.0
      %1546 = vmatprep.subr.mxu0 0.0
      %1547 = vmatpush1.msra.mxu0 0.0
      %1548 = vmatprep.subr.mxu0 0.0
      %1549 = vmatpush1.msra.mxu0 0.0
      %1550 = vmatprep.subr.mxu0 0.0
      %1551 = vmatpush1.msra.mxu0 0.0
      %1552 = vmatprep.subr.mxu0 0.0
      %1553 = vmatpush1.msra.mxu0 0.0
      %1554 = vmatprep.subr.mxu0 0.0
      %1555 = vmatpush1.msra.mxu0 0.0
      %1556 = vmatprep.subr.mxu0 0.0
      %1557 = vmatpush1.msra.mxu0 0.0
      %1558 = vmatprep.subr.mxu0 0.0
      %1559 = vmatpush1.msra.mxu0 0.0
      %1560 = vmatprep.subr.mxu0 0.0
      %1561 = vmatpush1.msra.mxu0 0.0
      %1562 = vmatprep.subr.mxu0 0.0
      %1563 = vmatpush1.msra.mxu0 0.0
      %1564 = vmatprep.subr.mxu0 0.0
      %1565 = vmatpush1.msra.mxu0 0.0
      %1566 = vmatprep.subr.mxu0 0.0
      %1567 = vmatpush1.msra.mxu0 0.0
      %1568 = vmatprep.subr.mxu0 0.0
      %1569 = vmatpush1.msra.mxu0 0.0
      %1570 = vmatprep.mubr.f32.mxu0 0.0
      %1571 = vmatmul.mubr.f32.gmra.mrb[0].mxu0 %v744
      %v1572 = vpop.f32.mrb[0].mxu0
      %v1573 = vadd.f32 %v1428, %v1572
      %v1574 = vpop.f32.mrb[0].mxu0
      %1575 = vmatprep.mubr.f32.mxu0 0.0
      %1576 = vmatmul.mubr.f32.gmra.mrb[0].mxu0 %v746
      %v1577 = vpop.f32.mrb[0].mxu0
      %v1578 = vadd.f32 %v1433, %v1577
      %v1579 = vpop.f32.mrb[0].mxu0
      %1580 = vmatprep.mubr.f32.mxu0 0.0
      %1581 = vmatmul.mubr.f32.gmra.mrb[0].mxu0 %v748
      %v1582 = vpop.f32.mrb[0].mxu0
      %v1583 = vadd.f32 %v1438, %v1582
      %v1584 = vpop.f32.mrb[0].mxu0
      %1585 = vmatprep.mubr.f32.mxu0 0.0
      %1586 = vmatmul.mubr.f32.gmra.mrb[0].mxu0 %v750
      %v1587 = vpop.f32.mrb[0].mxu0
      %v1588 = vadd.f32 %v1443, %v1587
      %v1589 = vpop.f32.mrb[0].mxu0
      %1590 = vmatprep.mubr.f32.mxu0 0.0
      %1591 = vmatmul.mubr.f32.gmra.mrb[0].mxu0 %v752
      %v1592 = vpop.f32.mrb[0].mxu0
      %v1593 = vadd.f32 %v1448, %v1592
      %v1594 = vpop.f32.mrb[0].mxu0
      %1595 = vmatprep.mubr.f32.mxu0 0.0
      %1596 = vmatmul.mubr.f32.gmra.mrb[0].mxu0 %v754
      %v1597 = vpop.f32.mrb[0].mxu0
      %v1598 = vadd.f32 %v1453, %v1597
      %v1599 = vpop.f32.mrb[0].mxu0
      %1600 = vmatprep.mubr.f32.mxu0 0.0
      %1601 = vmatmul.mubr.f32.gmra.mrb[0].mxu0 %v756
      %v1602 = vpop.f32.mrb[0].mxu0
      %v1603 = vadd.f32 %v1458, %v1602
      %v1604 = vpop.f32.mrb[0].mxu0
      %1605 = vmatprep.mubr.f32.mxu0 0.0
      %1606 = vmatmul.mubr.f32.gmra.mrb[0].mxu0 %v758
      %v1607 = vpop.f32.mrb[0].mxu0
      %v1608 = vadd.f32 %v1463, %v1607
      %v1609 = vpop.f32.mrb[0].mxu0
      %1610 = vmatprep.mubr.f32.mxu0 0.0
      %1611 = vmatmul.mubr.f32.gmra.mrb[0].mxu0 %v760
      %v1612 = vpop.f32.mrb[0].mxu0
      %v1613 = vadd.f32 %v1468, %v1612
      %v1614 = vpop.f32.mrb[0].mxu0
      %1615 = vmatprep.mubr.f32.mxu0 0.0
      %1616 = vmatmul.mubr.f32.gmra.mrb[0].mxu0 %v762
      %v1617 = vpop.f32.mrb[0].mxu0
      %v1618 = vadd.f32 %v1473, %v1617
      %v1619 = vpop.f32.mrb[0].mxu0
      %1620 = vmatprep.mubr.f32.mxu0 0.0
      %1621 = vmatmul.mubr.f32.gmra.mrb[0].mxu0 %v764
      %v1622 = vpop.f32.mrb[0].mxu0
      %v1623 = vadd.f32 %v1478, %v1622
      %v1624 = vpop.f32.mrb[0].mxu0
      %1625 = vmatprep.mubr.f32.mxu0 0.0
      %1626 = vmatmul.mubr.f32.gmra.mrb[0].mxu0 %v766
      %v1627 = vpop.f32.mrb[0].mxu0
      %v1628 = vadd.f32 %v1483, %v1627
      %v1629 = vpop.f32.mrb[0].mxu0
      %1630 = vmatprep.mubr.f32.mxu0 0.0
      %1631 = vmatmul.mubr.f32.gmra.mrb[0].mxu0 %v768
      %v1632 = vpop.f32.mrb[0].mxu0
      %v1633 = vadd.f32 %v1488, %v1632
      %v1634 = vpop.f32.mrb[0].mxu0
      %1635 = vmatprep.mubr.f32.mxu0 0.0
      %1636 = vmatmul.mubr.f32.gmra.mrb[0].mxu0 %v770
      %v1637 = vpop.f32.mrb[0].mxu0
      %v1638 = vadd.f32 %v1493, %v1637
      %v1639 = vpop.f32.mrb[0].mxu0
      %1640 = vmatprep.mubr.f32.mxu0 0.0
      %1641 = vmatmul.mubr.f32.gmra.mrb[0].mxu0 %v772
      %v1642 = vpop.f32.mrb[0].mxu0
      %v1643 = vadd.f32 %v1498, %v1642
      %v1644 = vpop.f32.mrb[0].mxu0
      %1645 = vmatprep.mubr.f32.mxu0 0.0
      %1646 = vmatmul.mubr.f32.gmra.mrb[0].mxu0 %v774
      %v1647 = vpop.f32.mrb[0].mxu0
      %v1648 = vadd.f32 %v1503, %v1647
      %v1649 = vpop.f32.mrb[0].mxu0
      %1650 = vdwg.mxu0
      %v1651 = vmax.f32 %v1573, 0.0
      %v1652 = vmax.f32 %v1578, 0.0
      %v1653 = vmax.f32 %v1583, 0.0
      %v1654 = vmax.f32 %v1588, 0.0
      %v1655 = vmax.f32 %v1593, 0.0
      %v1656 = vmax.f32 %v1598, 0.0
      %v1657 = vmax.f32 %v1603, 0.0
      %v1658 = vmax.f32 %v1608, 0.0
      %v1659 = vmax.f32 %v1613, 0.0
      %v1660 = vmax.f32 %v1618, 0.0
      %v1661 = vmax.f32 %v1623, 0.0
      %v1662 = vmax.f32 %v1628, 0.0
      %v1663 = vmax.f32 %v1633, 0.0
      %v1664 = vmax.f32 %v1638, 0.0
      %v1665 = vmax.f32 %v1643, 0.0
      %v1666 = vmax.f32 %v1648, 0.0
      %v1667 = vrot.slane %v1651, 7
      %v1668 = vrot.slane %v1652, 7
      %v1669 = vrot.slane %v1653, 7
      %v1670 = vrot.slane %v1654, 7
      %v1671 = vrot.slane %v1655, 7
      %v1672 = vrot.slane %v1656, 7
      %v1673 = vrot.slane %v1657, 7
      %v1674 = vrot.slane %v1658, 7
      %v1675 = vrot.slane %v1659, 7
      %v1676 = vrot.slane %v1660, 7
      %v1677 = vrot.slane %v1661, 7
      %v1678 = vrot.slane %v1662, 7
      %v1679 = vrot.slane %v1663, 7
      %v1680 = vrot.slane %v1664, 7
      %v1681 = vrot.slane %v1665, 7
      %v1682 = vrot.slane %v1666, 7
      %v1683 = vsel %vm501, %v1681, %v1682
      %v1684 = vsel %vm501, %v1680, %v1681
      %v1685 = vsel %vm501, %v1679, %v1680
      %v1686 = vsel %vm501, %v1678, %v1679
      %v1687 = vsel %vm501, %v1677, %v1678
      %v1688 = vsel %vm501, %v1676, %v1677
      %v1689 = vsel %vm501, %v1675, %v1676
      %v1690 = vsel %vm501, %v1674, %v1675
      %v1691 = vsel %vm501, %v1673, %v1674
      %v1692 = vsel %vm501, %v1672, %v1673
      %v1693 = vsel %vm501, %v1671, %v1672
      %v1694 = vsel %vm501, %v1670, %v1671
      %v1695 = vsel %vm501, %v1669, %v1670
      %v1696 = vsel %vm501, %v1668, %v1669
      %v1697 = vsel %vm501, %v1667, %v1668
      %v1698 = vsel %vm501, %v1682, %v1667
      %v1699 = vsel %vm453, %v1698, 0.0
      %v1700 = vsel %vm454, %v1697, 0.0
      %v1701 = vsel %vm455, %v1696, 0.0
      %v1702 = vsel %vm456, %v1695, 0.0
      %v1703 = vsel %vm457, %v1694, 0.0
      %v1704 = vsel %vm458, %v1693, 0.0
      %v1705 = vsel %vm459, %v1692, 0.0
      %v1706 = vsel %vm460, %v1691, 0.0
      %v1707 = vsel %vm461, %v1690, 0.0
      %v1708 = vsel %vm462, %v1689, 0.0
      %v1709 = vsel %vm463, %v1688, 0.0
      %v1710 = vsel %vm464, %v1687, 0.0
      %v1711 = vsel %vm465, %v1686, 0.0
      %v1712 = vsel %vm466, %v1685, 0.0
      %v1713 = vsel %vm467, %v1684, 0.0
      %v1714 = vsel %vm468, %v1683, 0.0
      %v1715 = vrot.slane %v1651, 1
      %v1716 = vrot.slane %v1652, 1
      %v1717 = vrot.slane %v1653, 1
      %v1718 = vrot.slane %v1654, 1
      %v1719 = vrot.slane %v1655, 1
      %v1720 = vrot.slane %v1656, 1
      %v1721 = vrot.slane %v1657, 1
      %v1722 = vrot.slane %v1658, 1
      %v1723 = vrot.slane %v1659, 1
      %v1724 = vrot.slane %v1660, 1
      %v1725 = vrot.slane %v1661, 1
      %v1726 = vrot.slane %v1662, 1
      %v1727 = vrot.slane %v1663, 1
      %v1728 = vrot.slane %v1664, 1
      %v1729 = vrot.slane %v1665, 1
      %v1730 = vrot.slane %v1666, 1
      %v1731 = vsel %vm550, %v1729, %v1730
      %v1732 = vsel %vm550, %v1728, %v1729
      %v1733 = vsel %vm550, %v1727, %v1728
      %v1734 = vsel %vm550, %v1726, %v1727
      %v1735 = vsel %vm550, %v1725, %v1726
      %v1736 = vsel %vm550, %v1724, %v1725
      %v1737 = vsel %vm550, %v1723, %v1724
      %v1738 = vsel %vm550, %v1722, %v1723
      %v1739 = vsel %vm550, %v1721, %v1722
      %v1740 = vsel %vm550, %v1720, %v1721
      %v1741 = vsel %vm550, %v1719, %v1720
      %v1742 = vsel %vm550, %v1718, %v1719
      %v1743 = vsel %vm550, %v1717, %v1718
      %v1744 = vsel %vm550, %v1716, %v1717
      %v1745 = vsel %vm550, %v1715, %v1716
      %v1746 = vsel %vm550, %v1730, %v1715
      %v1747 = vsel %vm469, %v1745, 0.0
      %v1748 = vsel %vm470, %v1744, 0.0
      %v1749 = vsel %vm471, %v1743, 0.0
      %v1750 = vsel %vm472, %v1742, 0.0
      %v1751 = vsel %vm473, %v1741, 0.0
      %v1752 = vsel %vm474, %v1740, 0.0
      %v1753 = vsel %vm475, %v1739, 0.0
      %v1754 = vsel %vm476, %v1738, 0.0
      %v1755 = vsel %vm477, %v1737, 0.0
      %v1756 = vsel %vm478, %v1736, 0.0
      %v1757 = vsel %vm479, %v1735, 0.0
      %v1758 = vsel %vm480, %v1734, 0.0
      %v1759 = vsel %vm481, %v1733, 0.0
      %v1760 = vsel %vm482, %v1732, 0.0
      %v1761 = vsel %vm483, %v1731, 0.0
      %v1762 = vsel %vm484, %v1746, 0.0
      %1763 = vrot.lane.b32.xlu0 %v1699, 8
      %v1764 = vpop.permute.xlu0 %1763
      %1765 = vrot.lane.b32.xlu0 %v1700, 8
      %v1766 = vpop.permute.xlu0 %1765
      %1767 = vrot.lane.b32.xlu0 %v1701, 8
      %v1768 = vpop.permute.xlu0 %1767
      %1769 = vrot.lane.b32.xlu0 %v1702, 8
      %v1770 = vpop.permute.xlu0 %1769
      %1771 = vrot.lane.b32.xlu0 %v1703, 8
      %v1772 = vpop.permute.xlu0 %1771
      %1773 = vrot.lane.b32.xlu0 %v1704, 8
      %v1774 = vpop.permute.xlu0 %1773
      %1775 = vrot.lane.b32.xlu0 %v1705, 8
      %v1776 = vpop.permute.xlu0 %1775
      %1777 = vrot.lane.b32.xlu0 %v1706, 8
      %v1778 = vpop.permute.xlu0 %1777
      %1779 = vrot.lane.b32.xlu0 %v1707, 8
      %v1780 = vpop.permute.xlu0 %1779
      %1781 = vrot.lane.b32.xlu0 %v1708, 8
      %v1782 = vpop.permute.xlu0 %1781
      %1783 = vrot.lane.b32.xlu0 %v1709, 8
      %v1784 = vpop.permute.xlu0 %1783
      %1785 = vrot.lane.b32.xlu0 %v1710, 8
      %v1786 = vpop.permute.xlu0 %1785
      %1787 = vrot.lane.b32.xlu0 %v1711, 8
      %v1788 = vpop.permute.xlu0 %1787
      %1789 = vrot.lane.b32.xlu0 %v1712, 8
      %v1790 = vpop.permute.xlu0 %1789
      %1791 = vrot.lane.b32.xlu0 %v1713, 8
      %v1792 = vpop.permute.xlu0 %1791
      %1793 = vrot.lane.b32.xlu0 %v1714, 8
      %v1794 = vpop.permute.xlu0 %1793
      %1795 = vrot.lane.b32.xlu0 %v1699, 120
      %v1796 = vpop.permute.xlu0 %1795
      %1797 = vrot.lane.b32.xlu0 %v1700, 120
      %v1798 = vpop.permute.xlu0 %1797
      %1799 = vrot.lane.b32.xlu0 %v1701, 120
      %v1800 = vpop.permute.xlu0 %1799
      %1801 = vrot.lane.b32.xlu0 %v1702, 120
      %v1802 = vpop.permute.xlu0 %1801
      %1803 = vrot.lane.b32.xlu0 %v1703, 120
      %v1804 = vpop.permute.xlu0 %1803
      %1805 = vrot.lane.b32.xlu0 %v1704, 120
      %v1806 = vpop.permute.xlu0 %1805
      %1807 = vrot.lane.b32.xlu0 %v1705, 120
      %v1808 = vpop.permute.xlu0 %1807
      %1809 = vrot.lane.b32.xlu0 %v1706, 120
      %v1810 = vpop.permute.xlu0 %1809
      %1811 = vrot.lane.b32.xlu0 %v1707, 120
      %v1812 = vpop.permute.xlu0 %1811
      %1813 = vrot.lane.b32.xlu0 %v1708, 120
      %v1814 = vpop.permute.xlu0 %1813
      %1815 = vrot.lane.b32.xlu0 %v1709, 120
      %v1816 = vpop.permute.xlu0 %1815
      %1817 = vrot.lane.b32.xlu0 %v1710, 120
      %v1818 = vpop.permute.xlu0 %1817
      %1819 = vrot.lane.b32.xlu0 %v1711, 120
      %v1820 = vpop.permute.xlu0 %1819
      %1821 = vrot.lane.b32.xlu0 %v1712, 120
      %v1822 = vpop.permute.xlu0 %1821
      %1823 = vrot.lane.b32.xlu0 %v1713, 120
      %v1824 = vpop.permute.xlu0 %1823
      %1825 = vrot.lane.b32.xlu0 %v1714, 120
      %v1826 = vpop.permute.xlu0 %1825
      %1827 = vrot.lane.b32.xlu0 %v1651, 8
      %v1828 = vpop.permute.xlu0 %1827
      %1829 = vrot.lane.b32.xlu0 %v1652, 8
      %v1830 = vpop.permute.xlu0 %1829
      %1831 = vrot.lane.b32.xlu0 %v1653, 8
      %v1832 = vpop.permute.xlu0 %1831
      %1833 = vrot.lane.b32.xlu0 %v1654, 8
      %v1834 = vpop.permute.xlu0 %1833
      %1835 = vrot.lane.b32.xlu0 %v1655, 8
      %v1836 = vpop.permute.xlu0 %1835
      %1837 = vrot.lane.b32.xlu0 %v1656, 8
      %v1838 = vpop.permute.xlu0 %1837
      %1839 = vrot.lane.b32.xlu0 %v1657, 8
      %v1840 = vpop.permute.xlu0 %1839
      %1841 = vrot.lane.b32.xlu0 %v1658, 8
      %v1842 = vpop.permute.xlu0 %1841
      %1843 = vrot.lane.b32.xlu0 %v1659, 8
      %v1844 = vpop.permute.xlu0 %1843
      %1845 = vrot.lane.b32.xlu0 %v1660, 8
      %v1846 = vpop.permute.xlu0 %1845
      %1847 = vrot.lane.b32.xlu0 %v1661, 8
      %v1848 = vpop.permute.xlu0 %1847
      %1849 = vrot.lane.b32.xlu0 %v1662, 8
      %v1850 = vpop.permute.xlu0 %1849
      %1851 = vrot.lane.b32.xlu0 %v1663, 8
      %v1852 = vpop.permute.xlu0 %1851
      %1853 = vrot.lane.b32.xlu0 %v1664, 8
      %v1854 = vpop.permute.xlu0 %1853
      %1855 = vrot.lane.b32.xlu0 %v1665, 8
      %v1856 = vpop.permute.xlu0 %1855
      %1857 = vrot.lane.b32.xlu0 %v1666, 8
      %v1858 = vpop.permute.xlu0 %1857
      %1859 = vrot.lane.b32.xlu0 %v1651, 120
      %v1860 = vpop.permute.xlu0 %1859
      %1861 = vrot.lane.b32.xlu0 %v1652, 120
      %v1862 = vpop.permute.xlu0 %1861
      %1863 = vrot.lane.b32.xlu0 %v1653, 120
      %v1864 = vpop.permute.xlu0 %1863
      %1865 = vrot.lane.b32.xlu0 %v1654, 120
      %v1866 = vpop.permute.xlu0 %1865
      %1867 = vrot.lane.b32.xlu0 %v1655, 120
      %v1868 = vpop.permute.xlu0 %1867
      %1869 = vrot.lane.b32.xlu0 %v1656, 120
      %v1870 = vpop.permute.xlu0 %1869
      %1871 = vrot.lane.b32.xlu0 %v1657, 120
      %v1872 = vpop.permute.xlu0 %1871
      %1873 = vrot.lane.b32.xlu0 %v1658, 120
      %v1874 = vpop.permute.xlu0 %1873
      %1875 = vrot.lane.b32.xlu0 %v1659, 120
      %v1876 = vpop.permute.xlu0 %1875
      %1877 = vrot.lane.b32.xlu0 %v1660, 120
      %v1878 = vpop.permute.xlu0 %1877
      %1879 = vrot.lane.b32.xlu0 %v1661, 120
      %v1880 = vpop.permute.xlu0 %1879
      %1881 = vrot.lane.b32.xlu0 %v1662, 120
      %v1882 = vpop.permute.xlu0 %1881
      %1883 = vrot.lane.b32.xlu0 %v1663, 120
      %v1884 = vpop.permute.xlu0 %1883
      %1885 = vrot.lane.b32.xlu0 %v1664, 120
      %v1886 = vpop.permute.xlu0 %1885
      %1887 = vrot.lane.b32.xlu0 %v1665, 120
      %v1888 = vpop.permute.xlu0 %1887
      %1889 = vrot.lane.b32.xlu0 %v1666, 120
      %v1890 = vpop.permute.xlu0 %1889
      %1891 = vrot.lane.b32.xlu0 %v1747, 8
      %v1892 = vpop.permute.xlu0 %1891
      %1893 = vrot.lane.b32.xlu0 %v1748, 8
      %v1894 = vpop.permute.xlu0 %1893
      %1895 = vrot.lane.b32.xlu0 %v1749, 8
      %v1896 = vpop.permute.xlu0 %1895
      %1897 = vrot.lane.b32.xlu0 %v1750, 8
      %v1898 = vpop.permute.xlu0 %1897
      %1899 = vrot.lane.b32.xlu0 %v1751, 8
      %v1900 = vpop.permute.xlu0 %1899
      %1901 = vrot.lane.b32.xlu0 %v1752, 8
      %v1902 = vpop.permute.xlu0 %1901
      %1903 = vrot.lane.b32.xlu0 %v1753, 8
      %v1904 = vpop.permute.xlu0 %1903
      %1905 = vrot.lane.b32.xlu0 %v1754, 8
      %v1906 = vpop.permute.xlu0 %1905
      %1907 = vrot.lane.b32.xlu0 %v1755, 8
      %v1908 = vpop.permute.xlu0 %1907
      %1909 = vrot.lane.b32.xlu0 %v1756, 8
      %v1910 = vpop.permute.xlu0 %1909
      %1911 = vrot.lane.b32.xlu0 %v1757, 8
      %v1912 = vpop.permute.xlu0 %1911
      %1913 = vrot.lane.b32.xlu0 %v1758, 8
      %v1914 = vpop.permute.xlu0 %1913
      %1915 = vrot.lane.b32.xlu0 %v1759, 8
      %v1916 = vpop.permute.xlu0 %1915
      %1917 = vrot.lane.b32.xlu0 %v1760, 8
      %v1918 = vpop.permute.xlu0 %1917
      %1919 = vrot.lane.b32.xlu0 %v1761, 8
      %v1920 = vpop.permute.xlu0 %1919
      %1921 = vrot.lane.b32.xlu0 %v1762, 8
      %v1922 = vpop.permute.xlu0 %1921
      %1923 = vrot.lane.b32.xlu0 %v1747, 120
      %v1924 = vpop.permute.xlu0 %1923
      %1925 = vrot.lane.b32.xlu0 %v1748, 120
      %v1926 = vpop.permute.xlu0 %1925
      %1927 = vrot.lane.b32.xlu0 %v1749, 120
      %v1928 = vpop.permute.xlu0 %1927
      %1929 = vrot.lane.b32.xlu0 %v1750, 120
      %v1930 = vpop.permute.xlu0 %1929
      %1931 = vrot.lane.b32.xlu0 %v1751, 120
      %v1932 = vpop.permute.xlu0 %1931
      %1933 = vrot.lane.b32.xlu0 %v1752, 120
      %v1934 = vpop.permute.xlu0 %1933
      %1935 = vrot.lane.b32.xlu0 %v1753, 120
      %v1936 = vpop.permute.xlu0 %1935
      %1937 = vrot.lane.b32.xlu0 %v1754, 120
      %v1938 = vpop.permute.xlu0 %1937
      %1939 = vrot.lane.b32.xlu0 %v1755, 120
      %v1940 = vpop.permute.xlu0 %1939
      %1941 = vrot.lane.b32.xlu0 %v1756, 120
      %v1942 = vpop.permute.xlu0 %1941
      %1943 = vrot.lane.b32.xlu0 %v1757, 120
      %v1944 = vpop.permute.xlu0 %1943
      %1945 = vrot.lane.b32.xlu0 %v1758, 120
      %v1946 = vpop.permute.xlu0 %1945
      %1947 = vrot.lane.b32.xlu0 %v1759, 120
      %v1948 = vpop.permute.xlu0 %1947
      %1949 = vrot.lane.b32.xlu0 %v1760, 120
      %v1950 = vpop.permute.xlu0 %1949
      %1951 = vrot.lane.b32.xlu0 %v1761, 120
      %v1952 = vpop.permute.xlu0 %1951
      %1953 = vrot.lane.b32.xlu0 %v1762, 120
      %v1954 = vpop.permute.xlu0 %1953
      %v1955 = vld [vmem:[%s2] sm:$0xff]
      %v1956 = vld [vmem:[%s2 + $0x8] sm:$0xff]
      %v1957 = vld [vmem:[%s2 + $0x10] sm:$0xff]
      %v1958 = vld [vmem:[%s2 + $0x18] sm:$0xff]
      %v1959 = vld [vmem:[%s2 + $0x20] sm:$0xff]
      %v1960 = vld [vmem:[%s2 + $0x28] sm:$0xff]
      %v1961 = vld [vmem:[%s2 + $0x30] sm:$0xff]
      %v1962 = vld [vmem:[%s2 + $0x38] sm:$0xff]
      %v1963 = vld [vmem:[%s2 + $0x40] sm:$0xff]
      %v1964 = vld [vmem:[%s2 + $0x48] sm:$0xff]
      %v1965 = vld [vmem:[%s2 + $0x50] sm:$0xff]
      %v1966 = vld [vmem:[%s2 + $0x58] sm:$0xff]
      %v1967 = vld [vmem:[%s2 + $0x60] sm:$0xff]
      %v1968 = vld [vmem:[%s2 + $0x68] sm:$0xff]
      %v1969 = vld [vmem:[%s2 + $0x70] sm:$0xff]
      %v1970 = vld [vmem:[%s2 + $0x78] sm:$0xff]
      %v1971 = vld [vmem:[%s2 + $0x80] sm:$0xff]
      %v1972 = vld [vmem:[%s2 + $0x88] sm:$0xff]
      %v1973 = vld [vmem:[%s2 + $0x90] sm:$0xff]
      %v1974 = vld [vmem:[%s2 + $0x98] sm:$0xff]
      %v1975 = vld [vmem:[%s2 + $0xa0] sm:$0xff]
      %v1976 = vld [vmem:[%s2 + $0xa8] sm:$0xff]
      %v1977 = vld [vmem:[%s2 + $0xb0] sm:$0xff]
      %v1978 = vld [vmem:[%s2 + $0xb8] sm:$0xff]
      %v1979 = vld [vmem:[%s2 + $0xc0] sm:$0xff]
      %v1980 = vld [vmem:[%s2 + $0xc8] sm:$0xff]
      %v1981 = vld [vmem:[%s2 + $0xd0] sm:$0xff]
      %v1982 = vld [vmem:[%s2 + $0xd8] sm:$0xff]
      %v1983 = vld [vmem:[%s2 + $0xe0] sm:$0xff]
      %v1984 = vld [vmem:[%s2 + $0xe8] sm:$0xff]
      %v1985 = vld [vmem:[%s2 + $0xf0] sm:$0xff]
      %v1986 = vld [vmem:[%s2 + $0xf8] sm:$0xff]
      %v1987 = vld [vmem:[%s2 + $0x100] sm:$0xff]
      %v1988 = vld [vmem:[%s2 + $0x108] sm:$0xff]
      %v1989 = vld [vmem:[%s2 + $0x110] sm:$0xff]
      %v1990 = vld [vmem:[%s2 + $0x118] sm:$0xff]
      %v1991 = vld [vmem:[%s2 + $0x120] sm:$0xff]
      %v1992 = vld [vmem:[%s2 + $0x128] sm:$0xff]
      %v1993 = vld [vmem:[%s2 + $0x130] sm:$0xff]
      %v1994 = vld [vmem:[%s2 + $0x138] sm:$0xff]
      %v1995 = vld [vmem:[%s2 + $0x140] sm:$0xff]
      %v1996 = vld [vmem:[%s2 + $0x148] sm:$0xff]
      %v1997 = vld [vmem:[%s2 + $0x150] sm:$0xff]
      %v1998 = vld [vmem:[%s2 + $0x158] sm:$0xff]
      %v1999 = vld [vmem:[%s2 + $0x160] sm:$0xff]
      %v2000 = vld [vmem:[%s2 + $0x168] sm:$0xff]
      %v2001 = vld [vmem:[%s2 + $0x170] sm:$0xff]
      %v2002 = vld [vmem:[%s2 + $0x178] sm:$0xff]
      %v2003 = vld [vmem:[%s2 + $0x180] sm:$0xff]
      %v2004 = vld [vmem:[%s2 + $0x188] sm:$0xff]
      %v2005 = vld [vmem:[%s2 + $0x190] sm:$0xff]
      %v2006 = vld [vmem:[%s2 + $0x198] sm:$0xff]
      %v2007 = vld [vmem:[%s2 + $0x1a0] sm:$0xff]
      %v2008 = vld [vmem:[%s2 + $0x1a8] sm:$0xff]
      %v2009 = vld [vmem:[%s2 + $0x1b0] sm:$0xff]
      %v2010 = vld [vmem:[%s2 + $0x1b8] sm:$0xff]
      %v2011 = vld [vmem:[%s2 + $0x1c0] sm:$0xff]
      %v2012 = vld [vmem:[%s2 + $0x1c8] sm:$0xff]
      %v2013 = vld [vmem:[%s2 + $0x1d0] sm:$0xff]
      %v2014 = vld [vmem:[%s2 + $0x1d8] sm:$0xff]
      %v2015 = vld [vmem:[%s2 + $0x1e0] sm:$0xff]
      %v2016 = vld [vmem:[%s2 + $0x1e8] sm:$0xff]
      %v2017 = vld [vmem:[%s2 + $0x1f0] sm:$0xff]
      %v2018 = vld [vmem:[%s2 + $0x1f8] sm:$0xff]
      %v2019 = vld [vmem:[%s2 + $0x200] sm:$0xff]
      %v2020 = vld [vmem:[%s2 + $0x208] sm:$0xff]
      %v2021 = vld [vmem:[%s2 + $0x210] sm:$0xff]
      %v2022 = vld [vmem:[%s2 + $0x218] sm:$0xff]
      %v2023 = vld [vmem:[%s2 + $0x220] sm:$0xff]
      %v2024 = vld [vmem:[%s2 + $0x228] sm:$0xff]
      %v2025 = vld [vmem:[%s2 + $0x230] sm:$0xff]
      %v2026 = vld [vmem:[%s2 + $0x238] sm:$0xff]
      %v2027 = vld [vmem:[%s2 + $0x240] sm:$0xff]
      %v2028 = vld [vmem:[%s2 + $0x248] sm:$0xff]
      %v2029 = vld [vmem:[%s2 + $0x250] sm:$0xff]
      %v2030 = vld [vmem:[%s2 + $0x258] sm:$0xff]
      %v2031 = vld [vmem:[%s2 + $0x260] sm:$0xff]
      %v2032 = vld [vmem:[%s2 + $0x268] sm:$0xff]
      %v2033 = vld [vmem:[%s2 + $0x270] sm:$0xff]
      %v2034 = vld [vmem:[%s2 + $0x278] sm:$0xff]
      %v2035 = vld [vmem:[%s2 + $0x280] sm:$0xff]
      %v2036 = vld [vmem:[%s2 + $0x288] sm:$0xff]
      %v2037 = vld [vmem:[%s2 + $0x290] sm:$0xff]
      %v2038 = vld [vmem:[%s2 + $0x298] sm:$0xff]
      %v2039 = vld [vmem:[%s2 + $0x2a0] sm:$0xff]
      %v2040 = vld [vmem:[%s2 + $0x2a8] sm:$0xff]
      %v2041 = vld [vmem:[%s2 + $0x2b0] sm:$0xff]
      %v2042 = vld [vmem:[%s2 + $0x2b8] sm:$0xff]
      %v2043 = vld [vmem:[%s2 + $0x2c0] sm:$0xff]
      %v2044 = vld [vmem:[%s2 + $0x2c8] sm:$0xff]
      %v2045 = vld [vmem:[%s2 + $0x2d0] sm:$0xff]
      %v2046 = vld [vmem:[%s2 + $0x2d8] sm:$0xff]
      %v2047 = vld [vmem:[%s2 + $0x2e0] sm:$0xff]
      %v2048 = vld [vmem:[%s2 + $0x2e8] sm:$0xff]
      %v2049 = vld [vmem:[%s2 + $0x2f0] sm:$0xff]
      %v2050 = vld [vmem:[%s2 + $0x2f8] sm:$0xff]
      %v2051 = vld [vmem:[%s2 + $0x300] sm:$0xff]
      %v2052 = vld [vmem:[%s2 + $0x308] sm:$0xff]
      %v2053 = vld [vmem:[%s2 + $0x310] sm:$0xff]
      %v2054 = vld [vmem:[%s2 + $0x318] sm:$0xff]
      %v2055 = vld [vmem:[%s2 + $0x320] sm:$0xff]
      %v2056 = vld [vmem:[%s2 + $0x328] sm:$0xff]
      %v2057 = vld [vmem:[%s2 + $0x330] sm:$0xff]
      %v2058 = vld [vmem:[%s2 + $0x338] sm:$0xff]
      %v2059 = vld [vmem:[%s2 + $0x340] sm:$0xff]
      %v2060 = vld [vmem:[%s2 + $0x348] sm:$0xff]
      %v2061 = vld [vmem:[%s2 + $0x350] sm:$0xff]
      %v2062 = vld [vmem:[%s2 + $0x358] sm:$0xff]
      %v2063 = vld [vmem:[%s2 + $0x360] sm:$0xff]
      %v2064 = vld [vmem:[%s2 + $0x368] sm:$0xff]
      %v2065 = vld [vmem:[%s2 + $0x370] sm:$0xff]
      %v2066 = vld [vmem:[%s2 + $0x378] sm:$0xff]
      %v2067 = vld [vmem:[%s2 + $0x380] sm:$0xff]
      %v2068 = vld [vmem:[%s2 + $0x388] sm:$0xff]
      %v2069 = vld [vmem:[%s2 + $0x390] sm:$0xff]
      %v2070 = vld [vmem:[%s2 + $0x398] sm:$0xff]
      %v2071 = vld [vmem:[%s2 + $0x3a0] sm:$0xff]
      %v2072 = vld [vmem:[%s2 + $0x3a8] sm:$0xff]
      %v2073 = vld [vmem:[%s2 + $0x3b0] sm:$0xff]
      %v2074 = vld [vmem:[%s2 + $0x3b8] sm:$0xff]
      %v2075 = vld [vmem:[%s2 + $0x3c0] sm:$0xff]
      %v2076 = vld [vmem:[%s2 + $0x3c8] sm:$0xff]
      %v2077 = vld [vmem:[%s2 + $0x3d0] sm:$0xff]
      %v2078 = vld [vmem:[%s2 + $0x3d8] sm:$0xff]
      %v2079 = vld [vmem:[%s2 + $0x3e0] sm:$0xff]
      %v2080 = vld [vmem:[%s2 + $0x3e8] sm:$0xff]
      %v2081 = vld [vmem:[%s2 + $0x3f0] sm:$0xff]
      %v2082 = vld [vmem:[%s2 + $0x3f8] sm:$0xff]
      %v2083 = vld [vmem:[%s2 + $0x400] sm:$0xff]
      %v2084 = vld [vmem:[%s2 + $0x408] sm:$0xff]
      %v2085 = vld [vmem:[%s2 + $0x410] sm:$0xff]
      %v2086 = vld [vmem:[%s2 + $0x418] sm:$0xff]
      %v2087 = vld [vmem:[%s2 + $0x420] sm:$0xff]
      %v2088 = vld [vmem:[%s2 + $0x428] sm:$0xff]
      %v2089 = vld [vmem:[%s2 + $0x430] sm:$0xff]
      %v2090 = vld [vmem:[%s2 + $0x438] sm:$0xff]
      %v2091 = vld [vmem:[%s2 + $0x440] sm:$0xff]
      %v2092 = vld [vmem:[%s2 + $0x448] sm:$0xff]
      %v2093 = vld [vmem:[%s2 + $0x450] sm:$0xff]
      %v2094 = vld [vmem:[%s2 + $0x458] sm:$0xff]
      %v2095 = vld [vmem:[%s2 + $0x460] sm:$0xff]
      %v2096 = vld [vmem:[%s2 + $0x468] sm:$0xff]
      %v2097 = vld [vmem:[%s2 + $0x470] sm:$0xff]
      %v2098 = vld [vmem:[%s2 + $0x478] sm:$0xff]
      %v2099 = vld [vmem:[%s4] sm:$0x1]
      %v2101 = vlaneseq
      %v2102 = vshrl.u32 %v2101, 7
      %v2103 = vsub.s32 0, %v2102
      %v2104 = vrot.slane %v2099, %v2103
      %2106 = vmatprep.subr.mxu0 0.0
      %2107 = vmatpush1.msra.mxu0 %v1955
      %2108 = vmatprep.subr.mxu0 0.0
      %2109 = vmatpush1.msra.mxu0 %v1956
      %2110 = vmatprep.subr.mxu0 0.0
      %2111 = vmatpush1.msra.mxu0 %v1957
      %2112 = vmatprep.subr.mxu0 0.0
      %2113 = vmatpush1.msra.mxu0 %v1958
      %2114 = vmatprep.subr.mxu0 0.0
      %2115 = vmatpush1.msra.mxu0 %v1959
      %2116 = vmatprep.subr.mxu0 0.0
      %2117 = vmatpush1.msra.mxu0 %v1960
      %2118 = vmatprep.subr.mxu0 0.0
      %2119 = vmatpush1.msra.mxu0 %v1961
      %2120 = vmatprep.subr.mxu0 0.0
      %2121 = vmatpush1.msra.mxu0 %v1962
      %2122 = vmatprep.subr.mxu0 0.0
      %2123 = vmatpush1.msra.mxu0 %v1963
      %2124 = vmatprep.subr.mxu0 0.0
      %2125 = vmatpush1.msra.mxu0 %v1964
      %2126 = vmatprep.subr.mxu0 0.0
      %2127 = vmatpush1.msra.mxu0 %v1965
      %2128 = vmatprep.subr.mxu0 0.0
      %2129 = vmatpush1.msra.mxu0 %v1966
      %2130 = vmatprep.subr.mxu0 0.0
      %2131 = vmatpush1.msra.mxu0 %v1967
      %2132 = vmatprep.subr.mxu0 0.0
      %2133 = vmatpush1.msra.mxu0 %v1968
      %2134 = vmatprep.subr.mxu0 0.0
      %2135 = vmatpush1.msra.mxu0 %v1969
      %2136 = vmatprep.subr.mxu0 0.0
      %2137 = vmatpush1.msra.mxu0 %v1970
      %2138 = vmatprep.subr.mxu0 0.0
      %2139 = vmatpush1.msra.mxu0 %v1971
      %2140 = vmatprep.subr.mxu0 0.0
      %2141 = vmatpush1.msra.mxu0 %v1972
      %2142 = vmatprep.subr.mxu0 0.0
      %2143 = vmatpush1.msra.mxu0 %v1973
      %2144 = vmatprep.subr.mxu0 0.0
      %2145 = vmatpush1.msra.mxu0 %v1974
      %2146 = vmatprep.subr.mxu0 0.0
      %2147 = vmatpush1.msra.mxu0 %v1975
      %2148 = vmatprep.subr.mxu0 0.0
      %2149 = vmatpush1.msra.mxu0 %v1976
      %2150 = vmatprep.subr.mxu0 0.0
      %2151 = vmatpush1.msra.mxu0 %v1977
      %2152 = vmatprep.subr.mxu0 0.0
      %2153 = vmatpush1.msra.mxu0 %v1978
      %2154 = vmatprep.subr.mxu0 0.0
      %2155 = vmatpush1.msra.mxu0 %v1979
      %2156 = vmatprep.subr.mxu0 0.0
      %2157 = vmatpush1.msra.mxu0 %v1980
      %2158 = vmatprep.subr.mxu0 0.0
      %2159 = vmatpush1.msra.mxu0 %v1981
      %2160 = vmatprep.subr.mxu0 0.0
      %2161 = vmatpush1.msra.mxu0 %v1982
      %2162 = vmatprep.subr.mxu0 0.0
      %2163 = vmatpush1.msra.mxu0 %v1983
      %2164 = vmatprep.subr.mxu0 0.0
      %2165 = vmatpush1.msra.mxu0 %v1984
      %2166 = vmatprep.subr.mxu0 0.0
      %2167 = vmatpush1.msra.mxu0 %v1985
      %2168 = vmatprep.subr.mxu0 0.0
      %2169 = vmatpush1.msra.mxu0 %v1986
      %2170 = vmatprep.mubr.f32.mxu0 %v1699
      %2171 = vmatmul.mubr.f32.gmra.mrb[0].mxu0 %v1764
      %v2172 = vpop.f32.mrb[0].mxu0
      %v2173 = vadd.f32 %v2104, %v2172
      %v2174 = vpop.f32.mrb[0].mxu0
      %2175 = vmatprep.mubr.f32.mxu0 %v1700
      %2176 = vmatmul.mubr.f32.gmra.mrb[0].mxu0 %v1766
      %v2177 = vpop.f32.mrb[0].mxu0
      %v2178 = vadd.f32 %v2104, %v2177
      %v2179 = vpop.f32.mrb[0].mxu0
      %2180 = vmatprep.mubr.f32.mxu0 %v1701
      %2181 = vmatmul.mubr.f32.gmra.mrb[0].mxu0 %v1768
      %v2182 = vpop.f32.mrb[0].mxu0
      %v2183 = vadd.f32 %v2104, %v2182
      %v2184 = vpop.f32.mrb[0].mxu0
      %2185 = vmatprep.mubr.f32.mxu0 %v1702
      %2186 = vmatmul.mubr.f32.gmra.mrb[0].mxu0 %v1770
      %v2187 = vpop.f32.mrb[0].mxu0
      %v2188 = vadd.f32 %v2104, %v2187
      %v2189 = vpop.f32.mrb[0].mxu0
      %2190 = vmatprep.mubr.f32.mxu0 %v1703
      %2191 = vmatmul.mubr.f32.gmra.mrb[0].mxu0 %v1772
      %v2192 = vpop.f32.mrb[0].mxu0
      %v2193 = vadd.f32 %v2104, %v2192
      %v2194 = vpop.f32.mrb[0].mxu0
      %2195 = vmatprep.mubr.f32.mxu0 %v1704
      %2196 = vmatmul.mubr.f32.gmra.mrb[0].mxu0 %v1774
      %v2197 = vpop.f32.mrb[0].mxu0
      %v2198 = vadd.f32 %v2104, %v2197
      %v2199 = vpop.f32.mrb[0].mxu0
      %2200 = vmatprep.mubr.f32.mxu0 %v1705
      %2201 = vmatmul.mubr.f32.gmra.mrb[0].mxu0 %v1776
      %v2202 = vpop.f32.mrb[0].mxu0
      %v2203 = vadd.f32 %v2104, %v2202
      %v2204 = vpop.f32.mrb[0].mxu0
      %2205 = vmatprep.mubr.f32.mxu0 %v1706
      %2206 = vmatmul.mubr.f32.gmra.mrb[0].mxu0 %v1778
      %v2207 = vpop.f32.mrb[0].mxu0
      %v2208 = vadd.f32 %v2104, %v2207
      %v2209 = vpop.f32.mrb[0].mxu0
      %2210 = vmatprep.mubr.f32.mxu0 %v1707
      %2211 = vmatmul.mubr.f32.gmra.mrb[0].mxu0 %v1780
      %v2212 = vpop.f32.mrb[0].mxu0
      %v2213 = vadd.f32 %v2104, %v2212
      %v2214 = vpop.f32.mrb[0].mxu0
      %2215 = vmatprep.mubr.f32.mxu0 %v1708
      %2216 = vmatmul.mubr.f32.gmra.mrb[0].mxu0 %v1782
      %v2217 = vpop.f32.mrb[0].mxu0
      %v2218 = vadd.f32 %v2104, %v2217
      %v2219 = vpop.f32.mrb[0].mxu0
      %2220 = vmatprep.mubr.f32.mxu0 %v1709
      %2221 = vmatmul.mubr.f32.gmra.mrb[0].mxu0 %v1784
      %v2222 = vpop.f32.mrb[0].mxu0
      %v2223 = vadd.f32 %v2104, %v2222
      %v2224 = vpop.f32.mrb[0].mxu0
      %2225 = vmatprep.mubr.f32.mxu0 %v1710
      %2226 = vmatmul.mubr.f32.gmra.mrb[0].mxu0 %v1786
      %v2227 = vpop.f32.mrb[0].mxu0
      %v2228 = vadd.f32 %v2104, %v2227
      %v2229 = vpop.f32.mrb[0].mxu0
      %2230 = vmatprep.mubr.f32.mxu0 %v1711
      %2231 = vmatmul.mubr.f32.gmra.mrb[0].mxu0 %v1788
      %v2232 = vpop.f32.mrb[0].mxu0
      %v2233 = vadd.f32 %v2104, %v2232
      %v2234 = vpop.f32.mrb[0].mxu0
      %2235 = vmatprep.mubr.f32.mxu0 %v1712
      %2236 = vmatmul.mubr.f32.gmra.mrb[0].mxu0 %v1790
      %v2237 = vpop.f32.mrb[0].mxu0
      %v2238 = vadd.f32 %v2104, %v2237
      %v2239 = vpop.f32.mrb[0].mxu0
      %2240 = vmatprep.mubr.f32.mxu0 %v1713
      %2241 = vmatmul.mubr.f32.gmra.mrb[0].mxu0 %v1792
      %v2242 = vpop.f32.mrb[0].mxu0
      %v2243 = vadd.f32 %v2104, %v2242
      %v2244 = vpop.f32.mrb[0].mxu0
      %2245 = vmatprep.mubr.f32.mxu0 %v1714
      %2246 = vmatmul.mubr.f32.gmra.mrb[0].mxu0 %v1794
      %v2247 = vpop.f32.mrb[0].mxu0
      %v2248 = vadd.f32 %v2104, %v2247
      %v2249 = vpop.f32.mrb[0].mxu0
      %2250 = vdwg.mxu0
      %2251 = vmatprep.subr.mxu0 0.0
      %2252 = vmatpush1.msra.mxu0 %v1987
      %2253 = vmatprep.subr.mxu0 0.0
      %2254 = vmatpush1.msra.mxu0 %v1988
      %2255 = vmatprep.subr.mxu0 0.0
      %2256 = vmatpush1.msra.mxu0 %v1989
      %2257 = vmatprep.subr.mxu0 0.0
      %2258 = vmatpush1.msra.mxu0 %v1990
      %2259 = vmatprep.subr.mxu0 0.0
      %2260 = vmatpush1.msra.mxu0 %v1991
      %2261 = vmatprep.subr.mxu0 0.0
      %2262 = vmatpush1.msra.mxu0 %v1992
      %2263 = vmatprep.subr.mxu0 0.0
      %2264 = vmatpush1.msra.mxu0 %v1993
      %2265 = vmatprep.subr.mxu0 0.0
      %2266 = vmatpush1.msra.mxu0 %v1994
      %2267 = vmatprep.subr.mxu0 0.0
      %2268 = vmatpush1.msra.mxu0 %v1995
      %2269 = vmatprep.subr.mxu0 0.0
      %2270 = vmatpush1.msra.mxu0 %v1996
      %2271 = vmatprep.subr.mxu0 0.0
      %2272 = vmatpush1.msra.mxu0 %v1997
      %2273 = vmatprep.subr.mxu0 0.0
      %2274 = vmatpush1.msra.mxu0 %v1998
      %2275 = vmatprep.subr.mxu0 0.0
      %2276 = vmatpush1.msra.mxu0 %v1999
      %2277 = vmatprep.subr.mxu0 0.0
      %2278 = vmatpush1.msra.mxu0 %v2000
      %2279 = vmatprep.subr.mxu0 0.0
      %2280 = vmatpush1.msra.mxu0 %v2001
      %2281 = vmatprep.subr.mxu0 0.0
      %2282 = vmatpush1.msra.mxu0 %v2002
      %2283 = vmatprep.subr.mxu0 0.0
      %2284 = vmatpush1.msra.mxu0 %v2003
      %2285 = vmatprep.subr.mxu0 0.0
      %2286 = vmatpush1.msra.mxu0 %v2004
      %2287 = vmatprep.subr.mxu0 0.0
      %2288 = vmatpush1.msra.mxu0 %v2005
      %2289 = vmatprep.subr.mxu0 0.0
      %2290 = vmatpush1.msra.mxu0 %v2006
      %2291 = vmatprep.subr.mxu0 0.0
      %2292 = vmatpush1.msra.mxu0 %v2007
      %2293 = vmatprep.subr.mxu0 0.0
      %2294 = vmatpush1.msra.mxu0 %v2008
      %2295 = vmatprep.subr.mxu0 0.0
      %2296 = vmatpush1.msra.mxu0 %v2009
      %2297 = vmatprep.subr.mxu0 0.0
      %2298 = vmatpush1.msra.mxu0 %v2010
      %2299 = vmatprep.subr.mxu0 0.0
      %2300 = vmatpush1.msra.mxu0 %v2011
      %2301 = vmatprep.subr.mxu0 0.0
      %2302 = vmatpush1.msra.mxu0 %v2012
      %2303 = vmatprep.subr.mxu0 0.0
      %2304 = vmatpush1.msra.mxu0 %v2013
      %2305 = vmatprep.subr.mxu0 0.0
      %2306 = vmatpush1.msra.mxu0 %v2014
      %2307 = vmatprep.subr.mxu0 0.0
      %2308 = vmatpush1.msra.mxu0 %v2015
      %2309 = vmatprep.subr.mxu0 0.0
      %2310 = vmatpush1.msra.mxu0 %v2016
      %2311 = vmatprep.subr.mxu0 0.0
      %2312 = vmatpush1.msra.mxu0 %v2017
      %2313 = vmatprep.subr.mxu0 0.0
      %2314 = vmatpush1.msra.mxu0 %v2018
      %2315 = vmatprep.mubr.f32.mxu0 %v1828
      %2316 = vmatmul.mubr.f32.gmra.mrb[0].mxu0 %v1796
      %v2317 = vpop.f32.mrb[0].mxu0
      %v2318 = vadd.f32 %v2173, %v2317
      %v2319 = vpop.f32.mrb[0].mxu0
      %2320 = vmatprep.mubr.f32.mxu0 %v1830
      %2321 = vmatmul.mubr.f32.gmra.mrb[0].mxu0 %v1798
      %v2322 = vpop.f32.mrb[0].mxu0
      %v2323 = vadd.f32 %v2178, %v2322
      %v2324 = vpop.f32.mrb[0].mxu0
      %2325 = vmatprep.mubr.f32.mxu0 %v1832
      %2326 = vmatmul.mubr.f32.gmra.mrb[0].mxu0 %v1800
      %v2327 = vpop.f32.mrb[0].mxu0
      %v2328 = vadd.f32 %v2183, %v2327
      %v2329 = vpop.f32.mrb[0].mxu0
      %2330 = vmatprep.mubr.f32.mxu0 %v1834
      %2331 = vmatmul.mubr.f32.gmra.mrb[0].mxu0 %v1802
      %v2332 = vpop.f32.mrb[0].mxu0
      %v2333 = vadd.f32 %v2188, %v2332
      %v2334 = vpop.f32.mrb[0].mxu0
      %2335 = vmatprep.mubr.f32.mxu0 %v1836
      %2336 = vmatmul.mubr.f32.gmra.mrb[0].mxu0 %v1804
      %v2337 = vpop.f32.mrb[0].mxu0
      %v2338 = vadd.f32 %v2193, %v2337
      %v2339 = vpop.f32.mrb[0].mxu0
      %2340 = vmatprep.mubr.f32.mxu0 %v1838
      %2341 = vmatmul.mubr.f32.gmra.mrb[0].mxu0 %v1806
      %v2342 = vpop.f32.mrb[0].mxu0
      %v2343 = vadd.f32 %v2198, %v2342
      %v2344 = vpop.f32.mrb[0].mxu0
      %2345 = vmatprep.mubr.f32.mxu0 %v1840
      %2346 = vmatmul.mubr.f32.gmra.mrb[0].mxu0 %v1808
      %v2347 = vpop.f32.mrb[0].mxu0
      %v2348 = vadd.f32 %v2203, %v2347
      %v2349 = vpop.f32.mrb[0].mxu0
      %2350 = vmatprep.mubr.f32.mxu0 %v1842
      %2351 = vmatmul.mubr.f32.gmra.mrb[0].mxu0 %v1810
      %v2352 = vpop.f32.mrb[0].mxu0
      %v2353 = vadd.f32 %v2208, %v2352
      %v2354 = vpop.f32.mrb[0].mxu0
      %2355 = vmatprep.mubr.f32.mxu0 %v1844
      %2356 = vmatmul.mubr.f32.gmra.mrb[0].mxu0 %v1812
      %v2357 = vpop.f32.mrb[0].mxu0
      %v2358 = vadd.f32 %v2213, %v2357
      %v2359 = vpop.f32.mrb[0].mxu0
      %2360 = vmatprep.mubr.f32.mxu0 %v1846
      %2361 = vmatmul.mubr.f32.gmra.mrb[0].mxu0 %v1814
      %v2362 = vpop.f32.mrb[0].mxu0
      %v2363 = vadd.f32 %v2218, %v2362
      %v2364 = vpop.f32.mrb[0].mxu0
      %2365 = vmatprep.mubr.f32.mxu0 %v1848
      %2366 = vmatmul.mubr.f32.gmra.mrb[0].mxu0 %v1816
      %v2367 = vpop.f32.mrb[0].mxu0
      %v2368 = vadd.f32 %v2223, %v2367
      %v2369 = vpop.f32.mrb[0].mxu0
      %2370 = vmatprep.mubr.f32.mxu0 %v1850
      %2371 = vmatmul.mubr.f32.gmra.mrb[0].mxu0 %v1818
      %v2372 = vpop.f32.mrb[0].mxu0
      %v2373 = vadd.f32 %v2228, %v2372
      %v2374 = vpop.f32.mrb[0].mxu0
      %2375 = vmatprep.mubr.f32.mxu0 %v1852
      %2376 = vmatmul.mubr.f32.gmra.mrb[0].mxu0 %v1820
      %v2377 = vpop.f32.mrb[0].mxu0
      %v2378 = vadd.f32 %v2233, %v2377
      %v2379 = vpop.f32.mrb[0].mxu0
      %2380 = vmatprep.mubr.f32.mxu0 %v1854
      %2381 = vmatmul.mubr.f32.gmra.mrb[0].mxu0 %v1822
      %v2382 = vpop.f32.mrb[0].mxu0
      %v2383 = vadd.f32 %v2238, %v2382
      %v2384 = vpop.f32.mrb[0].mxu0
      %2385 = vmatprep.mubr.f32.mxu0 %v1856
      %2386 = vmatmul.mubr.f32.gmra.mrb[0].mxu0 %v1824
      %v2387 = vpop.f32.mrb[0].mxu0
      %v2388 = vadd.f32 %v2243, %v2387
      %v2389 = vpop.f32.mrb[0].mxu0
      %2390 = vmatprep.mubr.f32.mxu0 %v1858
      %2391 = vmatmul.mubr.f32.gmra.mrb[0].mxu0 %v1826
      %v2392 = vpop.f32.mrb[0].mxu0
      %v2393 = vadd.f32 %v2248, %v2392
      %v2394 = vpop.f32.mrb[0].mxu0
      %2395 = vdwg.mxu0
      %2396 = vmatprep.subr.mxu0 0.0
      %2397 = vmatpush1.msra.mxu0 %v2019
      %2398 = vmatprep.subr.mxu0 0.0
      %2399 = vmatpush1.msra.mxu0 %v2020
      %2400 = vmatprep.subr.mxu0 0.0
      %2401 = vmatpush1.msra.mxu0 %v2021
      %2402 = vmatprep.subr.mxu0 0.0
      %2403 = vmatpush1.msra.mxu0 %v2022
      %2404 = vmatprep.subr.mxu0 0.0
      %2405 = vmatpush1.msra.mxu0 %v2023
      %2406 = vmatprep.subr.mxu0 0.0
      %2407 = vmatpush1.msra.mxu0 %v2024
      %2408 = vmatprep.subr.mxu0 0.0
      %2409 = vmatpush1.msra.mxu0 %v2025
      %2410 = vmatprep.subr.mxu0 0.0
      %2411 = vmatpush1.msra.mxu0 %v2026
      %2412 = vmatprep.subr.mxu0 0.0
      %2413 = vmatpush1.msra.mxu0 %v2027
      %2414 = vmatprep.subr.mxu0 0.0
      %2415 = vmatpush1.msra.mxu0 %v2028
      %2416 = vmatprep.subr.mxu0 0.0
      %2417 = vmatpush1.msra.mxu0 %v2029
      %2418 = vmatprep.subr.mxu0 0.0
      %2419 = vmatpush1.msra.mxu0 %v2030
      %2420 = vmatprep.subr.mxu0 0.0
      %2421 = vmatpush1.msra.mxu0 %v2031
      %2422 = vmatprep.subr.mxu0 0.0
      %2423 = vmatpush1.msra.mxu0 %v2032
      %2424 = vmatprep.subr.mxu0 0.0
      %2425 = vmatpush1.msra.mxu0 %v2033
      %2426 = vmatprep.subr.mxu0 0.0
      %2427 = vmatpush1.msra.mxu0 %v2034
      %2428 = vmatprep.subr.mxu0 0.0
      %2429 = vmatpush1.msra.mxu0 %v2035
      %2430 = vmatprep.subr.mxu0 0.0
      %2431 = vmatpush1.msra.mxu0 %v2036
      %2432 = vmatprep.subr.mxu0 0.0
      %2433 = vmatpush1.msra.mxu0 %v2037
      %2434 = vmatprep.subr.mxu0 0.0
      %2435 = vmatpush1.msra.mxu0 %v2038
      %2436 = vmatprep.subr.mxu0 0.0
      %2437 = vmatpush1.msra.mxu0 %v2039
      %2438 = vmatprep.subr.mxu0 0.0
      %2439 = vmatpush1.msra.mxu0 %v2040
      %2440 = vmatprep.subr.mxu0 0.0
      %2441 = vmatpush1.msra.mxu0 %v2041
      %2442 = vmatprep.subr.mxu0 0.0
      %2443 = vmatpush1.msra.mxu0 %v2042
      %2444 = vmatprep.subr.mxu0 0.0
      %2445 = vmatpush1.msra.mxu0 %v2043
      %2446 = vmatprep.subr.mxu0 0.0
      %2447 = vmatpush1.msra.mxu0 %v2044
      %2448 = vmatprep.subr.mxu0 0.0
      %2449 = vmatpush1.msra.mxu0 %v2045
      %2450 = vmatprep.subr.mxu0 0.0
      %2451 = vmatpush1.msra.mxu0 %v2046
      %2452 = vmatprep.subr.mxu0 0.0
      %2453 = vmatpush1.msra.mxu0 %v2047
      %2454 = vmatprep.subr.mxu0 0.0
      %2455 = vmatpush1.msra.mxu0 %v2048
      %2456 = vmatprep.subr.mxu0 0.0
      %2457 = vmatpush1.msra.mxu0 %v2049
      %2458 = vmatprep.subr.mxu0 0.0
      %2459 = vmatpush1.msra.mxu0 %v2050
      %2460 = vmatprep.mubr.f32.mxu0 %v1860
      %2461 = vmatmul.mubr.f32.gmra.mrb[0].mxu0 %v1651
      %v2462 = vpop.f32.mrb[0].mxu0
      %v2463 = vadd.f32 %v2318, %v2462
      %v2464 = vpop.f32.mrb[0].mxu0
      %2465 = vmatprep.mubr.f32.mxu0 %v1862
      %2466 = vmatmul.mubr.f32.gmra.mrb[0].mxu0 %v1652
      %v2467 = vpop.f32.mrb[0].mxu0
      %v2468 = vadd.f32 %v2323, %v2467
      %v2469 = vpop.f32.mrb[0].mxu0
      %2470 = vmatprep.mubr.f32.mxu0 %v1864
      %2471 = vmatmul.mubr.f32.gmra.mrb[0].mxu0 %v1653
      %v2472 = vpop.f32.mrb[0].mxu0
      %v2473 = vadd.f32 %v2328, %v2472
      %v2474 = vpop.f32.mrb[0].mxu0
      %2475 = vmatprep.mubr.f32.mxu0 %v1866
      %2476 = vmatmul.mubr.f32.gmra.mrb[0].mxu0 %v1654
      %v2477 = vpop.f32.mrb[0].mxu0
      %v2478 = vadd.f32 %v2333, %v2477
      %v2479 = vpop.f32.mrb[0].mxu0
      %2480 = vmatprep.mubr.f32.mxu0 %v1868
      %2481 = vmatmul.mubr.f32.gmra.mrb[0].mxu0 %v1655
      %v2482 = vpop.f32.mrb[0].mxu0
      %v2483 = vadd.f32 %v2338, %v2482
      %v2484 = vpop.f32.mrb[0].mxu0
      %2485 = vmatprep.mubr.f32.mxu0 %v1870
      %2486 = vmatmul.mubr.f32.gmra.mrb[0].mxu0 %v1656
      %v2487 = vpop.f32.mrb[0].mxu0
      %v2488 = vadd.f32 %v2343, %v2487
      %v2489 = vpop.f32.mrb[0].mxu0
      %2490 = vmatprep.mubr.f32.mxu0 %v1872
      %2491 = vmatmul.mubr.f32.gmra.mrb[0].mxu0 %v1657
      %v2492 = vpop.f32.mrb[0].mxu0
      %v2493 = vadd.f32 %v2348, %v2492
      %v2494 = vpop.f32.mrb[0].mxu0
      %2495 = vmatprep.mubr.f32.mxu0 %v1874
      %2496 = vmatmul.mubr.f32.gmra.mrb[0].mxu0 %v1658
      %v2497 = vpop.f32.mrb[0].mxu0
      %v2498 = vadd.f32 %v2353, %v2497
      %v2499 = vpop.f32.mrb[0].mxu0
      %2500 = vmatprep.mubr.f32.mxu0 %v1876
      %2501 = vmatmul.mubr.f32.gmra.mrb[0].mxu0 %v1659
      %v2502 = vpop.f32.mrb[0].mxu0
      %v2503 = vadd.f32 %v2358, %v2502
      %v2504 = vpop.f32.mrb[0].mxu0
      %2505 = vmatprep.mubr.f32.mxu0 %v1878
      %2506 = vmatmul.mubr.f32.gmra.mrb[0].mxu0 %v1660
      %v2507 = vpop.f32.mrb[0].mxu0
      %v2508 = vadd.f32 %v2363, %v2507
      %v2509 = vpop.f32.mrb[0].mxu0
      %2510 = vmatprep.mubr.f32.mxu0 %v1880
      %2511 = vmatmul.mubr.f32.gmra.mrb[0].mxu0 %v1661
      %v2512 = vpop.f32.mrb[0].mxu0
      %v2513 = vadd.f32 %v2368, %v2512
      %v2514 = vpop.f32.mrb[0].mxu0
      %2515 = vmatprep.mubr.f32.mxu0 %v1882
      %2516 = vmatmul.mubr.f32.gmra.mrb[0].mxu0 %v1662
      %v2517 = vpop.f32.mrb[0].mxu0
      %v2518 = vadd.f32 %v2373, %v2517
      %v2519 = vpop.f32.mrb[0].mxu0
      %2520 = vmatprep.mubr.f32.mxu0 %v1884
      %2521 = vmatmul.mubr.f32.gmra.mrb[0].mxu0 %v1663
      %v2522 = vpop.f32.mrb[0].mxu0
      %v2523 = vadd.f32 %v2378, %v2522
      %v2524 = vpop.f32.mrb[0].mxu0
      %2525 = vmatprep.mubr.f32.mxu0 %v1886
      %2526 = vmatmul.mubr.f32.gmra.mrb[0].mxu0 %v1664
      %v2527 = vpop.f32.mrb[0].mxu0
      %v2528 = vadd.f32 %v2383, %v2527
      %v2529 = vpop.f32.mrb[0].mxu0
      %2530 = vmatprep.mubr.f32.mxu0 %v1888
      %2531 = vmatmul.mubr.f32.gmra.mrb[0].mxu0 %v1665
      %v2532 = vpop.f32.mrb[0].mxu0
      %v2533 = vadd.f32 %v2388, %v2532
      %v2534 = vpop.f32.mrb[0].mxu0
      %2535 = vmatprep.mubr.f32.mxu0 %v1890
      %2536 = vmatmul.mubr.f32.gmra.mrb[0].mxu0 %v1666
      %v2537 = vpop.f32.mrb[0].mxu0
      %v2538 = vadd.f32 %v2393, %v2537
      %v2539 = vpop.f32.mrb[0].mxu0
      %2540 = vdwg.mxu0
      %2541 = vmatprep.subr.mxu0 0.0
      %2542 = vmatpush1.msra.mxu0 %v2051
      %2543 = vmatprep.subr.mxu0 0.0
      %2544 = vmatpush1.msra.mxu0 %v2052
      %2545 = vmatprep.subr.mxu0 0.0
      %2546 = vmatpush1.msra.mxu0 %v2053
      %2547 = vmatprep.subr.mxu0 0.0
      %2548 = vmatpush1.msra.mxu0 %v2054
      %2549 = vmatprep.subr.mxu0 0.0
      %2550 = vmatpush1.msra.mxu0 %v2055
      %2551 = vmatprep.subr.mxu0 0.0
      %2552 = vmatpush1.msra.mxu0 %v2056
      %2553 = vmatprep.subr.mxu0 0.0
      %2554 = vmatpush1.msra.mxu0 %v2057
      %2555 = vmatprep.subr.mxu0 0.0
      %2556 = vmatpush1.msra.mxu0 %v2058
      %2557 = vmatprep.subr.mxu0 0.0
      %2558 = vmatpush1.msra.mxu0 %v2059
      %2559 = vmatprep.subr.mxu0 0.0
      %2560 = vmatpush1.msra.mxu0 %v2060
      %2561 = vmatprep.subr.mxu0 0.0
      %2562 = vmatpush1.msra.mxu0 %v2061
      %2563 = vmatprep.subr.mxu0 0.0
      %2564 = vmatpush1.msra.mxu0 %v2062
      %2565 = vmatprep.subr.mxu0 0.0
      %2566 = vmatpush1.msra.mxu0 %v2063
      %2567 = vmatprep.subr.mxu0 0.0
      %2568 = vmatpush1.msra.mxu0 %v2064
      %2569 = vmatprep.subr.mxu0 0.0
      %2570 = vmatpush1.msra.mxu0 %v2065
      %2571 = vmatprep.subr.mxu0 0.0
      %2572 = vmatpush1.msra.mxu0 %v2066
      %2573 = vmatprep.subr.mxu0 0.0
      %2574 = vmatpush1.msra.mxu0 %v2067
      %2575 = vmatprep.subr.mxu0 0.0
      %2576 = vmatpush1.msra.mxu0 %v2068
      %2577 = vmatprep.subr.mxu0 0.0
      %2578 = vmatpush1.msra.mxu0 %v2069
      %2579 = vmatprep.subr.mxu0 0.0
      %2580 = vmatpush1.msra.mxu0 %v2070
      %2581 = vmatprep.subr.mxu0 0.0
      %2582 = vmatpush1.msra.mxu0 %v2071
      %2583 = vmatprep.subr.mxu0 0.0
      %2584 = vmatpush1.msra.mxu0 %v2072
      %2585 = vmatprep.subr.mxu0 0.0
      %2586 = vmatpush1.msra.mxu0 %v2073
      %2587 = vmatprep.subr.mxu0 0.0
      %2588 = vmatpush1.msra.mxu0 %v2074
      %2589 = vmatprep.subr.mxu0 0.0
      %2590 = vmatpush1.msra.mxu0 %v2075
      %2591 = vmatprep.subr.mxu0 0.0
      %2592 = vmatpush1.msra.mxu0 %v2076
      %2593 = vmatprep.subr.mxu0 0.0
      %2594 = vmatpush1.msra.mxu0 %v2077
      %2595 = vmatprep.subr.mxu0 0.0
      %2596 = vmatpush1.msra.mxu0 %v2078
      %2597 = vmatprep.subr.mxu0 0.0
      %2598 = vmatpush1.msra.mxu0 %v2079
      %2599 = vmatprep.subr.mxu0 0.0
      %2600 = vmatpush1.msra.mxu0 %v2080
      %2601 = vmatprep.subr.mxu0 0.0
      %2602 = vmatpush1.msra.mxu0 %v2081
      %2603 = vmatprep.subr.mxu0 0.0
      %2604 = vmatpush1.msra.mxu0 %v2082
      %2605 = vmatprep.mubr.f32.mxu0 %v1747
      %2606 = vmatmul.mubr.f32.gmra.mrb[0].mxu0 %v1892
      %v2607 = vpop.f32.mrb[0].mxu0
      %v2608 = vadd.f32 %v2463, %v2607
      %v2609 = vpop.f32.mrb[0].mxu0
      %2610 = vmatprep.mubr.f32.mxu0 %v1748
      %2611 = vmatmul.mubr.f32.gmra.mrb[0].mxu0 %v1894
      %v2612 = vpop.f32.mrb[0].mxu0
      %v2613 = vadd.f32 %v2468, %v2612
      %v2614 = vpop.f32.mrb[0].mxu0
      %2615 = vmatprep.mubr.f32.mxu0 %v1749
      %2616 = vmatmul.mubr.f32.gmra.mrb[0].mxu0 %v1896
      %v2617 = vpop.f32.mrb[0].mxu0
      %v2618 = vadd.f32 %v2473, %v2617
      %v2619 = vpop.f32.mrb[0].mxu0
      %2620 = vmatprep.mubr.f32.mxu0 %v1750
      %2621 = vmatmul.mubr.f32.gmra.mrb[0].mxu0 %v1898
      %v2622 = vpop.f32.mrb[0].mxu0
      %v2623 = vadd.f32 %v2478, %v2622
      %v2624 = vpop.f32.mrb[0].mxu0
      %2625 = vmatprep.mubr.f32.mxu0 %v1751
      %2626 = vmatmul.mubr.f32.gmra.mrb[0].mxu0 %v1900
      %v2627 = vpop.f32.mrb[0].mxu0
      %v2628 = vadd.f32 %v2483, %v2627
      %v2629 = vpop.f32.mrb[0].mxu0
      %2630 = vmatprep.mubr.f32.mxu0 %v1752
      %2631 = vmatmul.mubr.f32.gmra.mrb[0].mxu0 %v1902
      %v2632 = vpop.f32.mrb[0].mxu0
      %v2633 = vadd.f32 %v2488, %v2632
      %v2634 = vpop.f32.mrb[0].mxu0
      %2635 = vmatprep.mubr.f32.mxu0 %v1753
      %2636 = vmatmul.mubr.f32.gmra.mrb[0].mxu0 %v1904
      %v2637 = vpop.f32.mrb[0].mxu0
      %v2638 = vadd.f32 %v2493, %v2637
      %v2639 = vpop.f32.mrb[0].mxu0
      %2640 = vmatprep.mubr.f32.mxu0 %v1754
      %2641 = vmatmul.mubr.f32.gmra.mrb[0].mxu0 %v1906
      %v2642 = vpop.f32.mrb[0].mxu0
      %v2643 = vadd.f32 %v2498, %v2642
      %v2644 = vpop.f32.mrb[0].mxu0
      %2645 = vmatprep.mubr.f32.mxu0 %v1755
      %2646 = vmatmul.mubr.f32.gmra.mrb[0].mxu0 %v1908
      %v2647 = vpop.f32.mrb[0].mxu0
      %v2648 = vadd.f32 %v2503, %v2647
      %v2649 = vpop.f32.mrb[0].mxu0
      %2650 = vmatprep.mubr.f32.mxu0 %v1756
      %2651 = vmatmul.mubr.f32.gmra.mrb[0].mxu0 %v1910
      %v2652 = vpop.f32.mrb[0].mxu0
      %v2653 = vadd.f32 %v2508, %v2652
      %v2654 = vpop.f32.mrb[0].mxu0
      %2655 = vmatprep.mubr.f32.mxu0 %v1757
      %2656 = vmatmul.mubr.f32.gmra.mrb[0].mxu0 %v1912
      %v2657 = vpop.f32.mrb[0].mxu0
      %v2658 = vadd.f32 %v2513, %v2657
      %v2659 = vpop.f32.mrb[0].mxu0
      %2660 = vmatprep.mubr.f32.mxu0 %v1758
      %2661 = vmatmul.mubr.f32.gmra.mrb[0].mxu0 %v1914
      %v2662 = vpop.f32.mrb[0].mxu0
      %v2663 = vadd.f32 %v2518, %v2662
      %v2664 = vpop.f32.mrb[0].mxu0
      %2665 = vmatprep.mubr.f32.mxu0 %v1759
      %2666 = vmatmul.mubr.f32.gmra.mrb[0].mxu0 %v1916
      %v2667 = vpop.f32.mrb[0].mxu0
      %v2668 = vadd.f32 %v2523, %v2667
      %v2669 = vpop.f32.mrb[0].mxu0
      %2670 = vmatprep.mubr.f32.mxu0 %v1760
      %2671 = vmatmul.mubr.f32.gmra.mrb[0].mxu0 %v1918
      %v2672 = vpop.f32.mrb[0].mxu0
      %v2673 = vadd.f32 %v2528, %v2672
      %v2674 = vpop.f32.mrb[0].mxu0
      %2675 = vmatprep.mubr.f32.mxu0 %v1761
      %2676 = vmatmul.mubr.f32.gmra.mrb[0].mxu0 %v1920
      %v2677 = vpop.f32.mrb[0].mxu0
      %v2678 = vadd.f32 %v2533, %v2677
      %v2679 = vpop.f32.mrb[0].mxu0
      %2680 = vmatprep.mubr.f32.mxu0 %v1762
      %2681 = vmatmul.mubr.f32.gmra.mrb[0].mxu0 %v1922
      %v2682 = vpop.f32.mrb[0].mxu0
      %v2683 = vadd.f32 %v2538, %v2682
      %v2684 = vpop.f32.mrb[0].mxu0
      %2685 = vdwg.mxu0
      %2686 = vmatprep.subr.mxu0 0.0
      %2687 = vmatpush1.msra.mxu0 %v2083
      %2688 = vmatprep.subr.mxu0 0.0
      %2689 = vmatpush1.msra.mxu0 %v2084
      %2690 = vmatprep.subr.mxu0 0.0
      %2691 = vmatpush1.msra.mxu0 %v2085
      %2692 = vmatprep.subr.mxu0 0.0
      %2693 = vmatpush1.msra.mxu0 %v2086
      %2694 = vmatprep.subr.mxu0 0.0
      %2695 = vmatpush1.msra.mxu0 %v2087
      %2696 = vmatprep.subr.mxu0 0.0
      %2697 = vmatpush1.msra.mxu0 %v2088
      %2698 = vmatprep.subr.mxu0 0.0
      %2699 = vmatpush1.msra.mxu0 %v2089
      %2700 = vmatprep.subr.mxu0 0.0
      %2701 = vmatpush1.msra.mxu0 %v2090
      %2702 = vmatprep.subr.mxu0 0.0
      %2703 = vmatpush1.msra.mxu0 %v2091
      %2704 = vmatprep.subr.mxu0 0.0
      %2705 = vmatpush1.msra.mxu0 %v2092
      %2706 = vmatprep.subr.mxu0 0.0
      %2707 = vmatpush1.msra.mxu0 %v2093
      %2708 = vmatprep.subr.mxu0 0.0
      %2709 = vmatpush1.msra.mxu0 %v2094
      %2710 = vmatprep.subr.mxu0 0.0
      %2711 = vmatpush1.msra.mxu0 %v2095
      %2712 = vmatprep.subr.mxu0 0.0
      %2713 = vmatpush1.msra.mxu0 %v2096
      %2714 = vmatprep.subr.mxu0 0.0
      %2715 = vmatpush1.msra.mxu0 %v2097
      %2716 = vmatprep.subr.mxu0 0.0
      %2717 = vmatpush1.msra.mxu0 %v2098
      %2718 = vmatprep.subr.mxu0 0.0
      %2719 = vmatpush1.msra.mxu0 0.0
      %2720 = vmatprep.subr.mxu0 0.0
      %2721 = vmatpush1.msra.mxu0 0.0
      %2722 = vmatprep.subr.mxu0 0.0
      %2723 = vmatpush1.msra.mxu0 0.0
      %2724 = vmatprep.subr.mxu0 0.0
      %2725 = vmatpush1.msra.mxu0 0.0
      %2726 = vmatprep.subr.mxu0 0.0
      %2727 = vmatpush1.msra.mxu0 0.0
      %2728 = vmatprep.subr.mxu0 0.0
      %2729 = vmatpush1.msra.mxu0 0.0
      %2730 = vmatprep.subr.mxu0 0.0
      %2731 = vmatpush1.msra.mxu0 0.0
      %2732 = vmatprep.subr.mxu0 0.0
      %2733 = vmatpush1.msra.mxu0 0.0
      %2734 = vmatprep.subr.mxu0 0.0
      %2735 = vmatpush1.msra.mxu0 0.0
      %2736 = vmatprep.subr.mxu0 0.0
      %2737 = vmatpush1.msra.mxu0 0.0
      %2738 = vmatprep.subr.mxu0 0.0
      %2739 = vmatpush1.msra.mxu0 0.0
      %2740 = vmatprep.subr.mxu0 0.0
      %2741 = vmatpush1.msra.mxu0 0.0
      %2742 = vmatprep.subr.mxu0 0.0
      %2743 = vmatpush1.msra.mxu0 0.0
      %2744 = vmatprep.subr.mxu0 0.0
      %2745 = vmatpush1.msra.mxu0 0.0
      %2746 = vmatprep.subr.mxu0 0.0
      %2747 = vmatpush1.msra.mxu0 0.0
      %2748 = vmatprep.subr.mxu0 0.0
      %2749 = vmatpush1.msra.mxu0 0.0
      %2750 = vmatprep.mubr.f32.mxu0 0.0
      %2751 = vmatmul.mubr.f32.gmra.mrb[0].mxu0 %v1924
      %v2752 = vpop.f32.mrb[0].mxu0
      %v2753 = vadd.f32 %v2608, %v2752
      %v2754 = vpop.f32.mrb[0].mxu0
      %2755 = vmatprep.mubr.f32.mxu0 0.0
      %2756 = vmatmul.mubr.f32.gmra.mrb[0].mxu0 %v1926
      %v2757 = vpop.f32.mrb[0].mxu0
      %v2758 = vadd.f32 %v2613, %v2757
      %v2759 = vpop.f32.mrb[0].mxu0
      %2760 = vmatprep.mubr.f32.mxu0 0.0
      %2761 = vmatmul.mubr.f32.gmra.mrb[0].mxu0 %v1928
      %v2762 = vpop.f32.mrb[0].mxu0
      %v2763 = vadd.f32 %v2618, %v2762
      %v2764 = vpop.f32.mrb[0].mxu0
      %2765 = vmatprep.mubr.f32.mxu0 0.0
      %2766 = vmatmul.mubr.f32.gmra.mrb[0].mxu0 %v1930
      %v2767 = vpop.f32.mrb[0].mxu0
      %v2768 = vadd.f32 %v2623, %v2767
      %v2769 = vpop.f32.mrb[0].mxu0
      %2770 = vmatprep.mubr.f32.mxu0 0.0
      %2771 = vmatmul.mubr.f32.gmra.mrb[0].mxu0 %v1932
      %v2772 = vpop.f32.mrb[0].mxu0
      %v2773 = vadd.f32 %v2628, %v2772
      %v2774 = vpop.f32.mrb[0].mxu0
      %2775 = vmatprep.mubr.f32.mxu0 0.0
      %2776 = vmatmul.mubr.f32.gmra.mrb[0].mxu0 %v1934
      %v2777 = vpop.f32.mrb[0].mxu0
      %v2778 = vadd.f32 %v2633, %v2777
      %v2779 = vpop.f32.mrb[0].mxu0
      %2780 = vmatprep.mubr.f32.mxu0 0.0
      %2781 = vmatmul.mubr.f32.gmra.mrb[0].mxu0 %v1936
      %v2782 = vpop.f32.mrb[0].mxu0
      %v2783 = vadd.f32 %v2638, %v2782
      %v2784 = vpop.f32.mrb[0].mxu0
      %2785 = vmatprep.mubr.f32.mxu0 0.0
      %2786 = vmatmul.mubr.f32.gmra.mrb[0].mxu0 %v1938
      %v2787 = vpop.f32.mrb[0].mxu0
      %v2788 = vadd.f32 %v2643, %v2787
      %v2789 = vpop.f32.mrb[0].mxu0
      %2790 = vmatprep.mubr.f32.mxu0 0.0
      %2791 = vmatmul.mubr.f32.gmra.mrb[0].mxu0 %v1940
      %v2792 = vpop.f32.mrb[0].mxu0
      %v2793 = vadd.f32 %v2648, %v2792
      %v2794 = vpop.f32.mrb[0].mxu0
      %2795 = vmatprep.mubr.f32.mxu0 0.0
      %2796 = vmatmul.mubr.f32.gmra.mrb[0].mxu0 %v1942
      %v2797 = vpop.f32.mrb[0].mxu0
      %v2798 = vadd.f32 %v2653, %v2797
      %v2799 = vpop.f32.mrb[0].mxu0
      %2800 = vmatprep.mubr.f32.mxu0 0.0
      %2801 = vmatmul.mubr.f32.gmra.mrb[0].mxu0 %v1944
      %v2802 = vpop.f32.mrb[0].mxu0
      %v2803 = vadd.f32 %v2658, %v2802
      %v2804 = vpop.f32.mrb[0].mxu0
      %2805 = vmatprep.mubr.f32.mxu0 0.0
      %2806 = vmatmul.mubr.f32.gmra.mrb[0].mxu0 %v1946
      %v2807 = vpop.f32.mrb[0].mxu0
      %v2808 = vadd.f32 %v2663, %v2807
      %v2809 = vpop.f32.mrb[0].mxu0
      %2810 = vmatprep.mubr.f32.mxu0 0.0
      %2811 = vmatmul.mubr.f32.gmra.mrb[0].mxu0 %v1948
      %v2812 = vpop.f32.mrb[0].mxu0
      %v2813 = vadd.f32 %v2668, %v2812
      %v2814 = vpop.f32.mrb[0].mxu0
      %2815 = vmatprep.mubr.f32.mxu0 0.0
      %2816 = vmatmul.mubr.f32.gmra.mrb[0].mxu0 %v1950
      %v2817 = vpop.f32.mrb[0].mxu0
      %v2818 = vadd.f32 %v2673, %v2817
      %v2819 = vpop.f32.mrb[0].mxu0
      %2820 = vmatprep.mubr.f32.mxu0 0.0
      %2821 = vmatmul.mubr.f32.gmra.mrb[0].mxu0 %v1952
      %v2822 = vpop.f32.mrb[0].mxu0
      %v2823 = vadd.f32 %v2678, %v2822
      %v2824 = vpop.f32.mrb[0].mxu0
      %2825 = vmatprep.mubr.f32.mxu0 0.0
      %2826 = vmatmul.mubr.f32.gmra.mrb[0].mxu0 %v1954
      %v2827 = vpop.f32.mrb[0].mxu0
      %v2828 = vadd.f32 %v2683, %v2827
      %v2829 = vpop.f32.mrb[0].mxu0
      %2830 = vdwg.mxu0
      %v2831 = vadd.f32 %v2753, %v228
      %v2832 = vadd.f32 %v2758, %v229
      %v2833 = vadd.f32 %v2763, %v230
      %v2834 = vadd.f32 %v2768, %v231
      %v2835 = vadd.f32 %v2773, %v232
      %v2836 = vadd.f32 %v2778, %v233
      %v2837 = vadd.f32 %v2783, %v234
      %v2838 = vadd.f32 %v2788, %v235
      %v2839 = vadd.f32 %v2793, %v236
      %v2840 = vadd.f32 %v2798, %v237
      %v2841 = vadd.f32 %v2803, %v238
      %v2842 = vadd.f32 %v2808, %v239
      %v2843 = vadd.f32 %v2813, %v240
      %v2844 = vadd.f32 %v2818, %v241
      %v2845 = vadd.f32 %v2823, %v242
      %v2846 = vadd.f32 %v2828, %v243
      %v2847 = vmax.f32 %v2831, 0.0
      %v2848 = vmax.f32 %v2832, 0.0
      %v2849 = vmax.f32 %v2833, 0.0
      %v2850 = vmax.f32 %v2834, 0.0
      %v2851 = vmax.f32 %v2835, 0.0
      %v2852 = vmax.f32 %v2836, 0.0
      %v2853 = vmax.f32 %v2837, 0.0
      %v2854 = vmax.f32 %v2838, 0.0
      %v2855 = vmax.f32 %v2839, 0.0
      %v2856 = vmax.f32 %v2840, 0.0
      %v2857 = vmax.f32 %v2841, 0.0
      %v2858 = vmax.f32 %v2842, 0.0
      %v2859 = vmax.f32 %v2843, 0.0
      %v2860 = vmax.f32 %v2844, 0.0
      %v2861 = vmax.f32 %v2845, 0.0
      %v2862 = vmax.f32 %v2846, 0.0
      %2863 = vst [vmem:[%s226] sm:$0xff] %v2847
      %2864 = vst [vmem:[%s226 + $0x8] sm:$0xff] %v2848
      %2865 = vst [vmem:[%s226 + $0x10] sm:$0xff] %v2849
      %2866 = vst [vmem:[%s226 + $0x18] sm:$0xff] %v2850
      %2867 = vst [vmem:[%s226 + $0x20] sm:$0xff] %v2851
      %2868 = vst [vmem:[%s226 + $0x28] sm:$0xff] %v2852
      %2869 = vst [vmem:[%s226 + $0x30] sm:$0xff] %v2853
      %2870 = vst [vmem:[%s226 + $0x38] sm:$0xff] %v2854
      %2871 = vst [vmem:[%s226 + $0x40] sm:$0xff] %v2855
      %2872 = vst [vmem:[%s226 + $0x48] sm:$0xff] %v2856
      %2873 = vst [vmem:[%s226 + $0x50] sm:$0xff] %v2857
      %2874 = vst [vmem:[%s226 + $0x58] sm:$0xff] %v2858
      %2875 = vst [vmem:[%s226 + $0x60] sm:$0xff] %v2859
      %2876 = vst [vmem:[%s226 + $0x68] sm:$0xff] %v2860
      %2877 = vst [vmem:[%s226 + $0x70] sm:$0xff] %v2861
      %2878 = vst [vmem:[%s226 + $0x78] sm:$0xff] %v2862
      %s2879 = smul.u32 16, %s16
      %p2880 = scmp.lt.s32.totalorder %s2879, 31
      %s2881 = scalar_select %p2880, %s2879, 31
      %s2882 = smul.addr %s2881, 8
      %s2883 = scalar_lea.vmem %s5, %s2882
      // Predicated region
      $region41: #{basic_block_pallas.1} parent=39 // pred_check
        %p2884 = pneg %p144
      $region42: #{basic_block_pallas.1} parent=39 // pred_check_branch
        %2886 = sbr.rel (%p2884) target = $region44
      $region43: #{basic_block_pallas.1} parent=39 // pred_region
        %s2887 = smul.u32 16, %s16
      $region44: #{basic_block_pallas.1} parent=39 // pred_fallthru
        _
    $region40: #{basic_block_pallas.1} parent=5 // pred_fallthru
      _
    %p2888 = scmp.le.s32.totalorder 2, %s11
    // Predicated region
    $region45: #{basic_block_pallas.1} parent=5 // pred_check
      %p2889 = pneg %p2888
    $region46: #{basic_block_pallas.1} parent=5 // pred_check_branch
      %2891 = sbr.rel (%p2889) target = $region48
    $region47: #{basic_block_pallas.1} parent=5 // pred_region
      %s2892 = ssub.s32 %s11, 2
      // Predicated region
      $region49: #{basic_block_pallas.1} parent=47 // pred_check
        %p2893 = pneg %p150
      $region50: #{basic_block_pallas.1} parent=47 // pred_check_branch
        %2895 = sbr.rel (%p2893) target = $region52
      $region51: #{basic_block_pallas.1} parent=47 // pred_region
        %s2896 = smul.u32 16, %s17
        %p2897 = scmp.lt.s32.totalorder %s2896, 31
        %s2898 = scalar_select %p2897, %s2896, 31
        %s2899 = smul.addr %s2898, 8
        %s2900 = scalar_lea.vmem %s5, %s2899
      $region52: #{basic_block_pallas.1} parent=47 // pred_fallthru
        _
    $region48: #{basic_block_pallas.1} parent=5 // pred_fallthru
      _
  $region6: #{basic_block_pallas.1} parent=0 // loop_footer
    %s15 = sadd.s32 1, %s11
  $region7: #{basic_block_pallas.1} parent=0 // loop_footer_branch
    %10 = sbr.rel target = $region3
  $region8: #{basic_block_pallas.1} parent=0 // loop_exit
    _

</llo_original>
